<compile_context>
chip_gen: v7x
topology: tpu7x:2x2x1
jax: 0.10.0
libtpu: 0.0.40
codegen_flags: <defaults>
</compile_context>

<pallas_src>
import jax
import jax.numpy as jnp
from jax.experimental import pallas as pl
from jax.experimental.pallas import tpu as pltpu

HIDDEN = 128          # LSTM hidden size
FC_OUT = 64           # LSTMModel.fc output size
PRED_HID = 16         # predictor hidden size


# ----------------------------------------------------------------------------
# Kernel
# ----------------------------------------------------------------------------
def fusion_kernel(x_ref, len_ref,
                  wih1_ref, b1_ref, whh1_ref,
                  wih2_ref, whh2_ref, b2_ref,
                  wfc_ref, bfc_ref,
                  wp1l_ref, wp1r_ref, bp1_ref,
                  wp2_ref, bp2_ref, ab_ref,
                  out_ref):
    T = x_ref.shape[0]                 # time steps (words)
    NB = x_ref.shape[1]                # 2 * B  (left stacked over right)
    H = whh1_ref.shape[0]
    B = NB // 2
    bf16 = jnp.bfloat16

    lens = len_ref[...]                # (NB, 1) int32
    wih1 = wih1_ref[...]               # (1, 4H) f32   (input_size == 1)
    whh1 = whh1_ref[...]               # (H, 4H) bf16
    wih2 = wih2_ref[...]               # (H, 4H) bf16
    whh2 = whh2_ref[...]               # (H, 4H) bf16

    # Hoisted broadcasts (JAX does not CSE broadcast_in_dim in the unroll).
    b1b = jnp.broadcast_to(b1_ref[...], (NB, 4 * H))
    b2b = jnp.broadcast_to(b2_ref[...], (NB, 4 * H))
    masks = [jnp.broadcast_to(t < lens, (NB, H)) for t in range(T)]

    # Per-step layer-1 input contributions with bias folded in; these do not
    # depend on the recurrent state, so they live off the serial chain.
    xc1 = [x_ref[t] * wih1 + b1b for t in range(T)]        # T x (NB, 4H) f32

    def gates(g):
        # gate columns repacked to [i, f, o | g]: one sigmoid + one tanh.
        s = jax.nn.sigmoid(g[:, :3 * H])
        return s[:, :H], s[:, H:2 * H], s[:, 2 * H:3 * H], jnp.tanh(g[:, 3 * H:])

    h1 = jnp.zeros((NB, H), jnp.float32)
    c1 = jnp.zeros((NB, H), jnp.float32)
    h2 = jnp.zeros((NB, H), jnp.float32)
    c2 = jnp.zeros((NB, H), jnp.float32)

    # Unrolled time loop (T is a small compile-time constant).  Freezing the
    # state once t >= length reproduces pack_padded_sequence + taking
    # out[i, lengths[i] - 1].
    for t in range(T):
        m = masks[t]

        # ---- layer-2 recurrent contribution: depends only on the previous
        # step's h2, so it is issued here and overlaps layer-1 below.
        r2 = b2b + jnp.dot(h2.astype(bf16), whh2,
                           preferred_element_type=jnp.float32)

        # ---- layer 1 ------------------------------------------------------
        g1 = xc1[t] + jnp.dot(h1.astype(bf16), whh1,
                              preferred_element_type=jnp.float32)
        i1, f1, o1, gg1 = gates(g1)
        c1n = f1 * c1 + i1 * gg1
        h1n = o1 * jnp.tanh(c1n)
        c1 = jnp.where(m, c1n, c1)
        h1 = jnp.where(m, h1n, h1)     # step t+1 layer-1 waits only on this

        # ---- layer 2 -------------------------------------------------------
        g2 = r2 + jnp.dot(h1n.astype(bf16), wih2,
                          preferred_element_type=jnp.float32)
        i2, f2, o2, gg2 = gates(g2)
        c2n = f2 * c2 + i2 * gg2
        h2n = o2 * jnp.tanh(c2n)
        c2 = jnp.where(m, c2n, c2)
        h2 = jnp.where(m, h2n, h2)

    # LSTMModel.fc : Linear(128, 64) + ReLU on the layer-2 final hidden.
    feat = jnp.maximum(
        jnp.dot(h2.astype(bf16), wfc_ref[...],
                preferred_element_type=jnp.float32) + bfc_ref[...], 0.0)

    # predictor: cat([feat_l, feat_r], 1) @ Wp1  ==  feat_l@Wp1[:64] + feat_r@Wp1[64:]
    p = (jnp.dot(feat[:B], wp1l_ref[...], preferred_element_type=jnp.float32)
         + jnp.dot(feat[B:], wp1r_ref[...], preferred_element_type=jnp.float32)
         + bp1_ref[...])
    p = jnp.maximum(p, 0.0)                                 # (B, 16)
    p = jnp.dot(p, wp2_ref[...],
                preferred_element_type=jnp.float32) + bp2_ref[...]   # (B, 1)

    # MappingLayer : 1 / (1 + exp(a*x + b)) == sigmoid(-(a*x + b))
    ab = ab_ref[...]
    out_ref[...] = jax.nn.sigmoid(-(ab[:, 0:1] * p + ab[:, 1:2]))


# ----------------------------------------------------------------------------
# Wrapper
# ----------------------------------------------------------------------------
def word_confidence_fusion(x, lengths, params):
    """x: (2B, T) padded word confidences (left rows stacked over right rows),
    lengths: (2B,) int32.  Returns (B, 1) fused probabilities."""
    NB, T = x.shape
    B = NB // 2

    # Pad the pair-batch so the stacked batch 2*Bp is a multiple of 8 (sublane
    # tile); pad rows are sliced away from the output.
    Bp = max(4, -(-B // 4) * 4)
    if Bp != B:
        pad = Bp - B
        xl = jnp.pad(x[:B], ((0, pad), (0, 0)))
        xr = jnp.pad(x[B:], ((0, pad), (0, 0)))
        ll = jnp.pad(lengths[:B], (0, pad), constant_values=1)
        lr = jnp.pad(lengths[B:], (0, pad), constant_values=1)
        x = jnp.concatenate([xl, xr], axis=0)
        lengths = jnp.concatenate([ll, lr], axis=0)
    NBp = 2 * Bp

    x_k = x.astype(jnp.float32).T[:, :, None]        # (T, NBp, 1)
    len_k = lengths.reshape(NBp, 1).astype(jnp.int32)

    vmem = pl.BlockSpec(memory_space=pltpu.MemorySpace.VMEM)
    inputs = (x_k, len_k,
              params["wih1"], params["b1"], params["whh1"],
              params["wih2"], params["whh2"], params["b2"],
              params["wfc"], params["bfc"],
              params["wp1l"], params["wp1r"], params["bp1"],
              params["wp2"], params["bp2"], params["ab"])

    out = pl.pallas_call(
        fusion_kernel,
        out_shape=jax.ShapeDtypeStruct((Bp, 1), jnp.float32),
        in_specs=[vmem] * len(inputs),
        out_specs=vmem,
    )(*inputs)
    return out[:B]


# ----------------------------------------------------------------------------
# Parameters (PyTorch layout) and kernel-layout preparation
# ----------------------------------------------------------------------------
def make_torch_params(key):
    """Synthetic parameters in native PyTorch layout, gate order [i, f, g, o]."""
    H = HIDDEN
    ks = jax.random.split(key, 14)
    s = 0.1

    def n(k, shape):
        return (s * jax.random.normal(k, shape)).astype(jnp.float32)

    return {
        "lstm.w_ih0": n(ks[0], (4 * H, 1)),
        "lstm.w_hh0": n(ks[1], (4 * H, H)),
        "lstm.b_ih0": n(ks[2], (4 * H,)),
        "lstm.b_hh0": n(ks[3], (4 * H,)),
        "lstm.w_ih1": n(ks[4], (4 * H, H)),
        "lstm.w_hh1": n(ks[5], (4 * H, H)),
        "lstm.b_ih1": n(ks[6], (4 * H,)),
        "lstm.b_hh1": n(ks[7], (4 * H,)),
        "fc.w": n(ks[8], (FC_OUT, H)),
        "fc.b": n(ks[9], (FC_OUT,)),
        "p1.w": n(ks[10], (PRED_HID, 2 * FC_OUT)),
        "p1.b": n(ks[11], (PRED_HID,)),
        "p2.w": n(ks[12], (1, PRED_HID)),
        "p2.b": n(ks[13], (1,)),
        "map.a": jnp.float32(0.5),
        "map.b": jnp.float32(0.5),
    }


def _repack_gate_rows(w):
    """PyTorch gate row-blocks [i, f, g, o] -> kernel order [i, f, o, g]."""
    H = w.shape[0] // 4
    return jnp.concatenate([w[:2 * H], w[3 * H:], w[2 * H:3 * H]], axis=0)


def prepare_params(tp):
    """PyTorch-layout params -> kernel layout:
       * pre-transposed (in_features, out_features) matrices,
       * LSTM gate columns repacked to [i, f, o | g],
       * b_ih + b_hh fused, predictor first layer split per channel,
       * recurrent / fc matmul weights cast to bfloat16 (f32 accumulation)."""
    bf = jnp.bfloat16
    f32 = jnp.float32
    wih1 = _repack_gate_rows(tp["lstm.w_ih0"]).T                       # (1, 4H)
    whh1 = _repack_gate_rows(tp["lstm.w_hh0"]).T                       # (H, 4H)
    b1 = _repack_gate_rows(tp["lstm.b_ih0"] + tp["lstm.b_hh0"])[None, :]
    wih2 = _repack_gate_rows(tp["lstm.w_ih1"]).T                       # (H, 4H)
    whh2 = _repack_gate_rows(tp["lstm.w_hh1"]).T                       # (H, 4H)
    b2 = _repack_gate_rows(tp["lstm.b_ih1"] + tp["lstm.b_hh1"])[None, :]
    return {
        "wih1": wih1.astype(f32),                       # used elementwise -> f32
        "b1": b1.astype(f32),                           # (1, 4H)
        "whh1": whh1.astype(bf),                        # (H, 4H)
        "wih2": wih2.astype(bf),                        # (H, 4H)
        "whh2": whh2.astype(bf),                        # (H, 4H)
        "b2": b2.astype(f32),                           # (1, 4H)
        "wfc": tp["fc.w"].T.astype(bf),                 # (H, 64)
        "bfc": tp["fc.b"][None, :].astype(f32),         # (1, 64)
        "wp1l": tp["p1.w"][:, :FC_OUT].T.astype(f32),   # (64, 16)
        "wp1r": tp["p1.w"][:, FC_OUT:].T.astype(f32),   # (64, 16)
        "bp1": tp["p1.b"][None, :].astype(f32),         # (1, 16)
        "wp2": tp["p2.w"].T.astype(f32),                # (16, 1)
        "bp2": tp["p2.b"][None, :].astype(f32),         # (1, 1)
        "ab": jnp.stack([tp["map.a"], tp["map.b"]]).reshape(1, 2).astype(f32),
    }


# ----------------------------------------------------------------------------
# Pure-JAX reference (PyTorch semantics, f32 throughout)
# ----------------------------------------------------------------------------
def reference(x, lengths, tp):
    NB, T = x.shape
    H = HIDDEN
    B = NB // 2
    lens = lengths.reshape(NB, 1).astype(jnp.int32)

    def cell(xt, h, c, w_ih, w_hh, b_ih, b_hh):
        g = xt @ w_ih.T + h @ w_hh.T + b_ih + b_hh
        i = jax.nn.sigmoid(g[:, 0 * H:1 * H])
        f = jax.nn.sigmoid(g[:, 1 * H:2 * H])
        gg = jnp.tanh(g[:, 2 * H:3 * H])
        o = jax.nn.sigmoid(g[:, 3 * H:4 * H])
        c_new = f * c + i * gg
        return o * jnp.tanh(c_new), c_new

    h1 = jnp.zeros((NB, H)); c1 = jnp.zeros((NB, H))
    h2 = jnp.zeros((NB, H)); c2 = jnp.zeros((NB, H))
    for t in range(T):
        xt = x[:, t:t + 1]
        h1n, c1n = cell(xt, h1, c1, tp["lstm.w_ih0"], tp["lstm.w_hh0"],
                        tp["lstm.b_ih0"], tp["lstm.b_hh0"])
        h2n, c2n = cell(h1n, h2, c2, tp["lstm.w_ih1"], tp["lstm.w_hh1"],
                        tp["lstm.b_ih1"], tp["lstm.b_hh1"])
        m = t < lens
        h1 = jnp.where(m, h1n, h1); c1 = jnp.where(m, c1n, c1)
        h2 = jnp.where(m, h2n, h2); c2 = jnp.where(m, c2n, c2)
    feat = jnp.maximum(h2 @ tp["fc.w"].T + tp["fc.b"], 0.0)
    fused = jnp.concatenate([feat[:B], feat[B:]], axis=1)
    q = jnp.maximum(fused @ tp["p1.w"].T + tp["p1.b"], 0.0)
    q = q @ tp["p2.w"].T + tp["p2.b"]
    return 1.0 / (1.0 + jnp.exp(tp["map.a"] * q + tp["map.b"]))


# ----------------------------------------------------------------------------
if __name__ == "__main__":
    key = jax.random.PRNGKey(0)
    kp, kx = jax.random.split(key)
    torch_params = make_torch_params(kp)
    params = prepare_params(torch_params)

    B = 4      # stereo utterance pairs (2*B = 8 rows = one full sublane tile)
    T = 8      # max number of words per utterance
    NB = 2 * B

    # Synthetic "word confidence" sequences in [0, 1], padded with zeros.
    lengths = jnp.array([5, 8, 3, 7, 6, 2, 8, 4], dtype=jnp.int32)
    raw = jax.random.uniform(kx, (NB, T), dtype=jnp.float32)
    valid = jnp.arange(T)[None, :] < lengths[:, None]
    x = jnp.where(valid, raw, 0.0)

    pred = jax.block_until_ready(word_confidence_fusion(x, lengths, params))
    ref = reference(x, lengths, torch_params)

    assert pred.shape == (B, 1)
    assert jnp.allclose(pred, ref, atol=3e-3, rtol=3e-3), (pred, ref)

    print("KERNEL_OK")
</pallas_src>

<mosaic_0001>
module attributes {stable_mosaic.version = 11 : i64} {
  func.func @fusion_kernel(%arg0: memref<8x8x1xf32, #tpu.memory_space<vmem>>, %arg1: memref<8x1xi32, #tpu.memory_space<vmem>>, %arg2: memref<1x512xf32, #tpu.memory_space<vmem>>, %arg3: memref<1x512xf32, #tpu.memory_space<vmem>>, %arg4: memref<128x512xbf16, #tpu.memory_space<vmem>>, %arg5: memref<128x512xbf16, #tpu.memory_space<vmem>>, %arg6: memref<128x512xbf16, #tpu.memory_space<vmem>>, %arg7: memref<1x512xf32, #tpu.memory_space<vmem>>, %arg8: memref<128x64xbf16, #tpu.memory_space<vmem>>, %arg9: memref<1x64xf32, #tpu.memory_space<vmem>>, %arg10: memref<64x16xf32, #tpu.memory_space<vmem>>, %arg11: memref<64x16xf32, #tpu.memory_space<vmem>>, %arg12: memref<1x16xf32, #tpu.memory_space<vmem>>, %arg13: memref<16x1xf32, #tpu.memory_space<vmem>>, %arg14: memref<1x1xf32, #tpu.memory_space<vmem>>, %arg15: memref<1x2xf32, #tpu.memory_space<vmem>>, %arg16: memref<4x1xf32, #tpu.memory_space<vmem>>) attributes {dimension_semantics = [], scalar_prefetch = 0 : i64, scratch_operands = 0 : i64, tpu.core_type = #tpu.core_type<tc>} {
    %c0 = arith.constant 0 : index
    %c0_0 = arith.constant 0 : index
    %0 = vector.load %arg1[%c0, %c0_0] : memref<8x1xi32, #tpu.memory_space<vmem>>, vector<8x1xi32>
    %c0_1 = arith.constant 0 : index
    %c0_2 = arith.constant 0 : index
    %1 = vector.load %arg2[%c0_1, %c0_2] : memref<1x512xf32, #tpu.memory_space<vmem>>, vector<1x512xf32>
    %c0_3 = arith.constant 0 : index
    %c0_4 = arith.constant 0 : index
    %2 = vector.load %arg4[%c0_3, %c0_4] : memref<128x512xbf16, #tpu.memory_space<vmem>>, vector<128x512xbf16>
    %c0_5 = arith.constant 0 : index
    %c0_6 = arith.constant 0 : index
    %3 = vector.load %arg5[%c0_5, %c0_6] : memref<128x512xbf16, #tpu.memory_space<vmem>>, vector<128x512xbf16>
    %c0_7 = arith.constant 0 : index
    %c0_8 = arith.constant 0 : index
    %4 = vector.load %arg6[%c0_7, %c0_8] : memref<128x512xbf16, #tpu.memory_space<vmem>>, vector<128x512xbf16>
    %c0_9 = arith.constant 0 : index
    %c0_10 = arith.constant 0 : index
    %5 = vector.load %arg3[%c0_9, %c0_10] : memref<1x512xf32, #tpu.memory_space<vmem>>, vector<1x512xf32>
    %6 = vector.shape_cast %5 : vector<1x512xf32> to vector<1x512xf32>
    %7 = vector.broadcast %6 : vector<1x512xf32> to vector<8x512xf32>
    %c0_11 = arith.constant 0 : index
    %c0_12 = arith.constant 0 : index
    %8 = vector.load %arg7[%c0_11, %c0_12] : memref<1x512xf32, #tpu.memory_space<vmem>>, vector<1x512xf32>
    %9 = vector.shape_cast %8 : vector<1x512xf32> to vector<1x512xf32>
    %10 = vector.broadcast %9 : vector<1x512xf32> to vector<8x512xf32>
    %c0_i32 = arith.constant 0 : i32
    %11 = vector.broadcast %c0_i32 : i32 to vector<8x1xi32>
    %12 = arith.cmpi sgt, %0, %11 : vector<8x1xi32>
    %13 = vector.shape_cast %12 : vector<8x1xi1> to vector<8x1xi1>
    %14 = vector.broadcast %13 : vector<8x1xi1> to vector<8x128xi1>
    %c1_i32 = arith.constant 1 : i32
    %15 = vector.broadcast %c1_i32 : i32 to vector<8x1xi32>
    %16 = arith.cmpi sgt, %0, %15 : vector<8x1xi32>
    %17 = vector.shape_cast %16 : vector<8x1xi1> to vector<8x1xi1>
    %18 = vector.broadcast %17 : vector<8x1xi1> to vector<8x128xi1>
    %c2_i32 = arith.constant 2 : i32
    %19 = vector.broadcast %c2_i32 : i32 to vector<8x1xi32>
    %20 = arith.cmpi sgt, %0, %19 : vector<8x1xi32>
    %21 = vector.shape_cast %20 : vector<8x1xi1> to vector<8x1xi1>
    %22 = vector.broadcast %21 : vector<8x1xi1> to vector<8x128xi1>
    %c3_i32 = arith.constant 3 : i32
    %23 = vector.broadcast %c3_i32 : i32 to vector<8x1xi32>
    %24 = arith.cmpi sgt, %0, %23 : vector<8x1xi32>
    %25 = vector.shape_cast %24 : vector<8x1xi1> to vector<8x1xi1>
    %26 = vector.broadcast %25 : vector<8x1xi1> to vector<8x128xi1>
    %c4_i32 = arith.constant 4 : i32
    %27 = vector.broadcast %c4_i32 : i32 to vector<8x1xi32>
    %28 = arith.cmpi sgt, %0, %27 : vector<8x1xi32>
    %29 = vector.shape_cast %28 : vector<8x1xi1> to vector<8x1xi1>
    %30 = vector.broadcast %29 : vector<8x1xi1> to vector<8x128xi1>
    %c5_i32 = arith.constant 5 : i32
    %31 = vector.broadcast %c5_i32 : i32 to vector<8x1xi32>
    %32 = arith.cmpi sgt, %0, %31 : vector<8x1xi32>
    %33 = vector.shape_cast %32 : vector<8x1xi1> to vector<8x1xi1>
    %34 = vector.broadcast %33 : vector<8x1xi1> to vector<8x128xi1>
    %c6_i32 = arith.constant 6 : i32
    %35 = vector.broadcast %c6_i32 : i32 to vector<8x1xi32>
    %36 = arith.cmpi sgt, %0, %35 : vector<8x1xi32>
    %37 = vector.shape_cast %36 : vector<8x1xi1> to vector<8x1xi1>
    %38 = vector.broadcast %37 : vector<8x1xi1> to vector<8x128xi1>
    %c7_i32 = arith.constant 7 : i32
    %39 = vector.broadcast %c7_i32 : i32 to vector<8x1xi32>
    %40 = arith.cmpi sgt, %0, %39 : vector<8x1xi32>
    %41 = vector.shape_cast %40 : vector<8x1xi1> to vector<8x1xi1>
    %42 = vector.broadcast %41 : vector<8x1xi1> to vector<8x128xi1>
    %c0_13 = arith.constant 0 : index
    %c0_14 = arith.constant 0 : index
    %c0_15 = arith.constant 0 : index
    %43 = vector.load %arg0[%c0_13, %c0_14, %c0_15] : memref<8x8x1xf32, #tpu.memory_space<vmem>>, vector<1x8x1xf32>
    %44 = vector.shape_cast %43 : vector<1x8x1xf32> to vector<8x1xf32>
    %45 = vector.broadcast %44 : vector<8x1xf32> to vector<8x512xf32>
    %46 = vector.broadcast %1 : vector<1x512xf32> to vector<8x512xf32>
    %47 = arith.mulf %45, %46 : vector<8x512xf32>
    %48 = arith.addf %47, %7 : vector<8x512xf32>
    %c1 = arith.constant 1 : index
    %c0_16 = arith.constant 0 : index
    %c0_17 = arith.constant 0 : index
    %49 = vector.load %arg0[%c1, %c0_16, %c0_17] : memref<8x8x1xf32, #tpu.memory_space<vmem>>, vector<1x8x1xf32>
    %50 = vector.shape_cast %49 : vector<1x8x1xf32> to vector<8x1xf32>
    %51 = vector.broadcast %50 : vector<8x1xf32> to vector<8x512xf32>
    %52 = vector.broadcast %1 : vector<1x512xf32> to vector<8x512xf32>
    %53 = arith.mulf %51, %52 : vector<8x512xf32>
    %54 = arith.addf %53, %7 : vector<8x512xf32>
    %c2 = arith.constant 2 : index
    %c0_18 = arith.constant 0 : index
    %c0_19 = arith.constant 0 : index
    %55 = vector.load %arg0[%c2, %c0_18, %c0_19] : memref<8x8x1xf32, #tpu.memory_space<vmem>>, vector<1x8x1xf32>
    %56 = vector.shape_cast %55 : vector<1x8x1xf32> to vector<8x1xf32>
    %57 = vector.broadcast %56 : vector<8x1xf32> to vector<8x512xf32>
    %58 = vector.broadcast %1 : vector<1x512xf32> to vector<8x512xf32>
    %59 = arith.mulf %57, %58 : vector<8x512xf32>
    %60 = arith.addf %59, %7 : vector<8x512xf32>
    %c3 = arith.constant 3 : index
    %c0_20 = arith.constant 0 : index
    %c0_21 = arith.constant 0 : index
    %61 = vector.load %arg0[%c3, %c0_20, %c0_21] : memref<8x8x1xf32, #tpu.memory_space<vmem>>, vector<1x8x1xf32>
    %62 = vector.shape_cast %61 : vector<1x8x1xf32> to vector<8x1xf32>
    %63 = vector.broadcast %62 : vector<8x1xf32> to vector<8x512xf32>
    %64 = vector.broadcast %1 : vector<1x512xf32> to vector<8x512xf32>
    %65 = arith.mulf %63, %64 : vector<8x512xf32>
    %66 = arith.addf %65, %7 : vector<8x512xf32>
    %c4 = arith.constant 4 : index
    %c0_22 = arith.constant 0 : index
    %c0_23 = arith.constant 0 : index
    %67 = vector.load %arg0[%c4, %c0_22, %c0_23] : memref<8x8x1xf32, #tpu.memory_space<vmem>>, vector<1x8x1xf32>
    %68 = vector.shape_cast %67 : vector<1x8x1xf32> to vector<8x1xf32>
    %69 = vector.broadcast %68 : vector<8x1xf32> to vector<8x512xf32>
    %70 = vector.broadcast %1 : vector<1x512xf32> to vector<8x512xf32>
    %71 = arith.mulf %69, %70 : vector<8x512xf32>
    %72 = arith.addf %71, %7 : vector<8x512xf32>
    %c5 = arith.constant 5 : index
    %c0_24 = arith.constant 0 : index
    %c0_25 = arith.constant 0 : index
    %73 = vector.load %arg0[%c5, %c0_24, %c0_25] : memref<8x8x1xf32, #tpu.memory_space<vmem>>, vector<1x8x1xf32>
    %74 = vector.shape_cast %73 : vector<1x8x1xf32> to vector<8x1xf32>
    %75 = vector.broadcast %74 : vector<8x1xf32> to vector<8x512xf32>
    %76 = vector.broadcast %1 : vector<1x512xf32> to vector<8x512xf32>
    %77 = arith.mulf %75, %76 : vector<8x512xf32>
    %78 = arith.addf %77, %7 : vector<8x512xf32>
    %c6 = arith.constant 6 : index
    %c0_26 = arith.constant 0 : index
    %c0_27 = arith.constant 0 : index
    %79 = vector.load %arg0[%c6, %c0_26, %c0_27] : memref<8x8x1xf32, #tpu.memory_space<vmem>>, vector<1x8x1xf32>
    %80 = vector.shape_cast %79 : vector<1x8x1xf32> to vector<8x1xf32>
    %81 = vector.broadcast %80 : vector<8x1xf32> to vector<8x512xf32>
    %82 = vector.broadcast %1 : vector<1x512xf32> to vector<8x512xf32>
    %83 = arith.mulf %81, %82 : vector<8x512xf32>
    %84 = arith.addf %83, %7 : vector<8x512xf32>
    %c7 = arith.constant 7 : index
    %c0_28 = arith.constant 0 : index
    %c0_29 = arith.constant 0 : index
    %85 = vector.load %arg0[%c7, %c0_28, %c0_29] : memref<8x8x1xf32, #tpu.memory_space<vmem>>, vector<1x8x1xf32>
    %86 = vector.shape_cast %85 : vector<1x8x1xf32> to vector<8x1xf32>
    %87 = vector.broadcast %86 : vector<8x1xf32> to vector<8x512xf32>
    %88 = vector.broadcast %1 : vector<1x512xf32> to vector<8x512xf32>
    %89 = arith.mulf %87, %88 : vector<8x512xf32>
    %90 = arith.addf %89, %7 : vector<8x512xf32>
    %cst = arith.constant 0.000000e+00 : f32
    %91 = vector.broadcast %cst : f32 to vector<8x128xf32>
    %cst_30 = arith.constant 0.000000e+00 : f32
    %92 = vector.broadcast %cst_30 : f32 to vector<8x128xf32>
    %cst_31 = arith.constant 0.000000e+00 : f32
    %93 = vector.broadcast %cst_31 : f32 to vector<8x128xf32>
    %cst_32 = arith.constant 0.000000e+00 : f32
    %94 = vector.broadcast %cst_32 : f32 to vector<8x128xf32>
    %95 = arith.truncf %93 : vector<8x128xf32> to vector<8x128xbf16>
    %cst_33 = arith.constant dense<0.000000e+00> : vector<8x512xf32>
    %96 = tpu.matmul %95, %4, %cst_33 {dimension_numbers = #tpu.dot_dimension_numbers<[1], [0], [0], [1], [0, 0, 1, 1], [], []>} : vector<8x128xbf16>, vector<128x512xbf16>, vector<8x512xf32> -> vector<8x512xf32>
    %97 = arith.addf %10, %96 : vector<8x512xf32>
    %98 = arith.truncf %91 : vector<8x128xf32> to vector<8x128xbf16>
    %cst_34 = arith.constant dense<0.000000e+00> : vector<8x512xf32>
    %99 = tpu.matmul %98, %2, %cst_34 {dimension_numbers = #tpu.dot_dimension_numbers<[1], [0], [0], [1], [0, 0, 1, 1], [], []>} : vector<8x128xbf16>, vector<128x512xbf16>, vector<8x512xf32> -> vector<8x512xf32>
    %100 = arith.addf %48, %99 : vector<8x512xf32>
    %101 = vector.extract_strided_slice %100 {offsets = [0, 0], sizes = [8, 384], strides = [1, 1]} : vector<8x512xf32> to vector<8x384xf32>
    %102 = arith.negf %101 : vector<8x384xf32>
    %103 = math.exp %102 : vector<8x384xf32>
    %cst_35 = arith.constant 1.000000e+00 : f32
    %104 = vector.broadcast %cst_35 : f32 to vector<8x384xf32>
    %105 = arith.addf %104, %103 : vector<8x384xf32>
    %106 = arith.divf %104, %105 : vector<8x384xf32>
    %107 = vector.extract_strided_slice %106 {offsets = [0, 0], sizes = [8, 128], strides = [1, 1]} : vector<8x384xf32> to vector<8x128xf32>
    %108 = vector.extract_strided_slice %106 {offsets = [0, 128], sizes = [8, 128], strides = [1, 1]} : vector<8x384xf32> to vector<8x128xf32>
    %109 = vector.extract_strided_slice %106 {offsets = [0, 256], sizes = [8, 128], strides = [1, 1]} : vector<8x384xf32> to vector<8x128xf32>
    %110 = vector.extract_strided_slice %100 {offsets = [0, 384], sizes = [8, 128], strides = [1, 1]} : vector<8x512xf32> to vector<8x128xf32>
    %111 = math.tanh %110 : vector<8x128xf32>
    %112 = arith.mulf %108, %92 : vector<8x128xf32>
    %113 = arith.mulf %107, %111 : vector<8x128xf32>
    %114 = arith.addf %112, %113 : vector<8x128xf32>
    %115 = math.tanh %114 : vector<8x128xf32>
    %116 = arith.mulf %109, %115 : vector<8x128xf32>
    %117 = arith.select %14, %114, %92 : vector<8x128xi1>, vector<8x128xf32>
    %118 = arith.select %14, %116, %91 : vector<8x128xi1>, vector<8x128xf32>
    %119 = arith.truncf %116 : vector<8x128xf32> to vector<8x128xbf16>
    %cst_36 = arith.constant dense<0.000000e+00> : vector<8x512xf32>
    %120 = tpu.matmul %119, %3, %cst_36 {dimension_numbers = #tpu.dot_dimension_numbers<[1], [0], [0], [1], [0, 0, 1, 1], [], []>} : vector<8x128xbf16>, vector<128x512xbf16>, vector<8x512xf32> -> vector<8x512xf32>
    %121 = arith.addf %97, %120 : vector<8x512xf32>
    %122 = vector.extract_strided_slice %121 {offsets = [0, 0], sizes = [8, 384], strides = [1, 1]} : vector<8x512xf32> to vector<8x384xf32>
    %123 = arith.negf %122 : vector<8x384xf32>
    %124 = math.exp %123 : vector<8x384xf32>
    %cst_37 = arith.constant 1.000000e+00 : f32
    %125 = vector.broadcast %cst_37 : f32 to vector<8x384xf32>
    %126 = arith.addf %125, %124 : vector<8x384xf32>
    %127 = arith.divf %125, %126 : vector<8x384xf32>
    %128 = vector.extract_strided_slice %127 {offsets = [0, 0], sizes = [8, 128], strides = [1, 1]} : vector<8x384xf32> to vector<8x128xf32>
    %129 = vector.extract_strided_slice %127 {offsets = [0, 128], sizes = [8, 128], strides = [1, 1]} : vector<8x384xf32> to vector<8x128xf32>
    %130 = vector.extract_strided_slice %127 {offsets = [0, 256], sizes = [8, 128], strides = [1, 1]} : vector<8x384xf32> to vector<8x128xf32>
    %131 = vector.extract_strided_slice %121 {offsets = [0, 384], sizes = [8, 128], strides = [1, 1]} : vector<8x512xf32> to vector<8x128xf32>
    %132 = math.tanh %131 : vector<8x128xf32>
    %133 = arith.mulf %129, %94 : vector<8x128xf32>
    %134 = arith.mulf %128, %132 : vector<8x128xf32>
    %135 = arith.addf %133, %134 : vector<8x128xf32>
    %136 = math.tanh %135 : vector<8x128xf32>
    %137 = arith.mulf %130, %136 : vector<8x128xf32>
    %138 = arith.select %14, %135, %94 : vector<8x128xi1>, vector<8x128xf32>
    %139 = arith.select %14, %137, %93 : vector<8x128xi1>, vector<8x128xf32>
    %140 = arith.truncf %139 : vector<8x128xf32> to vector<8x128xbf16>
    %cst_38 = arith.constant dense<0.000000e+00> : vector<8x512xf32>
    %141 = tpu.matmul %140, %4, %cst_38 {dimension_numbers = #tpu.dot_dimension_numbers<[1], [0], [0], [1], [0, 0, 1, 1], [], []>} : vector<8x128xbf16>, vector<128x512xbf16>, vector<8x512xf32> -> vector<8x512xf32>
    %142 = arith.addf %10, %141 : vector<8x512xf32>
    %143 = arith.truncf %118 : vector<8x128xf32> to vector<8x128xbf16>
    %cst_39 = arith.constant dense<0.000000e+00> : vector<8x512xf32>
    %144 = tpu.matmul %143, %2, %cst_39 {dimension_numbers = #tpu.dot_dimension_numbers<[1], [0], [0], [1], [0, 0, 1, 1], [], []>} : vector<8x128xbf16>, vector<128x512xbf16>, vector<8x512xf32> -> vector<8x512xf32>
    %145 = arith.addf %54, %144 : vector<8x512xf32>
    %146 = vector.extract_strided_slice %145 {offsets = [0, 0], sizes = [8, 384], strides = [1, 1]} : vector<8x512xf32> to vector<8x384xf32>
    %147 = arith.negf %146 : vector<8x384xf32>
    %148 = math.exp %147 : vector<8x384xf32>
    %cst_40 = arith.constant 1.000000e+00 : f32
    %149 = vector.broadcast %cst_40 : f32 to vector<8x384xf32>
    %150 = arith.addf %149, %148 : vector<8x384xf32>
    %151 = arith.divf %149, %150 : vector<8x384xf32>
    %152 = vector.extract_strided_slice %151 {offsets = [0, 0], sizes = [8, 128], strides = [1, 1]} : vector<8x384xf32> to vector<8x128xf32>
    %153 = vector.extract_strided_slice %151 {offsets = [0, 128], sizes = [8, 128], strides = [1, 1]} : vector<8x384xf32> to vector<8x128xf32>
    %154 = vector.extract_strided_slice %151 {offsets = [0, 256], sizes = [8, 128], strides = [1, 1]} : vector<8x384xf32> to vector<8x128xf32>
    %155 = vector.extract_strided_slice %145 {offsets = [0, 384], sizes = [8, 128], strides = [1, 1]} : vector<8x512xf32> to vector<8x128xf32>
    %156 = math.tanh %155 : vector<8x128xf32>
    %157 = arith.mulf %153, %117 : vector<8x128xf32>
    %158 = arith.mulf %152, %156 : vector<8x128xf32>
    %159 = arith.addf %157, %158 : vector<8x128xf32>
    %160 = math.tanh %159 : vector<8x128xf32>
    %161 = arith.mulf %154, %160 : vector<8x128xf32>
    %162 = arith.select %18, %159, %117 : vector<8x128xi1>, vector<8x128xf32>
    %163 = arith.select %18, %161, %118 : vector<8x128xi1>, vector<8x128xf32>
    %164 = arith.truncf %161 : vector<8x128xf32> to vector<8x128xbf16>
    %cst_41 = arith.constant dense<0.000000e+00> : vector<8x512xf32>
    %165 = tpu.matmul %164, %3, %cst_41 {dimension_numbers = #tpu.dot_dimension_numbers<[1], [0], [0], [1], [0, 0, 1, 1], [], []>} : vector<8x128xbf16>, vector<128x512xbf16>, vector<8x512xf32> -> vector<8x512xf32>
    %166 = arith.addf %142, %165 : vector<8x512xf32>
    %167 = vector.extract_strided_slice %166 {offsets = [0, 0], sizes = [8, 384], strides = [1, 1]} : vector<8x512xf32> to vector<8x384xf32>
    %168 = arith.negf %167 : vector<8x384xf32>
    %169 = math.exp %168 : vector<8x384xf32>
    %cst_42 = arith.constant 1.000000e+00 : f32
    %170 = vector.broadcast %cst_42 : f32 to vector<8x384xf32>
    %171 = arith.addf %170, %169 : vector<8x384xf32>
    %172 = arith.divf %170, %171 : vector<8x384xf32>
    %173 = vector.extract_strided_slice %172 {offsets = [0, 0], sizes = [8, 128], strides = [1, 1]} : vector<8x384xf32> to vector<8x128xf32>
    %174 = vector.extract_strided_slice %172 {offsets = [0, 128], sizes = [8, 128], strides = [1, 1]} : vector<8x384xf32> to vector<8x128xf32>
    %175 = vector.extract_strided_slice %172 {offsets = [0, 256], sizes = [8, 128], strides = [1, 1]} : vector<8x384xf32> to vector<8x128xf32>
    %176 = vector.extract_strided_slice %166 {offsets = [0, 384], sizes = [8, 128], strides = [1, 1]} : vector<8x512xf32> to vector<8x128xf32>
    %177 = math.tanh %176 : vector<8x128xf32>
    %178 = arith.mulf %174, %138 : vector<8x128xf32>
    %179 = arith.mulf %173, %177 : vector<8x128xf32>
    %180 = arith.addf %178, %179 : vector<8x128xf32>
    %181 = math.tanh %180 : vector<8x128xf32>
    %182 = arith.mulf %175, %181 : vector<8x128xf32>
    %183 = arith.select %18, %180, %138 : vector<8x128xi1>, vector<8x128xf32>
    %184 = arith.select %18, %182, %139 : vector<8x128xi1>, vector<8x128xf32>
    %185 = arith.truncf %184 : vector<8x128xf32> to vector<8x128xbf16>
    %cst_43 = arith.constant dense<0.000000e+00> : vector<8x512xf32>
    %186 = tpu.matmul %185, %4, %cst_43 {dimension_numbers = #tpu.dot_dimension_numbers<[1], [0], [0], [1], [0, 0, 1, 1], [], []>} : vector<8x128xbf16>, vector<128x512xbf16>, vector<8x512xf32> -> vector<8x512xf32>
    %187 = arith.addf %10, %186 : vector<8x512xf32>
    %188 = arith.truncf %163 : vector<8x128xf32> to vector<8x128xbf16>
    %cst_44 = arith.constant dense<0.000000e+00> : vector<8x512xf32>
    %189 = tpu.matmul %188, %2, %cst_44 {dimension_numbers = #tpu.dot_dimension_numbers<[1], [0], [0], [1], [0, 0, 1, 1], [], []>} : vector<8x128xbf16>, vector<128x512xbf16>, vector<8x512xf32> -> vector<8x512xf32>
    %190 = arith.addf %60, %189 : vector<8x512xf32>
    %191 = vector.extract_strided_slice %190 {offsets = [0, 0], sizes = [8, 384], strides = [1, 1]} : vector<8x512xf32> to vector<8x384xf32>
    %192 = arith.negf %191 : vector<8x384xf32>
    %193 = math.exp %192 : vector<8x384xf32>
    %cst_45 = arith.constant 1.000000e+00 : f32
    %194 = vector.broadcast %cst_45 : f32 to vector<8x384xf32>
    %195 = arith.addf %194, %193 : vector<8x384xf32>
    %196 = arith.divf %194, %195 : vector<8x384xf32>
    %197 = vector.extract_strided_slice %196 {offsets = [0, 0], sizes = [8, 128], strides = [1, 1]} : vector<8x384xf32> to vector<8x128xf32>
    %198 = vector.extract_strided_slice %196 {offsets = [0, 128], sizes = [8, 128], strides = [1, 1]} : vector<8x384xf32> to vector<8x128xf32>
    %199 = vector.extract_strided_slice %196 {offsets = [0, 256], sizes = [8, 128], strides = [1, 1]} : vector<8x384xf32> to vector<8x128xf32>
    %200 = vector.extract_strided_slice %190 {offsets = [0, 384], sizes = [8, 128], strides = [1, 1]} : vector<8x512xf32> to vector<8x128xf32>
    %201 = math.tanh %200 : vector<8x128xf32>
    %202 = arith.mulf %198, %162 : vector<8x128xf32>
    %203 = arith.mulf %197, %201 : vector<8x128xf32>
    %204 = arith.addf %202, %203 : vector<8x128xf32>
    %205 = math.tanh %204 : vector<8x128xf32>
    %206 = arith.mulf %199, %205 : vector<8x128xf32>
    %207 = arith.select %22, %204, %162 : vector<8x128xi1>, vector<8x128xf32>
    %208 = arith.select %22, %206, %163 : vector<8x128xi1>, vector<8x128xf32>
    %209 = arith.truncf %206 : vector<8x128xf32> to vector<8x128xbf16>
    %cst_46 = arith.constant dense<0.000000e+00> : vector<8x512xf32>
    %210 = tpu.matmul %209, %3, %cst_46 {dimension_numbers = #tpu.dot_dimension_numbers<[1], [0], [0], [1], [0, 0, 1, 1], [], []>} : vector<8x128xbf16>, vector<128x512xbf16>, vector<8x512xf32> -> vector<8x512xf32>
    %211 = arith.addf %187, %210 : vector<8x512xf32>
    %212 = vector.extract_strided_slice %211 {offsets = [0, 0], sizes = [8, 384], strides = [1, 1]} : vector<8x512xf32> to vector<8x384xf32>
    %213 = arith.negf %212 : vector<8x384xf32>
    %214 = math.exp %213 : vector<8x384xf32>
    %cst_47 = arith.constant 1.000000e+00 : f32
    %215 = vector.broadcast %cst_47 : f32 to vector<8x384xf32>
    %216 = arith.addf %215, %214 : vector<8x384xf32>
    %217 = arith.divf %215, %216 : vector<8x384xf32>
    %218 = vector.extract_strided_slice %217 {offsets = [0, 0], sizes = [8, 128], strides = [1, 1]} : vector<8x384xf32> to vector<8x128xf32>
    %219 = vector.extract_strided_slice %217 {offsets = [0, 128], sizes = [8, 128], strides = [1, 1]} : vector<8x384xf32> to vector<8x128xf32>
    %220 = vector.extract_strided_slice %217 {offsets = [0, 256], sizes = [8, 128], strides = [1, 1]} : vector<8x384xf32> to vector<8x128xf32>
    %221 = vector.extract_strided_slice %211 {offsets = [0, 384], sizes = [8, 128], strides = [1, 1]} : vector<8x512xf32> to vector<8x128xf32>
    %222 = math.tanh %221 : vector<8x128xf32>
    %223 = arith.mulf %219, %183 : vector<8x128xf32>
    %224 = arith.mulf %218, %222 : vector<8x128xf32>
    %225 = arith.addf %223, %224 : vector<8x128xf32>
    %226 = math.tanh %225 : vector<8x128xf32>
    %227 = arith.mulf %220, %226 : vector<8x128xf32>
    %228 = arith.select %22, %225, %183 : vector<8x128xi1>, vector<8x128xf32>
    %229 = arith.select %22, %227, %184 : vector<8x128xi1>, vector<8x128xf32>
    %230 = arith.truncf %229 : vector<8x128xf32> to vector<8x128xbf16>
    %cst_48 = arith.constant dense<0.000000e+00> : vector<8x512xf32>
    %231 = tpu.matmul %230, %4, %cst_48 {dimension_numbers = #tpu.dot_dimension_numbers<[1], [0], [0], [1], [0, 0, 1, 1], [], []>} : vector<8x128xbf16>, vector<128x512xbf16>, vector<8x512xf32> -> vector<8x512xf32>
    %232 = arith.addf %10, %231 : vector<8x512xf32>
    %233 = arith.truncf %208 : vector<8x128xf32> to vector<8x128xbf16>
    %cst_49 = arith.constant dense<0.000000e+00> : vector<8x512xf32>
    %234 = tpu.matmul %233, %2, %cst_49 {dimension_numbers = #tpu.dot_dimension_numbers<[1], [0], [0], [1], [0, 0, 1, 1], [], []>} : vector<8x128xbf16>, vector<128x512xbf16>, vector<8x512xf32> -> vector<8x512xf32>
    %235 = arith.addf %66, %234 : vector<8x512xf32>
    %236 = vector.extract_strided_slice %235 {offsets = [0, 0], sizes = [8, 384], strides = [1, 1]} : vector<8x512xf32> to vector<8x384xf32>
    %237 = arith.negf %236 : vector<8x384xf32>
    %238 = math.exp %237 : vector<8x384xf32>
    %cst_50 = arith.constant 1.000000e+00 : f32
    %239 = vector.broadcast %cst_50 : f32 to vector<8x384xf32>
    %240 = arith.addf %239, %238 : vector<8x384xf32>
    %241 = arith.divf %239, %240 : vector<8x384xf32>
    %242 = vector.extract_strided_slice %241 {offsets = [0, 0], sizes = [8, 128], strides = [1, 1]} : vector<8x384xf32> to vector<8x128xf32>
    %243 = vector.extract_strided_slice %241 {offsets = [0, 128], sizes = [8, 128], strides = [1, 1]} : vector<8x384xf32> to vector<8x128xf32>
    %244 = vector.extract_strided_slice %241 {offsets = [0, 256], sizes = [8, 128], strides = [1, 1]} : vector<8x384xf32> to vector<8x128xf32>
    %245 = vector.extract_strided_slice %235 {offsets = [0, 384], sizes = [8, 128], strides = [1, 1]} : vector<8x512xf32> to vector<8x128xf32>
    %246 = math.tanh %245 : vector<8x128xf32>
    %247 = arith.mulf %243, %207 : vector<8x128xf32>
    %248 = arith.mulf %242, %246 : vector<8x128xf32>
    %249 = arith.addf %247, %248 : vector<8x128xf32>
    %250 = math.tanh %249 : vector<8x128xf32>
    %251 = arith.mulf %244, %250 : vector<8x128xf32>
    %252 = arith.select %26, %249, %207 : vector<8x128xi1>, vector<8x128xf32>
    %253 = arith.select %26, %251, %208 : vector<8x128xi1>, vector<8x128xf32>
    %254 = arith.truncf %251 : vector<8x128xf32> to vector<8x128xbf16>
    %cst_51 = arith.constant dense<0.000000e+00> : vector<8x512xf32>
    %255 = tpu.matmul %254, %3, %cst_51 {dimension_numbers = #tpu.dot_dimension_numbers<[1], [0], [0], [1], [0, 0, 1, 1], [], []>} : vector<8x128xbf16>, vector<128x512xbf16>, vector<8x512xf32> -> vector<8x512xf32>
    %256 = arith.addf %232, %255 : vector<8x512xf32>
    %257 = vector.extract_strided_slice %256 {offsets = [0, 0], sizes = [8, 384], strides = [1, 1]} : vector<8x512xf32> to vector<8x384xf32>
    %258 = arith.negf %257 : vector<8x384xf32>
    %259 = math.exp %258 : vector<8x384xf32>
    %cst_52 = arith.constant 1.000000e+00 : f32
    %260 = vector.broadcast %cst_52 : f32 to vector<8x384xf32>
    %261 = arith.addf %260, %259 : vector<8x384xf32>
    %262 = arith.divf %260, %261 : vector<8x384xf32>
    %263 = vector.extract_strided_slice %262 {offsets = [0, 0], sizes = [8, 128], strides = [1, 1]} : vector<8x384xf32> to vector<8x128xf32>
    %264 = vector.extract_strided_slice %262 {offsets = [0, 128], sizes = [8, 128], strides = [1, 1]} : vector<8x384xf32> to vector<8x128xf32>
    %265 = vector.extract_strided_slice %262 {offsets = [0, 256], sizes = [8, 128], strides = [1, 1]} : vector<8x384xf32> to vector<8x128xf32>
    %266 = vector.extract_strided_slice %256 {offsets = [0, 384], sizes = [8, 128], strides = [1, 1]} : vector<8x512xf32> to vector<8x128xf32>
    %267 = math.tanh %266 : vector<8x128xf32>
    %268 = arith.mulf %264, %228 : vector<8x128xf32>
    %269 = arith.mulf %263, %267 : vector<8x128xf32>
    %270 = arith.addf %268, %269 : vector<8x128xf32>
    %271 = math.tanh %270 : vector<8x128xf32>
    %272 = arith.mulf %265, %271 : vector<8x128xf32>
    %273 = arith.select %26, %270, %228 : vector<8x128xi1>, vector<8x128xf32>
    %274 = arith.select %26, %272, %229 : vector<8x128xi1>, vector<8x128xf32>
    %275 = arith.truncf %274 : vector<8x128xf32> to vector<8x128xbf16>
    %cst_53 = arith.constant dense<0.000000e+00> : vector<8x512xf32>
    %276 = tpu.matmul %275, %4, %cst_53 {dimension_numbers = #tpu.dot_dimension_numbers<[1], [0], [0], [1], [0, 0, 1, 1], [], []>} : vector<8x128xbf16>, vector<128x512xbf16>, vector<8x512xf32> -> vector<8x512xf32>
    %277 = arith.addf %10, %276 : vector<8x512xf32>
    %278 = arith.truncf %253 : vector<8x128xf32> to vector<8x128xbf16>
    %cst_54 = arith.constant dense<0.000000e+00> : vector<8x512xf32>
    %279 = tpu.matmul %278, %2, %cst_54 {dimension_numbers = #tpu.dot_dimension_numbers<[1], [0], [0], [1], [0, 0, 1, 1], [], []>} : vector<8x128xbf16>, vector<128x512xbf16>, vector<8x512xf32> -> vector<8x512xf32>
    %280 = arith.addf %72, %279 : vector<8x512xf32>
    %281 = vector.extract_strided_slice %280 {offsets = [0, 0], sizes = [8, 384], strides = [1, 1]} : vector<8x512xf32> to vector<8x384xf32>
    %282 = arith.negf %281 : vector<8x384xf32>
    %283 = math.exp %282 : vector<8x384xf32>
    %cst_55 = arith.constant 1.000000e+00 : f32
    %284 = vector.broadcast %cst_55 : f32 to vector<8x384xf32>
    %285 = arith.addf %284, %283 : vector<8x384xf32>
    %286 = arith.divf %284, %285 : vector<8x384xf32>
    %287 = vector.extract_strided_slice %286 {offsets = [0, 0], sizes = [8, 128], strides = [1, 1]} : vector<8x384xf32> to vector<8x128xf32>
    %288 = vector.extract_strided_slice %286 {offsets = [0, 128], sizes = [8, 128], strides = [1, 1]} : vector<8x384xf32> to vector<8x128xf32>
    %289 = vector.extract_strided_slice %286 {offsets = [0, 256], sizes = [8, 128], strides = [1, 1]} : vector<8x384xf32> to vector<8x128xf32>
    %290 = vector.extract_strided_slice %280 {offsets = [0, 384], sizes = [8, 128], strides = [1, 1]} : vector<8x512xf32> to vector<8x128xf32>
    %291 = math.tanh %290 : vector<8x128xf32>
    %292 = arith.mulf %288, %252 : vector<8x128xf32>
    %293 = arith.mulf %287, %291 : vector<8x128xf32>
    %294 = arith.addf %292, %293 : vector<8x128xf32>
    %295 = math.tanh %294 : vector<8x128xf32>
    %296 = arith.mulf %289, %295 : vector<8x128xf32>
    %297 = arith.select %30, %294, %252 : vector<8x128xi1>, vector<8x128xf32>
    %298 = arith.select %30, %296, %253 : vector<8x128xi1>, vector<8x128xf32>
    %299 = arith.truncf %296 : vector<8x128xf32> to vector<8x128xbf16>
    %cst_56 = arith.constant dense<0.000000e+00> : vector<8x512xf32>
    %300 = tpu.matmul %299, %3, %cst_56 {dimension_numbers = #tpu.dot_dimension_numbers<[1], [0], [0], [1], [0, 0, 1, 1], [], []>} : vector<8x128xbf16>, vector<128x512xbf16>, vector<8x512xf32> -> vector<8x512xf32>
    %301 = arith.addf %277, %300 : vector<8x512xf32>
    %302 = vector.extract_strided_slice %301 {offsets = [0, 0], sizes = [8, 384], strides = [1, 1]} : vector<8x512xf32> to vector<8x384xf32>
    %303 = arith.negf %302 : vector<8x384xf32>
    %304 = math.exp %303 : vector<8x384xf32>
    %cst_57 = arith.constant 1.000000e+00 : f32
    %305 = vector.broadcast %cst_57 : f32 to vector<8x384xf32>
    %306 = arith.addf %305, %304 : vector<8x384xf32>
    %307 = arith.divf %305, %306 : vector<8x384xf32>
    %308 = vector.extract_strided_slice %307 {offsets = [0, 0], sizes = [8, 128], strides = [1, 1]} : vector<8x384xf32> to vector<8x128xf32>
    %309 = vector.extract_strided_slice %307 {offsets = [0, 128], sizes = [8, 128], strides = [1, 1]} : vector<8x384xf32> to vector<8x128xf32>
    %310 = vector.extract_strided_slice %307 {offsets = [0, 256], sizes = [8, 128], strides = [1, 1]} : vector<8x384xf32> to vector<8x128xf32>
    %311 = vector.extract_strided_slice %301 {offsets = [0, 384], sizes = [8, 128], strides = [1, 1]} : vector<8x512xf32> to vector<8x128xf32>
    %312 = math.tanh %311 : vector<8x128xf32>
    %313 = arith.mulf %309, %273 : vector<8x128xf32>
    %314 = arith.mulf %308, %312 : vector<8x128xf32>
    %315 = arith.addf %313, %314 : vector<8x128xf32>
    %316 = math.tanh %315 : vector<8x128xf32>
    %317 = arith.mulf %310, %316 : vector<8x128xf32>
    %318 = arith.select %30, %315, %273 : vector<8x128xi1>, vector<8x128xf32>
    %319 = arith.select %30, %317, %274 : vector<8x128xi1>, vector<8x128xf32>
    %320 = arith.truncf %319 : vector<8x128xf32> to vector<8x128xbf16>
    %cst_58 = arith.constant dense<0.000000e+00> : vector<8x512xf32>
    %321 = tpu.matmul %320, %4, %cst_58 {dimension_numbers = #tpu.dot_dimension_numbers<[1], [0], [0], [1], [0, 0, 1, 1], [], []>} : vector<8x128xbf16>, vector<128x512xbf16>, vector<8x512xf32> -> vector<8x512xf32>
    %322 = arith.addf %10, %321 : vector<8x512xf32>
    %323 = arith.truncf %298 : vector<8x128xf32> to vector<8x128xbf16>
    %cst_59 = arith.constant dense<0.000000e+00> : vector<8x512xf32>
    %324 = tpu.matmul %323, %2, %cst_59 {dimension_numbers = #tpu.dot_dimension_numbers<[1], [0], [0], [1], [0, 0, 1, 1], [], []>} : vector<8x128xbf16>, vector<128x512xbf16>, vector<8x512xf32> -> vector<8x512xf32>
    %325 = arith.addf %78, %324 : vector<8x512xf32>
    %326 = vector.extract_strided_slice %325 {offsets = [0, 0], sizes = [8, 384], strides = [1, 1]} : vector<8x512xf32> to vector<8x384xf32>
    %327 = arith.negf %326 : vector<8x384xf32>
    %328 = math.exp %327 : vector<8x384xf32>
    %cst_60 = arith.constant 1.000000e+00 : f32
    %329 = vector.broadcast %cst_60 : f32 to vector<8x384xf32>
    %330 = arith.addf %329, %328 : vector<8x384xf32>
    %331 = arith.divf %329, %330 : vector<8x384xf32>
    %332 = vector.extract_strided_slice %331 {offsets = [0, 0], sizes = [8, 128], strides = [1, 1]} : vector<8x384xf32> to vector<8x128xf32>
    %333 = vector.extract_strided_slice %331 {offsets = [0, 128], sizes = [8, 128], strides = [1, 1]} : vector<8x384xf32> to vector<8x128xf32>
    %334 = vector.extract_strided_slice %331 {offsets = [0, 256], sizes = [8, 128], strides = [1, 1]} : vector<8x384xf32> to vector<8x128xf32>
    %335 = vector.extract_strided_slice %325 {offsets = [0, 384], sizes = [8, 128], strides = [1, 1]} : vector<8x512xf32> to vector<8x128xf32>
    %336 = math.tanh %335 : vector<8x128xf32>
    %337 = arith.mulf %333, %297 : vector<8x128xf32>
    %338 = arith.mulf %332, %336 : vector<8x128xf32>
    %339 = arith.addf %337, %338 : vector<8x128xf32>
    %340 = math.tanh %339 : vector<8x128xf32>
    %341 = arith.mulf %334, %340 : vector<8x128xf32>
    %342 = arith.select %34, %339, %297 : vector<8x128xi1>, vector<8x128xf32>
    %343 = arith.select %34, %341, %298 : vector<8x128xi1>, vector<8x128xf32>
    %344 = arith.truncf %341 : vector<8x128xf32> to vector<8x128xbf16>
    %cst_61 = arith.constant dense<0.000000e+00> : vector<8x512xf32>
    %345 = tpu.matmul %344, %3, %cst_61 {dimension_numbers = #tpu.dot_dimension_numbers<[1], [0], [0], [1], [0, 0, 1, 1], [], []>} : vector<8x128xbf16>, vector<128x512xbf16>, vector<8x512xf32> -> vector<8x512xf32>
    %346 = arith.addf %322, %345 : vector<8x512xf32>
    %347 = vector.extract_strided_slice %346 {offsets = [0, 0], sizes = [8, 384], strides = [1, 1]} : vector<8x512xf32> to vector<8x384xf32>
    %348 = arith.negf %347 : vector<8x384xf32>
    %349 = math.exp %348 : vector<8x384xf32>
    %cst_62 = arith.constant 1.000000e+00 : f32
    %350 = vector.broadcast %cst_62 : f32 to vector<8x384xf32>
    %351 = arith.addf %350, %349 : vector<8x384xf32>
    %352 = arith.divf %350, %351 : vector<8x384xf32>
    %353 = vector.extract_strided_slice %352 {offsets = [0, 0], sizes = [8, 128], strides = [1, 1]} : vector<8x384xf32> to vector<8x128xf32>
    %354 = vector.extract_strided_slice %352 {offsets = [0, 128], sizes = [8, 128], strides = [1, 1]} : vector<8x384xf32> to vector<8x128xf32>
    %355 = vector.extract_strided_slice %352 {offsets = [0, 256], sizes = [8, 128], strides = [1, 1]} : vector<8x384xf32> to vector<8x128xf32>
    %356 = vector.extract_strided_slice %346 {offsets = [0, 384], sizes = [8, 128], strides = [1, 1]} : vector<8x512xf32> to vector<8x128xf32>
    %357 = math.tanh %356 : vector<8x128xf32>
    %358 = arith.mulf %354, %318 : vector<8x128xf32>
    %359 = arith.mulf %353, %357 : vector<8x128xf32>
    %360 = arith.addf %358, %359 : vector<8x128xf32>
    %361 = math.tanh %360 : vector<8x128xf32>
    %362 = arith.mulf %355, %361 : vector<8x128xf32>
    %363 = arith.select %34, %360, %318 : vector<8x128xi1>, vector<8x128xf32>
    %364 = arith.select %34, %362, %319 : vector<8x128xi1>, vector<8x128xf32>
    %365 = arith.truncf %364 : vector<8x128xf32> to vector<8x128xbf16>
    %cst_63 = arith.constant dense<0.000000e+00> : vector<8x512xf32>
    %366 = tpu.matmul %365, %4, %cst_63 {dimension_numbers = #tpu.dot_dimension_numbers<[1], [0], [0], [1], [0, 0, 1, 1], [], []>} : vector<8x128xbf16>, vector<128x512xbf16>, vector<8x512xf32> -> vector<8x512xf32>
    %367 = arith.addf %10, %366 : vector<8x512xf32>
    %368 = arith.truncf %343 : vector<8x128xf32> to vector<8x128xbf16>
    %cst_64 = arith.constant dense<0.000000e+00> : vector<8x512xf32>
    %369 = tpu.matmul %368, %2, %cst_64 {dimension_numbers = #tpu.dot_dimension_numbers<[1], [0], [0], [1], [0, 0, 1, 1], [], []>} : vector<8x128xbf16>, vector<128x512xbf16>, vector<8x512xf32> -> vector<8x512xf32>
    %370 = arith.addf %84, %369 : vector<8x512xf32>
    %371 = vector.extract_strided_slice %370 {offsets = [0, 0], sizes = [8, 384], strides = [1, 1]} : vector<8x512xf32> to vector<8x384xf32>
    %372 = arith.negf %371 : vector<8x384xf32>
    %373 = math.exp %372 : vector<8x384xf32>
    %cst_65 = arith.constant 1.000000e+00 : f32
    %374 = vector.broadcast %cst_65 : f32 to vector<8x384xf32>
    %375 = arith.addf %374, %373 : vector<8x384xf32>
    %376 = arith.divf %374, %375 : vector<8x384xf32>
    %377 = vector.extract_strided_slice %376 {offsets = [0, 0], sizes = [8, 128], strides = [1, 1]} : vector<8x384xf32> to vector<8x128xf32>
    %378 = vector.extract_strided_slice %376 {offsets = [0, 128], sizes = [8, 128], strides = [1, 1]} : vector<8x384xf32> to vector<8x128xf32>
    %379 = vector.extract_strided_slice %376 {offsets = [0, 256], sizes = [8, 128], strides = [1, 1]} : vector<8x384xf32> to vector<8x128xf32>
    %380 = vector.extract_strided_slice %370 {offsets = [0, 384], sizes = [8, 128], strides = [1, 1]} : vector<8x512xf32> to vector<8x128xf32>
    %381 = math.tanh %380 : vector<8x128xf32>
    %382 = arith.mulf %378, %342 : vector<8x128xf32>
    %383 = arith.mulf %377, %381 : vector<8x128xf32>
    %384 = arith.addf %382, %383 : vector<8x128xf32>
    %385 = math.tanh %384 : vector<8x128xf32>
    %386 = arith.mulf %379, %385 : vector<8x128xf32>
    %387 = arith.select %38, %384, %342 : vector<8x128xi1>, vector<8x128xf32>
    %388 = arith.select %38, %386, %343 : vector<8x128xi1>, vector<8x128xf32>
    %389 = arith.truncf %386 : vector<8x128xf32> to vector<8x128xbf16>
    %cst_66 = arith.constant dense<0.000000e+00> : vector<8x512xf32>
    %390 = tpu.matmul %389, %3, %cst_66 {dimension_numbers = #tpu.dot_dimension_numbers<[1], [0], [0], [1], [0, 0, 1, 1], [], []>} : vector<8x128xbf16>, vector<128x512xbf16>, vector<8x512xf32> -> vector<8x512xf32>
    %391 = arith.addf %367, %390 : vector<8x512xf32>
    %392 = vector.extract_strided_slice %391 {offsets = [0, 0], sizes = [8, 384], strides = [1, 1]} : vector<8x512xf32> to vector<8x384xf32>
    %393 = arith.negf %392 : vector<8x384xf32>
    %394 = math.exp %393 : vector<8x384xf32>
    %cst_67 = arith.constant 1.000000e+00 : f32
    %395 = vector.broadcast %cst_67 : f32 to vector<8x384xf32>
    %396 = arith.addf %395, %394 : vector<8x384xf32>
    %397 = arith.divf %395, %396 : vector<8x384xf32>
    %398 = vector.extract_strided_slice %397 {offsets = [0, 0], sizes = [8, 128], strides = [1, 1]} : vector<8x384xf32> to vector<8x128xf32>
    %399 = vector.extract_strided_slice %397 {offsets = [0, 128], sizes = [8, 128], strides = [1, 1]} : vector<8x384xf32> to vector<8x128xf32>
    %400 = vector.extract_strided_slice %397 {offsets = [0, 256], sizes = [8, 128], strides = [1, 1]} : vector<8x384xf32> to vector<8x128xf32>
    %401 = vector.extract_strided_slice %391 {offsets = [0, 384], sizes = [8, 128], strides = [1, 1]} : vector<8x512xf32> to vector<8x128xf32>
    %402 = math.tanh %401 : vector<8x128xf32>
    %403 = arith.mulf %399, %363 : vector<8x128xf32>
    %404 = arith.mulf %398, %402 : vector<8x128xf32>
    %405 = arith.addf %403, %404 : vector<8x128xf32>
    %406 = math.tanh %405 : vector<8x128xf32>
    %407 = arith.mulf %400, %406 : vector<8x128xf32>
    %408 = arith.select %38, %405, %363 : vector<8x128xi1>, vector<8x128xf32>
    %409 = arith.select %38, %407, %364 : vector<8x128xi1>, vector<8x128xf32>
    %410 = arith.truncf %409 : vector<8x128xf32> to vector<8x128xbf16>
    %cst_68 = arith.constant dense<0.000000e+00> : vector<8x512xf32>
    %411 = tpu.matmul %410, %4, %cst_68 {dimension_numbers = #tpu.dot_dimension_numbers<[1], [0], [0], [1], [0, 0, 1, 1], [], []>} : vector<8x128xbf16>, vector<128x512xbf16>, vector<8x512xf32> -> vector<8x512xf32>
    %412 = arith.addf %10, %411 : vector<8x512xf32>
    %413 = arith.truncf %388 : vector<8x128xf32> to vector<8x128xbf16>
    %cst_69 = arith.constant dense<0.000000e+00> : vector<8x512xf32>
    %414 = tpu.matmul %413, %2, %cst_69 {dimension_numbers = #tpu.dot_dimension_numbers<[1], [0], [0], [1], [0, 0, 1, 1], [], []>} : vector<8x128xbf16>, vector<128x512xbf16>, vector<8x512xf32> -> vector<8x512xf32>
    %415 = arith.addf %90, %414 : vector<8x512xf32>
    %416 = vector.extract_strided_slice %415 {offsets = [0, 0], sizes = [8, 384], strides = [1, 1]} : vector<8x512xf32> to vector<8x384xf32>
    %417 = arith.negf %416 : vector<8x384xf32>
    %418 = math.exp %417 : vector<8x384xf32>
    %cst_70 = arith.constant 1.000000e+00 : f32
    %419 = vector.broadcast %cst_70 : f32 to vector<8x384xf32>
    %420 = arith.addf %419, %418 : vector<8x384xf32>
    %421 = arith.divf %419, %420 : vector<8x384xf32>
    %422 = vector.extract_strided_slice %421 {offsets = [0, 0], sizes = [8, 128], strides = [1, 1]} : vector<8x384xf32> to vector<8x128xf32>
    %423 = vector.extract_strided_slice %421 {offsets = [0, 128], sizes = [8, 128], strides = [1, 1]} : vector<8x384xf32> to vector<8x128xf32>
    %424 = vector.extract_strided_slice %421 {offsets = [0, 256], sizes = [8, 128], strides = [1, 1]} : vector<8x384xf32> to vector<8x128xf32>
    %425 = vector.extract_strided_slice %415 {offsets = [0, 384], sizes = [8, 128], strides = [1, 1]} : vector<8x512xf32> to vector<8x128xf32>
    %426 = math.tanh %425 : vector<8x128xf32>
    %427 = arith.mulf %423, %387 : vector<8x128xf32>
    %428 = arith.mulf %422, %426 : vector<8x128xf32>
    %429 = arith.addf %427, %428 : vector<8x128xf32>
    %430 = math.tanh %429 : vector<8x128xf32>
    %431 = arith.mulf %424, %430 : vector<8x128xf32>
    %432 = arith.truncf %431 : vector<8x128xf32> to vector<8x128xbf16>
    %cst_71 = arith.constant dense<0.000000e+00> : vector<8x512xf32>
    %433 = tpu.matmul %432, %3, %cst_71 {dimension_numbers = #tpu.dot_dimension_numbers<[1], [0], [0], [1], [0, 0, 1, 1], [], []>} : vector<8x128xbf16>, vector<128x512xbf16>, vector<8x512xf32> -> vector<8x512xf32>
    %434 = arith.addf %412, %433 : vector<8x512xf32>
    %435 = vector.extract_strided_slice %434 {offsets = [0, 0], sizes = [8, 384], strides = [1, 1]} : vector<8x512xf32> to vector<8x384xf32>
    %436 = arith.negf %435 : vector<8x384xf32>
    %437 = math.exp %436 : vector<8x384xf32>
    %cst_72 = arith.constant 1.000000e+00 : f32
    %438 = vector.broadcast %cst_72 : f32 to vector<8x384xf32>
    %439 = arith.addf %438, %437 : vector<8x384xf32>
    %440 = arith.divf %438, %439 : vector<8x384xf32>
    %441 = vector.extract_strided_slice %440 {offsets = [0, 0], sizes = [8, 128], strides = [1, 1]} : vector<8x384xf32> to vector<8x128xf32>
    %442 = vector.extract_strided_slice %440 {offsets = [0, 128], sizes = [8, 128], strides = [1, 1]} : vector<8x384xf32> to vector<8x128xf32>
    %443 = vector.extract_strided_slice %440 {offsets = [0, 256], sizes = [8, 128], strides = [1, 1]} : vector<8x384xf32> to vector<8x128xf32>
    %444 = vector.extract_strided_slice %434 {offsets = [0, 384], sizes = [8, 128], strides = [1, 1]} : vector<8x512xf32> to vector<8x128xf32>
    %445 = math.tanh %444 : vector<8x128xf32>
    %446 = arith.mulf %442, %408 : vector<8x128xf32>
    %447 = arith.mulf %441, %445 : vector<8x128xf32>
    %448 = arith.addf %446, %447 : vector<8x128xf32>
    %449 = math.tanh %448 : vector<8x128xf32>
    %450 = arith.mulf %443, %449 : vector<8x128xf32>
    %451 = arith.select %42, %450, %409 : vector<8x128xi1>, vector<8x128xf32>
    %452 = arith.truncf %451 : vector<8x128xf32> to vector<8x128xbf16>
    %c0_73 = arith.constant 0 : index
    %c0_74 = arith.constant 0 : index
    %453 = vector.load %arg8[%c0_73, %c0_74] : memref<128x64xbf16, #tpu.memory_space<vmem>>, vector<128x64xbf16>
    %cst_75 = arith.constant dense<0.000000e+00> : vector<8x64xf32>
    %454 = tpu.matmul %452, %453, %cst_75 {dimension_numbers = #tpu.dot_dimension_numbers<[1], [0], [0], [1], [0, 0, 1, 1], [], []>} : vector<8x128xbf16>, vector<128x64xbf16>, vector<8x64xf32> -> vector<8x64xf32>
    %c0_76 = arith.constant 0 : index
    %c0_77 = arith.constant 0 : index
    %455 = vector.load %arg9[%c0_76, %c0_77] : memref<1x64xf32, #tpu.memory_space<vmem>>, vector<1x64xf32>
    %456 = vector.broadcast %455 : vector<1x64xf32> to vector<8x64xf32>
    %457 = arith.addf %454, %456 : vector<8x64xf32>
    %cst_78 = arith.constant 0.000000e+00 : f32
    %458 = vector.broadcast %cst_78 : f32 to vector<8x64xf32>
    %459 = arith.maximumf %457, %458 : vector<8x64xf32>
    %460 = vector.extract_strided_slice %459 {offsets = [0, 0], sizes = [4, 64], strides = [1, 1]} : vector<8x64xf32> to vector<4x64xf32>
    %c0_79 = arith.constant 0 : index
    %c0_80 = arith.constant 0 : index
    %461 = vector.load %arg10[%c0_79, %c0_80] : memref<64x16xf32, #tpu.memory_space<vmem>>, vector<64x16xf32>
    %cst_81 = arith.constant dense<0.000000e+00> : vector<4x16xf32>
    %462 = tpu.matmul %460, %461, %cst_81 {dimension_numbers = #tpu.dot_dimension_numbers<[1], [0], [0], [1], [0, 0, 1, 1], [], []>} : vector<4x64xf32>, vector<64x16xf32>, vector<4x16xf32> -> vector<4x16xf32>
    %463 = vector.extract_strided_slice %459 {offsets = [4, 0], sizes = [4, 64], strides = [1, 1]} : vector<8x64xf32> to vector<4x64xf32>
    %c0_82 = arith.constant 0 : index
    %c0_83 = arith.constant 0 : index
    %464 = vector.load %arg11[%c0_82, %c0_83] : memref<64x16xf32, #tpu.memory_space<vmem>>, vector<64x16xf32>
    %cst_84 = arith.constant dense<0.000000e+00> : vector<4x16xf32>
    %465 = tpu.matmul %463, %464, %cst_84 {dimension_numbers = #tpu.dot_dimension_numbers<[1], [0], [0], [1], [0, 0, 1, 1], [], []>} : vector<4x64xf32>, vector<64x16xf32>, vector<4x16xf32> -> vector<4x16xf32>
    %466 = arith.addf %462, %465 : vector<4x16xf32>
    %c0_85 = arith.constant 0 : index
    %c0_86 = arith.constant 0 : index
    %467 = vector.load %arg12[%c0_85, %c0_86] : memref<1x16xf32, #tpu.memory_space<vmem>>, vector<1x16xf32>
    %468 = vector.broadcast %467 : vector<1x16xf32> to vector<4x16xf32>
    %469 = arith.addf %466, %468 : vector<4x16xf32>
    %cst_87 = arith.constant 0.000000e+00 : f32
    %470 = vector.broadcast %cst_87 : f32 to vector<4x16xf32>
    %471 = arith.maximumf %469, %470 : vector<4x16xf32>
    %c0_88 = arith.constant 0 : index
    %c0_89 = arith.constant 0 : index
    %472 = vector.load %arg13[%c0_88, %c0_89] : memref<16x1xf32, #tpu.memory_space<vmem>>, vector<16x1xf32>
    %cst_90 = arith.constant dense<0.000000e+00> : vector<4x1xf32>
    %473 = tpu.matmul %471, %472, %cst_90 {dimension_numbers = #tpu.dot_dimension_numbers<[1], [0], [0], [1], [0, 0, 1, 1], [], []>} : vector<4x16xf32>, vector<16x1xf32>, vector<4x1xf32> -> vector<4x1xf32>
    %c0_91 = arith.constant 0 : index
    %c0_92 = arith.constant 0 : index
    %474 = vector.load %arg14[%c0_91, %c0_92] : memref<1x1xf32, #tpu.memory_space<vmem>>, vector<1x1xf32>
    %475 = vector.broadcast %474 : vector<1x1xf32> to vector<4x1xf32>
    %476 = arith.addf %473, %475 : vector<4x1xf32>
    %c0_93 = arith.constant 0 : index
    %c0_94 = arith.constant 0 : index
    %477 = vector.load %arg15[%c0_93, %c0_94] : memref<1x2xf32, #tpu.memory_space<vmem>>, vector<1x2xf32>
    %478 = vector.extract_strided_slice %477 {offsets = [0, 0], sizes = [1, 1], strides = [1, 1]} : vector<1x2xf32> to vector<1x1xf32>
    %479 = vector.broadcast %478 : vector<1x1xf32> to vector<4x1xf32>
    %480 = arith.mulf %479, %476 : vector<4x1xf32>
    %481 = vector.extract_strided_slice %477 {offsets = [0, 1], sizes = [1, 1], strides = [1, 1]} : vector<1x2xf32> to vector<1x1xf32>
    %482 = vector.broadcast %481 : vector<1x1xf32> to vector<4x1xf32>
    %483 = arith.addf %480, %482 : vector<4x1xf32>
    %cst_95 = arith.constant 0.000000e+00 : f32
    %484 = vector.broadcast %cst_95 : f32 to vector<4x1xf32>
    %485 = arith.subf %484, %483 : vector<4x1xf32>
    %486 = arith.negf %485 : vector<4x1xf32>
    %487 = math.exp %486 : vector<4x1xf32>
    %cst_96 = arith.constant 1.000000e+00 : f32
    %488 = vector.broadcast %cst_96 : f32 to vector<4x1xf32>
    %489 = arith.addf %488, %487 : vector<4x1xf32>
    %490 = arith.divf %488, %489 : vector<4x1xf32>
    %c0_97 = arith.constant 0 : index
    %c0_98 = arith.constant 0 : index
    %491 = vector.load %arg16[%c0_97, %c0_98] : memref<4x1xf32, #tpu.memory_space<vmem>>, vector<4x1xf32>
    tpu.vector_store %arg16[%c0_97, %c0_98], %490 {strides = array<i32>} : memref<4x1xf32, #tpu.memory_space<vmem>>, vector<4x1xf32>,
    return
  }
}

</mosaic_0001>

<llo_original>
// kernel: tpu_custom_call.1
$region0: #{tpu_custom_call.1}
  #allocation0 [shape = 'u32[]', space=smem, size = 0x4, offset = 0x4, fixed_abs, tag = 'smem constant byte address 0x4 - core index']
  #allocation1 [shape = 'u32[144,128]{1,0:T(1,128)}', space=vmem, size = 0x12000, scoped, tag = 'internal scratch']
  #allocation2 [shape = 'f32[1,1]{1,0:T(1,128)S(1)}', space=vmem, size = 0x200, scoped, tag = 'scoped memory for tpu_custom_call.1']
  %s0 = inlined_call_operand.vmem [shape: f32[8,8,1], index: 0, kind: input, shape index: {}]
  %s1 = inlined_call_operand.vmem [shape: s32[8,1], index: 1, kind: input, shape index: {}]
  %s2 = inlined_call_operand.vmem [shape: f32[1,512], index: 2, kind: input, shape index: {}]
  %s3 = inlined_call_operand.vmem [shape: f32[1,512], index: 3, kind: input, shape index: {}]
  %s4 = inlined_call_operand.vmem [shape: bf16[128,512], index: 4, kind: input, shape index: {}]
  %s5 = inlined_call_operand.hbm [shape: bf16[128,512], index: 5, kind: input, shape index: {}]
  %s6 = inlined_call_operand.hbm [shape: bf16[128,512], index: 6, kind: input, shape index: {}]
  %s7 = inlined_call_operand.vmem [shape: f32[1,512], index: 7, kind: input, shape index: {}]
  %s8 = inlined_call_operand.vmem [shape: bf16[128,64], index: 8, kind: input, shape index: {}]
  %s9 = inlined_call_operand.vmem [shape: f32[1,64], index: 9, kind: input, shape index: {}]
  %s10 = inlined_call_operand.vmem [shape: f32[64,16], index: 10, kind: input, shape index: {}]
  %s11 = inlined_call_operand.vmem [shape: f32[64,16], index: 11, kind: input, shape index: {}]
  %s12 = inlined_call_operand.vmem [shape: f32[1,16], index: 12, kind: input, shape index: {}]
  %s13 = inlined_call_operand.vmem [shape: f32[16,1], index: 13, kind: input, shape index: {}]
  %s14 = inlined_call_operand.<no memory space> [shape: f32[1,1], index: 14, kind: input, shape index: {}]
  %s15 = inlined_call_operand.vmem [shape: f32[1,2], index: 15, kind: input, shape index: {}]
  %s16 = inlined_call_operand.vmem [shape: f32[4,1], index: 16, kind: output, shape index: {}]
  %s17 = sld [smem:[#allocation0]]
  $region82: #{tpu_custom_call.1} parent=0
    _
  %s19 = ssub.s32 1, %s17
  %s20 = scalar_select 0, %s19, %s17
  %v21 = vstv %s14
  %22 = vst [vmem:[#allocation2] sm:$0x1] %v21
  $region1: #{tpu_custom_call.1} parent=0
    #allocation3 [shape = 'u8[131072]{0}', space=vmem, size = 0x20000, scoped, tag = 'input window, operand 5, single buffered']
    #allocation4 [shape = 's32[1]{0}', space=sflag, size = 0x4, scoped, tag = 'scoped memory for tpu_custom_call.1']
    #allocation5 [shape = 'u8[131072]{0}', space=vmem, size = 0x20000, scoped, tag = 'input window, operand 6, single buffered']
    #allocation6 [shape = 's32[1]{0}', space=sflag, size = 0x4, scoped, tag = 'scoped memory for tpu_custom_call.1']
    %23 = vsyncpa [#allocation4], 0
    %24 = vsyncpa [#allocation6], 0
    // Predicated region
    $region2: #{tpu_custom_call.1} parent=1 // pred_check
      _
    $region3: #{tpu_custom_call.1} parent=1 // pred_check_branch
      %26 = sbr.rel (0) target = $region5
    $region4: #{tpu_custom_call.1} parent=1 // pred_region
      _
    $region5: #{tpu_custom_call.1} parent=1 // pred_fallthru
      _
    // Predicated region
    $region6: #{tpu_custom_call.1} parent=1 // pred_check
      _
    $region7: #{tpu_custom_call.1} parent=1 // pred_check_branch
      %28 = sbr.rel (0) target = $region9
    $region8: #{tpu_custom_call.1} parent=1 // pred_region
      _
    $region9: #{tpu_custom_call.1} parent=1 // pred_fallthru
      _
    // Predicated region
    $region10: #{tpu_custom_call.1} parent=1 // pred_check
      _
    $region11: #{tpu_custom_call.1} parent=1 // pred_check_branch
      %30 = sbr.rel (0) target = $region13
    $region12: #{tpu_custom_call.1} parent=1 // pred_region
      _
    $region13: #{tpu_custom_call.1} parent=1 // pred_fallthru
      _
    // Predicated region
    $region14: #{tpu_custom_call.1} parent=1 // pred_check
      _
    $region15: #{tpu_custom_call.1} parent=1 // pred_check_branch
      %32 = sbr.rel (0) target = $region17
    $region16: #{tpu_custom_call.1} parent=1 // pred_region
      _
    $region17: #{tpu_custom_call.1} parent=1 // pred_fallthru
      _
    // Predicated region
    $region18: #{tpu_custom_call.1} parent=1 // pred_check
      _
    $region19: #{tpu_custom_call.1} parent=1 // pred_check_branch
      %34 = sbr.rel (0) target = $region21
    $region20: #{tpu_custom_call.1} parent=1 // pred_region
      _
    $region21: #{tpu_custom_call.1} parent=1 // pred_fallthru
      _
    // Predicated region
    $region22: #{tpu_custom_call.1} parent=1 // pred_check
      _
    $region23: #{tpu_custom_call.1} parent=1 // pred_check_branch
      %36 = sbr.rel (0) target = $region25
    $region24: #{tpu_custom_call.1} parent=1 // pred_region
      %s38 = ssub.s32 4096, 4096
      %39 = vsyncadd [#allocation4], %s38
      %s40 = sshll.u32 [#allocation3], 4
      %s41 = int_to_ptr.vmem [resolvable:$true] %s40
      %46 = dma.hbm_to_vmem [thread:$0]  %s5, 4096, %s41, [#allocation4], 256, 256, 16
    $region25: #{tpu_custom_call.1} parent=1 // pred_fallthru
      _
    // Predicated region
    $region26: #{tpu_custom_call.1} parent=1 // pred_check
      _
    $region27: #{tpu_custom_call.1} parent=1 // pred_check_branch
      %48 = sbr.rel (0) target = $region29
    $region28: #{tpu_custom_call.1} parent=1 // pred_region
      %s50 = ssub.s32 4096, 4096
      %51 = vsyncadd [#allocation6], %s50
      %s52 = sshll.u32 [#allocation5], 4
      %s53 = int_to_ptr.vmem [resolvable:$true] %s52
      %58 = dma.hbm_to_vmem [thread:$0]  %s6, 4096, %s53, [#allocation6], 256, 256, 16
    $region29: #{tpu_custom_call.1} parent=1 // pred_fallthru
      _
    // Predicated region
    $region30: #{tpu_custom_call.1} parent=1 // pred_check
      _
    $region31: #{tpu_custom_call.1} parent=1 // pred_check_branch
      %60 = sbr.rel (0) target = $region33
    $region32: #{tpu_custom_call.1} parent=1 // pred_region
      _
    $region33: #{tpu_custom_call.1} parent=1 // pred_fallthru
      _
    // Predicated region
    $region34: #{tpu_custom_call.1} parent=1 // pred_check
      _
    $region35: #{tpu_custom_call.1} parent=1 // pred_check_branch
      %62 = sbr.rel (0) target = $region37
    $region36: #{tpu_custom_call.1} parent=1 // pred_region
      _
    $region37: #{tpu_custom_call.1} parent=1 // pred_fallthru
      _
    // Predicated region
    $region38: #{tpu_custom_call.1} parent=1 // pred_check
      _
    $region39: #{tpu_custom_call.1} parent=1 // pred_check_branch
      %64 = sbr.rel (0) target = $region41
    $region40: #{tpu_custom_call.1} parent=1 // pred_region
      _
    $region41: #{tpu_custom_call.1} parent=1 // pred_fallthru
      _
    // Predicated region
    $region42: #{tpu_custom_call.1} parent=1 // pred_check
      _
    $region43: #{tpu_custom_call.1} parent=1 // pred_check_branch
      %66 = sbr.rel (0) target = $region45
    $region44: #{tpu_custom_call.1} parent=1 // pred_region
      _
    $region45: #{tpu_custom_call.1} parent=1 // pred_fallthru
      _
    // Predicated region
    $region46: #{tpu_custom_call.1} parent=1 // pred_check
      _
    $region47: #{tpu_custom_call.1} parent=1 // pred_check_branch
      %68 = sbr.rel (0) target = $region49
    $region48: #{tpu_custom_call.1} parent=1 // pred_region
      _
    $region49: #{tpu_custom_call.1} parent=1 // pred_fallthru
      _
    // Predicated region
    $region50: #{tpu_custom_call.1} parent=1 // pred_check
      _
    $region51: #{tpu_custom_call.1} parent=1 // pred_check_branch
      %70 = sbr.rel (0) target = $region53
    $region52: #{tpu_custom_call.1} parent=1 // pred_region
      _
    $region53: #{tpu_custom_call.1} parent=1 // pred_fallthru
      _
    // Predicated region
    $region54: #{tpu_custom_call.1} parent=1 // pred_check
      _
    $region55: #{tpu_custom_call.1} parent=1 // pred_check_branch
      %72 = sbr.rel (0) target = $region57
    $region56: #{tpu_custom_call.1} parent=1 // pred_region
      _
    $region57: #{tpu_custom_call.1} parent=1 // pred_fallthru
      _
    // Predicated region
    $region58: #{tpu_custom_call.1} parent=1 // pred_check
      _
    $region59: #{tpu_custom_call.1} parent=1 // pred_check_branch
      %74 = sbr.rel (0) target = $region61
    $region60: #{tpu_custom_call.1} parent=1 // pred_region
      _
    $region61: #{tpu_custom_call.1} parent=1 // pred_fallthru
      _
    // Predicated region
    $region62: #{tpu_custom_call.1} parent=1 // pred_check
      _
    $region63: #{tpu_custom_call.1} parent=1 // pred_check_branch
      %76 = sbr.rel (0) target = $region65
    $region64: #{tpu_custom_call.1} parent=1 // pred_region
      _
    $region65: #{tpu_custom_call.1} parent=1 // pred_fallthru
      _
    // Predicated region
    $region66: #{tpu_custom_call.1} parent=1 // pred_check
      _
    $region67: #{tpu_custom_call.1} parent=1 // pred_check_branch
      %78 = sbr.rel (0) target = $region69
    $region68: #{tpu_custom_call.1} parent=1 // pred_region
      %79 = dma.done [#allocation4], 4096
    $region69: #{tpu_custom_call.1} parent=1 // pred_fallthru
      _
    // Predicated region
    $region70: #{tpu_custom_call.1} parent=1 // pred_check
      _
    $region71: #{tpu_custom_call.1} parent=1 // pred_check_branch
      %81 = sbr.rel (0) target = $region73
    $region72: #{tpu_custom_call.1} parent=1 // pred_region
      %82 = dma.done [#allocation6], 4096
    $region73: #{tpu_custom_call.1} parent=1 // pred_fallthru
      _
    %v84 = vld [vmem:[%s1] sm:$0xff]
    %v85 = vld [vmem:[%s2] sm:$0xf]
    %v86 = vld [vmem:[%s4] sm:$0xff]
    %v87 = vld [vmem:[%s4 + $0x8] sm:$0xff]
    %v88 = vld [vmem:[%s4 + $0x10] sm:$0xff]
    %v89 = vld [vmem:[%s4 + $0x18] sm:$0xff]
    %v90 = vld [vmem:[%s4 + $0x20] sm:$0xff]
    %v91 = vld [vmem:[%s4 + $0x28] sm:$0xff]
    %v92 = vld [vmem:[%s4 + $0x30] sm:$0xff]
    %v93 = vld [vmem:[%s4 + $0x38] sm:$0xff]
    %v94 = vld [vmem:[%s4 + $0x40] sm:$0xff]
    %v95 = vld [vmem:[%s4 + $0x48] sm:$0xff]
    %v96 = vld [vmem:[%s4 + $0x50] sm:$0xff]
    %v97 = vld [vmem:[%s4 + $0x58] sm:$0xff]
    %v98 = vld [vmem:[%s4 + $0x60] sm:$0xff]
    %v99 = vld [vmem:[%s4 + $0x68] sm:$0xff]
    %v100 = vld [vmem:[%s4 + $0x70] sm:$0xff]
    %v101 = vld [vmem:[%s4 + $0x78] sm:$0xff]
    %v102 = vld [vmem:[%s4 + $0x80] sm:$0xff]
    %v103 = vld [vmem:[%s4 + $0x88] sm:$0xff]
    %v104 = vld [vmem:[%s4 + $0x90] sm:$0xff]
    %v105 = vld [vmem:[%s4 + $0x98] sm:$0xff]
    %v106 = vld [vmem:[%s4 + $0xa0] sm:$0xff]
    %v107 = vld [vmem:[%s4 + $0xa8] sm:$0xff]
    %v108 = vld [vmem:[%s4 + $0xb0] sm:$0xff]
    %v109 = vld [vmem:[%s4 + $0xb8] sm:$0xff]
    %v110 = vld [vmem:[%s4 + $0xc0] sm:$0xff]
    %v111 = vld [vmem:[%s4 + $0xc8] sm:$0xff]
    %v112 = vld [vmem:[%s4 + $0xd0] sm:$0xff]
    %v113 = vld [vmem:[%s4 + $0xd8] sm:$0xff]
    %v114 = vld [vmem:[%s4 + $0xe0] sm:$0xff]
    %v115 = vld [vmem:[%s4 + $0xe8] sm:$0xff]
    %v116 = vld [vmem:[%s4 + $0xf0] sm:$0xff]
    %v117 = vld [vmem:[%s4 + $0xf8] sm:$0xff]
    %v118 = vld [vmem:[#allocation3] sm:$0xff]
    %v119 = vld [vmem:[#allocation3 + $0x8] sm:$0xff]
    %v120 = vld [vmem:[#allocation3 + $0x10] sm:$0xff]
    %v121 = vld [vmem:[#allocation3 + $0x18] sm:$0xff]
    %v122 = vld [vmem:[#allocation3 + $0x20] sm:$0xff]
    %v123 = vld [vmem:[#allocation3 + $0x28] sm:$0xff]
    %v124 = vld [vmem:[#allocation3 + $0x30] sm:$0xff]
    %v125 = vld [vmem:[#allocation3 + $0x38] sm:$0xff]
    %v126 = vld [vmem:[#allocation3 + $0x40] sm:$0xff]
    %v127 = vld [vmem:[#allocation3 + $0x48] sm:$0xff]
    %v128 = vld [vmem:[#allocation3 + $0x50] sm:$0xff]
    %v129 = vld [vmem:[#allocation3 + $0x58] sm:$0xff]
    %v130 = vld [vmem:[#allocation3 + $0x60] sm:$0xff]
    %v131 = vld [vmem:[#allocation3 + $0x68] sm:$0xff]
    %v132 = vld [vmem:[#allocation3 + $0x70] sm:$0xff]
    %v133 = vld [vmem:[#allocation3 + $0x78] sm:$0xff]
    %v134 = vld [vmem:[#allocation3 + $0x80] sm:$0xff]
    %v135 = vld [vmem:[#allocation3 + $0x88] sm:$0xff]
    %v136 = vld [vmem:[#allocation3 + $0x90] sm:$0xff]
    %v137 = vld [vmem:[#allocation3 + $0x98] sm:$0xff]
    %v138 = vld [vmem:[#allocation3 + $0xa0] sm:$0xff]
    %v139 = vld [vmem:[#allocation3 + $0xa8] sm:$0xff]
    %v140 = vld [vmem:[#allocation3 + $0xb0] sm:$0xff]
    %v141 = vld [vmem:[#allocation3 + $0xb8] sm:$0xff]
    %v142 = vld [vmem:[#allocation3 + $0xc0] sm:$0xff]
    %v143 = vld [vmem:[#allocation3 + $0xc8] sm:$0xff]
    %v144 = vld [vmem:[#allocation3 + $0xd0] sm:$0xff]
    %v145 = vld [vmem:[#allocation3 + $0xd8] sm:$0xff]
    %v146 = vld [vmem:[#allocation3 + $0xe0] sm:$0xff]
    %v147 = vld [vmem:[#allocation3 + $0xe8] sm:$0xff]
    %v148 = vld [vmem:[#allocation3 + $0xf0] sm:$0xff]
    %v149 = vld [vmem:[#allocation3 + $0xf8] sm:$0xff]
    %v150 = vld [vmem:[#allocation5] sm:$0xff]
    %v151 = vld [vmem:[#allocation5 + $0x8] sm:$0xff]
    %v152 = vld [vmem:[#allocation5 + $0x10] sm:$0xff]
    %v153 = vld [vmem:[#allocation5 + $0x18] sm:$0xff]
    %v154 = vld [vmem:[#allocation5 + $0x20] sm:$0xff]
    %v155 = vld [vmem:[#allocation5 + $0x28] sm:$0xff]
    %v156 = vld [vmem:[#allocation5 + $0x30] sm:$0xff]
    %v157 = vld [vmem:[#allocation5 + $0x38] sm:$0xff]
    %v158 = vld [vmem:[#allocation5 + $0x40] sm:$0xff]
    %v159 = vld [vmem:[#allocation5 + $0x48] sm:$0xff]
    %v160 = vld [vmem:[#allocation5 + $0x50] sm:$0xff]
    %v161 = vld [vmem:[#allocation5 + $0x58] sm:$0xff]
    %v162 = vld [vmem:[#allocation5 + $0x60] sm:$0xff]
    %v163 = vld [vmem:[#allocation5 + $0x68] sm:$0xff]
    %v164 = vld [vmem:[#allocation5 + $0x70] sm:$0xff]
    %v165 = vld [vmem:[#allocation5 + $0x78] sm:$0xff]
    %v166 = vld [vmem:[#allocation5 + $0x80] sm:$0xff]
    %v167 = vld [vmem:[#allocation5 + $0x88] sm:$0xff]
    %v168 = vld [vmem:[#allocation5 + $0x90] sm:$0xff]
    %v169 = vld [vmem:[#allocation5 + $0x98] sm:$0xff]
    %v170 = vld [vmem:[#allocation5 + $0xa0] sm:$0xff]
    %v171 = vld [vmem:[#allocation5 + $0xa8] sm:$0xff]
    %v172 = vld [vmem:[#allocation5 + $0xb0] sm:$0xff]
    %v173 = vld [vmem:[#allocation5 + $0xb8] sm:$0xff]
    %v174 = vld [vmem:[#allocation5 + $0xc0] sm:$0xff]
    %v175 = vld [vmem:[#allocation5 + $0xc8] sm:$0xff]
    %v176 = vld [vmem:[#allocation5 + $0xd0] sm:$0xff]
    %v177 = vld [vmem:[#allocation5 + $0xd8] sm:$0xff]
    %v178 = vld [vmem:[#allocation5 + $0xe0] sm:$0xff]
    %v179 = vld [vmem:[#allocation5 + $0xe8] sm:$0xff]
    %v180 = vld [vmem:[#allocation5 + $0xf0] sm:$0xff]
    %v181 = vld [vmem:[#allocation5 + $0xf8] sm:$0xff]
    %v182 = vld [vmem:[%s3] sm:$0xf]
    %v184 = vlaneseq
    %v185 = vshrl.u32 %v184, 7
    %v186 = vsub.s32 0, %v185
    %v187 = vrot.slane %v182, %v186
    %v188 = vlaneseq
    %v189 = vshrl.u32 %v188, 7
    %v190 = vsub.s32 1, %v189
    %v191 = vrot.slane %v182, %v190
    %v192 = vlaneseq
    %v193 = vshrl.u32 %v192, 7
    %v194 = vsub.s32 2, %v193
    %v195 = vrot.slane %v182, %v194
    %v196 = vlaneseq
    %v197 = vshrl.u32 %v196, 7
    %v198 = vsub.s32 3, %v197
    %v199 = vrot.slane %v182, %v198
    %v204 = vld [vmem:[%s7] sm:$0xf]
    %v206 = vlaneseq
    %v207 = vshrl.u32 %v206, 7
    %v208 = vsub.s32 0, %v207
    %v209 = vrot.slane %v204, %v208
    %v210 = vlaneseq
    %v211 = vshrl.u32 %v210, 7
    %v212 = vsub.s32 1, %v211
    %v213 = vrot.slane %v204, %v212
    %v214 = vlaneseq
    %v215 = vshrl.u32 %v214, 7
    %v216 = vsub.s32 2, %v215
    %v217 = vrot.slane %v204, %v216
    %v218 = vlaneseq
    %v219 = vshrl.u32 %v218, 7
    %v220 = vsub.s32 3, %v219
    %v221 = vrot.slane %v204, %v220
    %vm226 = vcmp.gt.s32.totalorder %v84, 0
    %v227 = vsel %vm226, 1, 0
    %228 = vset.pattern.permute.xlu0 0
    %229 = vperm.xlu0 %228, %v227
    %v230 = vpop.permute.xlu0 %229
    %vm231 = vcmp.eq.s32.totalorder %v230, 1
    %vm232 = vcmp.gt.s32.totalorder %v84, 1
    %v233 = vsel %vm232, 1, 0
    %234 = vset.pattern.permute.xlu0 0
    %235 = vperm.xlu0 %234, %v233
    %v236 = vpop.permute.xlu0 %235
    %vm237 = vcmp.eq.s32.totalorder %v236, 1
    %vm238 = vcmp.gt.s32.totalorder %v84, 2
    %v239 = vsel %vm238, 1, 0
    %240 = vset.pattern.permute.xlu0 0
    %241 = vperm.xlu0 %240, %v239
    %v242 = vpop.permute.xlu0 %241
    %vm243 = vcmp.eq.s32.totalorder %v242, 1
    %vm244 = vcmp.gt.s32.totalorder %v84, 3
    %v245 = vsel %vm244, 1, 0
    %246 = vset.pattern.permute.xlu0 0
    %247 = vperm.xlu0 %246, %v245
    %v248 = vpop.permute.xlu0 %247
    %vm249 = vcmp.eq.s32.totalorder %v248, 1
    %vm250 = vcmp.gt.s32.totalorder %v84, 4
    %v251 = vsel %vm250, 1, 0
    %252 = vset.pattern.permute.xlu0 0
    %253 = vperm.xlu0 %252, %v251
    %v254 = vpop.permute.xlu0 %253
    %vm255 = vcmp.eq.s32.totalorder %v254, 1
    %vm256 = vcmp.gt.s32.totalorder %v84, 5
    %v257 = vsel %vm256, 1, 0
    %258 = vset.pattern.permute.xlu0 0
    %259 = vperm.xlu0 %258, %v257
    %v260 = vpop.permute.xlu0 %259
    %vm261 = vcmp.eq.s32.totalorder %v260, 1
    %vm262 = vcmp.gt.s32.totalorder %v84, 6
    %v263 = vsel %vm262, 1, 0
    %264 = vset.pattern.permute.xlu0 0
    %265 = vperm.xlu0 %264, %v263
    %v266 = vpop.permute.xlu0 %265
    %vm267 = vcmp.eq.s32.totalorder %v266, 1
    %vm268 = vcmp.gt.s32.totalorder %v84, 7
    %v269 = vsel %vm268, 1, 0
    %270 = vset.pattern.permute.xlu0 0
    %271 = vperm.xlu0 %270, %v269
    %v272 = vpop.permute.xlu0 %271
    %vm273 = vcmp.eq.s32.totalorder %v272, 1
    %v274 = vld [vmem:[%s0] sm:$0xff]
    %276 = vset.pattern.permute.xlu0 0
    %277 = vperm.xlu0 %276, %v274
    %v278 = vpop.permute.xlu0 %277
    %v281 = vlaneseq
    %v282 = vshrl.u32 %v281, 7
    %v283 = vsub.s32 0, %v282
    %v284 = vrot.slane %v85, %v283
    %v285 = vlaneseq
    %v286 = vshrl.u32 %v285, 7
    %v287 = vsub.s32 1, %v286
    %v288 = vrot.slane %v85, %v287
    %v289 = vlaneseq
    %v290 = vshrl.u32 %v289, 7
    %v291 = vsub.s32 2, %v290
    %v292 = vrot.slane %v85, %v291
    %v293 = vlaneseq
    %v294 = vshrl.u32 %v293, 7
    %v295 = vsub.s32 3, %v294
    %v296 = vrot.slane %v85, %v295
    %v301 = vmul.f32 %v278, %v284
    %v302 = vmul.f32 %v278, %v288
    %v303 = vmul.f32 %v278, %v292
    %v304 = vmul.f32 %v278, %v296
    %v305 = vadd.f32 %v301, %v187
    %v306 = vadd.f32 %v302, %v191
    %v307 = vadd.f32 %v303, %v195
    %v308 = vadd.f32 %v304, %v199
    %s309 = scalar_lea.vmem %s0, 8
    %v310 = vld [vmem:[%s309] sm:$0xff]
    %312 = vset.pattern.permute.xlu0 0
    %313 = vperm.xlu0 %312, %v310
    %v314 = vpop.permute.xlu0 %313
    %v316 = vmul.f32 %v314, %v284
    %v317 = vmul.f32 %v314, %v288
    %v318 = vmul.f32 %v314, %v292
    %v319 = vmul.f32 %v314, %v296
    %v320 = vadd.f32 %v316, %v187
    %v321 = vadd.f32 %v317, %v191
    %v322 = vadd.f32 %v318, %v195
    %v323 = vadd.f32 %v319, %v199
    %s324 = scalar_lea.vmem %s0, 16
    %v325 = vld [vmem:[%s324] sm:$0xff]
    %327 = vset.pattern.permute.xlu0 0
    %328 = vperm.xlu0 %327, %v325
    %v329 = vpop.permute.xlu0 %328
    %v331 = vmul.f32 %v329, %v284
    %v332 = vmul.f32 %v329, %v288
    %v333 = vmul.f32 %v329, %v292
    %v334 = vmul.f32 %v329, %v296
    %v335 = vadd.f32 %v331, %v187
    %v336 = vadd.f32 %v332, %v191
    %v337 = vadd.f32 %v333, %v195
    %v338 = vadd.f32 %v334, %v199
    %s339 = scalar_lea.vmem %s0, 24
    %v340 = vld [vmem:[%s339] sm:$0xff]
    %342 = vset.pattern.permute.xlu0 0
    %343 = vperm.xlu0 %342, %v340
    %v344 = vpop.permute.xlu0 %343
    %v346 = vmul.f32 %v344, %v284
    %v347 = vmul.f32 %v344, %v288
    %v348 = vmul.f32 %v344, %v292
    %v349 = vmul.f32 %v344, %v296
    %v350 = vadd.f32 %v346, %v187
    %v351 = vadd.f32 %v347, %v191
    %v352 = vadd.f32 %v348, %v195
    %v353 = vadd.f32 %v349, %v199
    %s354 = scalar_lea.vmem %s0, 32
    %v355 = vld [vmem:[%s354] sm:$0xff]
    %357 = vset.pattern.permute.xlu0 0
    %358 = vperm.xlu0 %357, %v355
    %v359 = vpop.permute.xlu0 %358
    %v361 = vmul.f32 %v359, %v284
    %v362 = vmul.f32 %v359, %v288
    %v363 = vmul.f32 %v359, %v292
    %v364 = vmul.f32 %v359, %v296
    %v365 = vadd.f32 %v361, %v187
    %v366 = vadd.f32 %v362, %v191
    %v367 = vadd.f32 %v363, %v195
    %v368 = vadd.f32 %v364, %v199
    %s369 = scalar_lea.vmem %s0, 40
    %v370 = vld [vmem:[%s369] sm:$0xff]
    %372 = vset.pattern.permute.xlu0 0
    %373 = vperm.xlu0 %372, %v370
    %v374 = vpop.permute.xlu0 %373
    %v376 = vmul.f32 %v374, %v284
    %v377 = vmul.f32 %v374, %v288
    %v378 = vmul.f32 %v374, %v292
    %v379 = vmul.f32 %v374, %v296
    %v380 = vadd.f32 %v376, %v187
    %v381 = vadd.f32 %v377, %v191
    %v382 = vadd.f32 %v378, %v195
    %v383 = vadd.f32 %v379, %v199
    %s384 = scalar_lea.vmem %s0, 48
    %v385 = vld [vmem:[%s384] sm:$0xff]
    %387 = vset.pattern.permute.xlu0 0
    %388 = vperm.xlu0 %387, %v385
    %v389 = vpop.permute.xlu0 %388
    %v391 = vmul.f32 %v389, %v284
    %v392 = vmul.f32 %v389, %v288
    %v393 = vmul.f32 %v389, %v292
    %v394 = vmul.f32 %v389, %v296
    %v395 = vadd.f32 %v391, %v187
    %v396 = vadd.f32 %v392, %v191
    %v397 = vadd.f32 %v393, %v195
    %v398 = vadd.f32 %v394, %v199
    %s399 = scalar_lea.vmem %s0, 56
    %v400 = vld [vmem:[%s399] sm:$0xff]
    %402 = vset.pattern.permute.xlu0 0
    %403 = vperm.xlu0 %402, %v400
    %v404 = vpop.permute.xlu0 %403
    %v406 = vmul.f32 %v404, %v284
    %v407 = vmul.f32 %v404, %v288
    %v408 = vmul.f32 %v404, %v292
    %v409 = vmul.f32 %v404, %v296
    %v410 = vadd.f32 %v406, %v187
    %v411 = vadd.f32 %v407, %v191
    %v412 = vadd.f32 %v408, %v195
    %v413 = vadd.f32 %v409, %v199
    %v446 = vunpack.c.l.b16 %v150
    %v447 = vunpack.c.h.b16 %v150
    %v448 = vunpack.c.l.b16 %v151
    %v449 = vunpack.c.h.b16 %v151
    %v450 = vunpack.c.l.b16 %v152
    %v451 = vunpack.c.h.b16 %v152
    %v452 = vunpack.c.l.b16 %v153
    %v453 = vunpack.c.h.b16 %v153
    %v454 = vunpack.c.l.b16 %v154
    %v455 = vunpack.c.h.b16 %v154
    %v456 = vunpack.c.l.b16 %v155
    %v457 = vunpack.c.h.b16 %v155
    %v458 = vunpack.c.l.b16 %v156
    %v459 = vunpack.c.h.b16 %v156
    %v460 = vunpack.c.l.b16 %v157
    %v461 = vunpack.c.h.b16 %v157
    %v462 = vunpack.c.l.b16 %v158
    %v463 = vunpack.c.h.b16 %v158
    %v464 = vunpack.c.l.b16 %v159
    %v465 = vunpack.c.h.b16 %v159
    %v466 = vunpack.c.l.b16 %v160
    %v467 = vunpack.c.h.b16 %v160
    %v468 = vunpack.c.l.b16 %v161
    %v469 = vunpack.c.h.b16 %v161
    %v470 = vunpack.c.l.b16 %v162
    %v471 = vunpack.c.h.b16 %v162
    %v472 = vunpack.c.l.b16 %v163
    %v473 = vunpack.c.h.b16 %v163
    %v474 = vunpack.c.l.b16 %v164
    %v475 = vunpack.c.h.b16 %v164
    %v476 = vunpack.c.l.b16 %v165
    %v477 = vunpack.c.h.b16 %v165
    %v478 = vunpack.c.l.b16 %v166
    %v479 = vunpack.c.h.b16 %v166
    %v480 = vunpack.c.l.b16 %v167
    %v481 = vunpack.c.h.b16 %v167
    %v482 = vunpack.c.l.b16 %v168
    %v483 = vunpack.c.h.b16 %v168
    %v484 = vunpack.c.l.b16 %v169
    %v485 = vunpack.c.h.b16 %v169
    %v486 = vunpack.c.l.b16 %v170
    %v487 = vunpack.c.h.b16 %v170
    %v488 = vunpack.c.l.b16 %v171
    %v489 = vunpack.c.h.b16 %v171
    %v490 = vunpack.c.l.b16 %v172
    %v491 = vunpack.c.h.b16 %v172
    %v492 = vunpack.c.l.b16 %v173
    %v493 = vunpack.c.h.b16 %v173
    %v494 = vunpack.c.l.b16 %v174
    %v495 = vunpack.c.h.b16 %v174
    %v496 = vunpack.c.l.b16 %v175
    %v497 = vunpack.c.h.b16 %v175
    %v498 = vunpack.c.l.b16 %v176
    %v499 = vunpack.c.h.b16 %v176
    %v500 = vunpack.c.l.b16 %v177
    %v501 = vunpack.c.h.b16 %v177
    %v502 = vunpack.c.l.b16 %v178
    %v503 = vunpack.c.h.b16 %v178
    %v504 = vunpack.c.l.b16 %v179
    %v505 = vunpack.c.h.b16 %v179
    %v506 = vunpack.c.l.b16 %v180
    %v507 = vunpack.c.h.b16 %v180
    %v508 = vunpack.c.l.b16 %v181
    %v509 = vunpack.c.h.b16 %v181
    %v510 = vpack.c.b16 %v450, %v446
    %v511 = vpack.c.b16 %v451, %v447
    %v512 = vpack.c.b16 %v452, %v448
    %v513 = vpack.c.b16 %v453, %v449
    %v514 = vpack.c.b16 %v458, %v454
    %v515 = vpack.c.b16 %v459, %v455
    %v516 = vpack.c.b16 %v460, %v456
    %v517 = vpack.c.b16 %v461, %v457
    %v518 = vpack.c.b16 %v466, %v462
    %v519 = vpack.c.b16 %v467, %v463
    %v520 = vpack.c.b16 %v468, %v464
    %v521 = vpack.c.b16 %v469, %v465
    %v522 = vpack.c.b16 %v474, %v470
    %v523 = vpack.c.b16 %v475, %v471
    %v524 = vpack.c.b16 %v476, %v472
    %v525 = vpack.c.b16 %v477, %v473
    %v526 = vpack.c.b16 %v482, %v478
    %v527 = vpack.c.b16 %v483, %v479
    %v528 = vpack.c.b16 %v484, %v480
    %v529 = vpack.c.b16 %v485, %v481
    %v530 = vpack.c.b16 %v490, %v486
    %v531 = vpack.c.b16 %v491, %v487
    %v532 = vpack.c.b16 %v492, %v488
    %v533 = vpack.c.b16 %v493, %v489
    %v534 = vpack.c.b16 %v498, %v494
    %v535 = vpack.c.b16 %v499, %v495
    %v536 = vpack.c.b16 %v500, %v496
    %v537 = vpack.c.b16 %v501, %v497
    %v538 = vpack.c.b16 %v506, %v502
    %v539 = vpack.c.b16 %v507, %v503
    %v540 = vpack.c.b16 %v508, %v504
    %v541 = vpack.c.b16 %v509, %v505
    %574 = vmatprep.subr.bf16.mxu0 %v511
    %575 = vmatpush1.bf16.msra.mxu0 %v510
    %576 = vmatprep.subr.bf16.mxu0 %v515
    %577 = vmatpush1.bf16.msra.mxu0 %v514
    %578 = vmatprep.subr.bf16.mxu0 %v519
    %579 = vmatpush1.bf16.msra.mxu0 %v518
    %580 = vmatprep.subr.bf16.mxu0 %v523
    %581 = vmatpush1.bf16.msra.mxu0 %v522
    %582 = vmatprep.subr.bf16.mxu0 %v527
    %583 = vmatpush1.bf16.msra.mxu0 %v526
    %584 = vmatprep.subr.bf16.mxu0 %v531
    %585 = vmatpush1.bf16.msra.mxu0 %v530
    %586 = vmatprep.subr.bf16.mxu0 %v535
    %587 = vmatpush1.bf16.msra.mxu0 %v534
    %588 = vmatprep.subr.bf16.mxu0 %v539
    %589 = vmatpush1.bf16.msra.mxu0 %v538
    %590 = vmatprep.subr.bf16.mxu0 0
    %591 = vmatpush1.bf16.msra.mxu0 0
    %592 = vmatprep.subr.bf16.mxu0 0
    %593 = vmatpush1.bf16.msra.mxu0 0
    %594 = vmatprep.subr.bf16.mxu0 0
    %595 = vmatpush1.bf16.msra.mxu0 0
    %596 = vmatprep.subr.bf16.mxu0 0
    %597 = vmatpush1.bf16.msra.mxu0 0
    %598 = vmatprep.subr.bf16.mxu0 0
    %599 = vmatpush1.bf16.msra.mxu0 0
    %600 = vmatprep.subr.bf16.mxu0 0
    %601 = vmatpush1.bf16.msra.mxu0 0
    %602 = vmatprep.subr.bf16.mxu0 0
    %603 = vmatpush1.bf16.msra.mxu0 0
    %604 = vmatprep.subr.bf16.mxu0 0
    %605 = vmatpush1.bf16.msra.mxu0 0
    %606 = vmatprep.mubr.bf16.mxu0 0
    %607 = vmatmul.mubr.bf16.gmra.mrb[0].mxu0 0
    %v608 = vpop.f32.mrb[0].mxu0
    %v609 = vadd.f32 0.0, %v608
    %v610 = vpop.f32.mrb[0].mxu0
    %v611 = vadd.f32 0.0, %v610
    %v612 = vpop.f32.mrb[0].mxu0
    %v613 = vpop.f32.mrb[0].mxu0
    %614 = vdwg.mxu0
    %615 = vmatprep.subr.bf16.mxu0 %v513
    %616 = vmatpush1.bf16.msra.mxu0 %v512
    %617 = vmatprep.subr.bf16.mxu0 %v517
    %618 = vmatpush1.bf16.msra.mxu0 %v516
    %619 = vmatprep.subr.bf16.mxu0 %v521
    %620 = vmatpush1.bf16.msra.mxu0 %v520
    %621 = vmatprep.subr.bf16.mxu0 %v525
    %622 = vmatpush1.bf16.msra.mxu0 %v524
    %623 = vmatprep.subr.bf16.mxu0 %v529
    %624 = vmatpush1.bf16.msra.mxu0 %v528
    %625 = vmatprep.subr.bf16.mxu0 %v533
    %626 = vmatpush1.bf16.msra.mxu0 %v532
    %627 = vmatprep.subr.bf16.mxu0 %v537
    %628 = vmatpush1.bf16.msra.mxu0 %v536
    %629 = vmatprep.subr.bf16.mxu0 %v541
    %630 = vmatpush1.bf16.msra.mxu0 %v540
    %631 = vmatprep.subr.bf16.mxu0 0
    %632 = vmatpush1.bf16.msra.mxu0 0
    %633 = vmatprep.subr.bf16.mxu0 0
    %634 = vmatpush1.bf16.msra.mxu0 0
    %635 = vmatprep.subr.bf16.mxu0 0
    %636 = vmatpush1.bf16.msra.mxu0 0
    %637 = vmatprep.subr.bf16.mxu0 0
    %638 = vmatpush1.bf16.msra.mxu0 0
    %639 = vmatprep.subr.bf16.mxu0 0
    %640 = vmatpush1.bf16.msra.mxu0 0
    %641 = vmatprep.subr.bf16.mxu0 0
    %642 = vmatpush1.bf16.msra.mxu0 0
    %643 = vmatprep.subr.bf16.mxu0 0
    %644 = vmatpush1.bf16.msra.mxu0 0
    %645 = vmatprep.subr.bf16.mxu0 0
    %646 = vmatpush1.bf16.msra.mxu0 0
    %647 = vmatprep.mubr.bf16.mxu0 0
    %648 = vmatmul.mubr.bf16.gmra.mrb[0].mxu0 0
    %v649 = vpop.f32.mrb[0].mxu0
    %v650 = vadd.f32 0.0, %v649
    %v651 = vpop.f32.mrb[0].mxu0
    %v652 = vadd.f32 0.0, %v651
    %v653 = vpop.f32.mrb[0].mxu0
    %v654 = vpop.f32.mrb[0].mxu0
    %655 = vdwg.mxu0
    %v656 = vadd.f32 %v209, %v609
    %v657 = vadd.f32 %v213, %v611
    %v658 = vadd.f32 %v217, %v650
    %v659 = vadd.f32 %v221, %v652
    %v692 = vunpack.c.l.b16 %v86
    %v693 = vunpack.c.h.b16 %v86
    %v694 = vunpack.c.l.b16 %v87
    %v695 = vunpack.c.h.b16 %v87
    %v696 = vunpack.c.l.b16 %v88
    %v697 = vunpack.c.h.b16 %v88
    %v698 = vunpack.c.l.b16 %v89
    %v699 = vunpack.c.h.b16 %v89
    %v700 = vunpack.c.l.b16 %v90
    %v701 = vunpack.c.h.b16 %v90
    %v702 = vunpack.c.l.b16 %v91
    %v703 = vunpack.c.h.b16 %v91
    %v704 = vunpack.c.l.b16 %v92
    %v705 = vunpack.c.h.b16 %v92
    %v706 = vunpack.c.l.b16 %v93
    %v707 = vunpack.c.h.b16 %v93
    %v708 = vunpack.c.l.b16 %v94
    %v709 = vunpack.c.h.b16 %v94
    %v710 = vunpack.c.l.b16 %v95
    %v711 = vunpack.c.h.b16 %v95
    %v712 = vunpack.c.l.b16 %v96
    %v713 = vunpack.c.h.b16 %v96
    %v714 = vunpack.c.l.b16 %v97
    %v715 = vunpack.c.h.b16 %v97
    %v716 = vunpack.c.l.b16 %v98
    %v717 = vunpack.c.h.b16 %v98
    %v718 = vunpack.c.l.b16 %v99
    %v719 = vunpack.c.h.b16 %v99
    %v720 = vunpack.c.l.b16 %v100
    %v721 = vunpack.c.h.b16 %v100
    %v722 = vunpack.c.l.b16 %v101
    %v723 = vunpack.c.h.b16 %v101
    %v724 = vunpack.c.l.b16 %v102
    %v725 = vunpack.c.h.b16 %v102
    %v726 = vunpack.c.l.b16 %v103
    %v727 = vunpack.c.h.b16 %v103
    %v728 = vunpack.c.l.b16 %v104
    %v729 = vunpack.c.h.b16 %v104
    %v730 = vunpack.c.l.b16 %v105
    %v731 = vunpack.c.h.b16 %v105
    %v732 = vunpack.c.l.b16 %v106
    %v733 = vunpack.c.h.b16 %v106
    %v734 = vunpack.c.l.b16 %v107
    %v735 = vunpack.c.h.b16 %v107
    %v736 = vunpack.c.l.b16 %v108
    %v737 = vunpack.c.h.b16 %v108
    %v738 = vunpack.c.l.b16 %v109
    %v739 = vunpack.c.h.b16 %v109
    %v740 = vunpack.c.l.b16 %v110
    %v741 = vunpack.c.h.b16 %v110
    %v742 = vunpack.c.l.b16 %v111
    %v743 = vunpack.c.h.b16 %v111
    %v744 = vunpack.c.l.b16 %v112
    %v745 = vunpack.c.h.b16 %v112
    %v746 = vunpack.c.l.b16 %v113
    %v747 = vunpack.c.h.b16 %v113
    %v748 = vunpack.c.l.b16 %v114
    %v749 = vunpack.c.h.b16 %v114
    %v750 = vunpack.c.l.b16 %v115
    %v751 = vunpack.c.h.b16 %v115
    %v752 = vunpack.c.l.b16 %v116
    %v753 = vunpack.c.h.b16 %v116
    %v754 = vunpack.c.l.b16 %v117
    %v755 = vunpack.c.h.b16 %v117
    %v756 = vpack.c.b16 %v696, %v692
    %v757 = vpack.c.b16 %v697, %v693
    %v758 = vpack.c.b16 %v698, %v694
    %v759 = vpack.c.b16 %v699, %v695
    %v760 = vpack.c.b16 %v704, %v700
    %v761 = vpack.c.b16 %v705, %v701
    %v762 = vpack.c.b16 %v706, %v702
    %v763 = vpack.c.b16 %v707, %v703
    %v764 = vpack.c.b16 %v712, %v708
    %v765 = vpack.c.b16 %v713, %v709
    %v766 = vpack.c.b16 %v714, %v710
    %v767 = vpack.c.b16 %v715, %v711
    %v768 = vpack.c.b16 %v720, %v716
    %v769 = vpack.c.b16 %v721, %v717
    %v770 = vpack.c.b16 %v722, %v718
    %v771 = vpack.c.b16 %v723, %v719
    %v772 = vpack.c.b16 %v728, %v724
    %v773 = vpack.c.b16 %v729, %v725
    %v774 = vpack.c.b16 %v730, %v726
    %v775 = vpack.c.b16 %v731, %v727
    %v776 = vpack.c.b16 %v736, %v732
    %v777 = vpack.c.b16 %v737, %v733
    %v778 = vpack.c.b16 %v738, %v734
    %v779 = vpack.c.b16 %v739, %v735
    %v780 = vpack.c.b16 %v744, %v740
    %v781 = vpack.c.b16 %v745, %v741
    %v782 = vpack.c.b16 %v746, %v742
    %v783 = vpack.c.b16 %v747, %v743
    %v784 = vpack.c.b16 %v752, %v748
    %v785 = vpack.c.b16 %v753, %v749
    %v786 = vpack.c.b16 %v754, %v750
    %v787 = vpack.c.b16 %v755, %v751
    %820 = vmatprep.subr.bf16.mxu0 %v757
    %821 = vmatpush1.bf16.msra.mxu0 %v756
    %822 = vmatprep.subr.bf16.mxu0 %v761
    %823 = vmatpush1.bf16.msra.mxu0 %v760
    %824 = vmatprep.subr.bf16.mxu0 %v765
    %825 = vmatpush1.bf16.msra.mxu0 %v764
    %826 = vmatprep.subr.bf16.mxu0 %v769
    %827 = vmatpush1.bf16.msra.mxu0 %v768
    %828 = vmatprep.subr.bf16.mxu0 %v773
    %829 = vmatpush1.bf16.msra.mxu0 %v772
    %830 = vmatprep.subr.bf16.mxu0 %v777
    %831 = vmatpush1.bf16.msra.mxu0 %v776
    %832 = vmatprep.subr.bf16.mxu0 %v781
    %833 = vmatpush1.bf16.msra.mxu0 %v780
    %834 = vmatprep.subr.bf16.mxu0 %v785
    %835 = vmatpush1.bf16.msra.mxu0 %v784
    %836 = vmatprep.subr.bf16.mxu0 0
    %837 = vmatpush1.bf16.msra.mxu0 0
    %838 = vmatprep.subr.bf16.mxu0 0
    %839 = vmatpush1.bf16.msra.mxu0 0
    %840 = vmatprep.subr.bf16.mxu0 0
    %841 = vmatpush1.bf16.msra.mxu0 0
    %842 = vmatprep.subr.bf16.mxu0 0
    %843 = vmatpush1.bf16.msra.mxu0 0
    %844 = vmatprep.subr.bf16.mxu0 0
    %845 = vmatpush1.bf16.msra.mxu0 0
    %846 = vmatprep.subr.bf16.mxu0 0
    %847 = vmatpush1.bf16.msra.mxu0 0
    %848 = vmatprep.subr.bf16.mxu0 0
    %849 = vmatpush1.bf16.msra.mxu0 0
    %850 = vmatprep.subr.bf16.mxu0 0
    %851 = vmatpush1.bf16.msra.mxu0 0
    %852 = vmatprep.mubr.bf16.mxu0 0
    %853 = vmatmul.mubr.bf16.gmra.mrb[0].mxu0 0
    %v854 = vpop.f32.mrb[0].mxu0
    %v855 = vadd.f32 0.0, %v854
    %v856 = vpop.f32.mrb[0].mxu0
    %v857 = vadd.f32 0.0, %v856
    %v858 = vpop.f32.mrb[0].mxu0
    %v859 = vpop.f32.mrb[0].mxu0
    %860 = vdwg.mxu0
    %861 = vmatprep.subr.bf16.mxu0 %v759
    %862 = vmatpush1.bf16.msra.mxu0 %v758
    %863 = vmatprep.subr.bf16.mxu0 %v763
    %864 = vmatpush1.bf16.msra.mxu0 %v762
    %865 = vmatprep.subr.bf16.mxu0 %v767
    %866 = vmatpush1.bf16.msra.mxu0 %v766
    %867 = vmatprep.subr.bf16.mxu0 %v771
    %868 = vmatpush1.bf16.msra.mxu0 %v770
    %869 = vmatprep.subr.bf16.mxu0 %v775
    %870 = vmatpush1.bf16.msra.mxu0 %v774
    %871 = vmatprep.subr.bf16.mxu0 %v779
    %872 = vmatpush1.bf16.msra.mxu0 %v778
    %873 = vmatprep.subr.bf16.mxu0 %v783
    %874 = vmatpush1.bf16.msra.mxu0 %v782
    %875 = vmatprep.subr.bf16.mxu0 %v787
    %876 = vmatpush1.bf16.msra.mxu0 %v786
    %877 = vmatprep.subr.bf16.mxu0 0
    %878 = vmatpush1.bf16.msra.mxu0 0
    %879 = vmatprep.subr.bf16.mxu0 0
    %880 = vmatpush1.bf16.msra.mxu0 0
    %881 = vmatprep.subr.bf16.mxu0 0
    %882 = vmatpush1.bf16.msra.mxu0 0
    %883 = vmatprep.subr.bf16.mxu0 0
    %884 = vmatpush1.bf16.msra.mxu0 0
    %885 = vmatprep.subr.bf16.mxu0 0
    %886 = vmatpush1.bf16.msra.mxu0 0
    %887 = vmatprep.subr.bf16.mxu0 0
    %888 = vmatpush1.bf16.msra.mxu0 0
    %889 = vmatprep.subr.bf16.mxu0 0
    %890 = vmatpush1.bf16.msra.mxu0 0
    %891 = vmatprep.subr.bf16.mxu0 0
    %892 = vmatpush1.bf16.msra.mxu0 0
    %893 = vmatprep.mubr.bf16.mxu0 0
    %894 = vmatmul.mubr.bf16.gmra.mrb[0].mxu0 0
    %v895 = vpop.f32.mrb[0].mxu0
    %v896 = vadd.f32 0.0, %v895
    %v897 = vpop.f32.mrb[0].mxu0
    %v898 = vadd.f32 0.0, %v897
    %v899 = vpop.f32.mrb[0].mxu0
    %v900 = vpop.f32.mrb[0].mxu0
    %901 = vdwg.mxu0
    %v902 = vadd.f32 %v305, %v855
    %v903 = vadd.f32 %v306, %v857
    %v904 = vadd.f32 %v307, %v896
    %v905 = vadd.f32 %v308, %v898
    %v906 = vxor.u32 %v902, 2147483648
    %v907 = vxor.u32 %v903, 2147483648
    %v908 = vxor.u32 %v904, 2147483648
    %v909 = vmul.f32 %v906, 1.442695
    %v910 = vpow.pop %v909
    %v911 = vmul.f32 %v907, 1.442695
    %v912 = vpow.pop %v911
    %v913 = vmul.f32 %v908, 1.442695
    %v914 = vpow.pop %v913
    %v915 = vadd.f32 %v910, 1.0
    %v916 = vadd.f32 %v912, 1.0
    %v917 = vadd.f32 %v914, 1.0
    %v918 = vrcp.pop %v915
    %v919 = vmul.f32 1.0, %v918
    %v920 = vrcp.pop %v916
    %v921 = vmul.f32 1.0, %v920
    %v922 = vrcp.pop %v917
    %v923 = vmul.f32 1.0, %v922
    %v924 = vtanh.pop %v905
    %v925 = vmul.f32 %v921, 0.0
    %v926 = vmul.f32 %v919, %v924
    %v927 = vadd.f32 %v925, %v926
    %v928 = vtanh.pop %v927
    %v929 = vmul.f32 %v923, %v928
    %v930 = vsel %vm231, %v927, 0.0
    %v931 = vsel %vm231, %v929, 0.0
    %v932 = vpack.c.bf16 %v929, %v929
    %v965 = vunpack.c.l.b16 %v118
    %v966 = vunpack.c.h.b16 %v118
    %v967 = vunpack.c.l.b16 %v119
    %v968 = vunpack.c.h.b16 %v119
    %v969 = vunpack.c.l.b16 %v120
    %v970 = vunpack.c.h.b16 %v120
    %v971 = vunpack.c.l.b16 %v121
    %v972 = vunpack.c.h.b16 %v121
    %v973 = vunpack.c.l.b16 %v122
    %v974 = vunpack.c.h.b16 %v122
    %v975 = vunpack.c.l.b16 %v123
    %v976 = vunpack.c.h.b16 %v123
    %v977 = vunpack.c.l.b16 %v124
    %v978 = vunpack.c.h.b16 %v124
    %v979 = vunpack.c.l.b16 %v125
    %v980 = vunpack.c.h.b16 %v125
    %v981 = vunpack.c.l.b16 %v126
    %v982 = vunpack.c.h.b16 %v126
    %v983 = vunpack.c.l.b16 %v127
    %v984 = vunpack.c.h.b16 %v127
    %v985 = vunpack.c.l.b16 %v128
    %v986 = vunpack.c.h.b16 %v128
    %v987 = vunpack.c.l.b16 %v129
    %v988 = vunpack.c.h.b16 %v129
    %v989 = vunpack.c.l.b16 %v130
    %v990 = vunpack.c.h.b16 %v130
    %v991 = vunpack.c.l.b16 %v131
    %v992 = vunpack.c.h.b16 %v131
    %v993 = vunpack.c.l.b16 %v132
    %v994 = vunpack.c.h.b16 %v132
    %v995 = vunpack.c.l.b16 %v133
    %v996 = vunpack.c.h.b16 %v133
    %v997 = vunpack.c.l.b16 %v134
    %v998 = vunpack.c.h.b16 %v134
    %v999 = vunpack.c.l.b16 %v135
    %v1000 = vunpack.c.h.b16 %v135
    %v1001 = vunpack.c.l.b16 %v136
    %v1002 = vunpack.c.h.b16 %v136
    %v1003 = vunpack.c.l.b16 %v137
    %v1004 = vunpack.c.h.b16 %v137
    %v1005 = vunpack.c.l.b16 %v138
    %v1006 = vunpack.c.h.b16 %v138
    %v1007 = vunpack.c.l.b16 %v139
    %v1008 = vunpack.c.h.b16 %v139
    %v1009 = vunpack.c.l.b16 %v140
    %v1010 = vunpack.c.h.b16 %v140
    %v1011 = vunpack.c.l.b16 %v141
    %v1012 = vunpack.c.h.b16 %v141
    %v1013 = vunpack.c.l.b16 %v142
    %v1014 = vunpack.c.h.b16 %v142
    %v1015 = vunpack.c.l.b16 %v143
    %v1016 = vunpack.c.h.b16 %v143
    %v1017 = vunpack.c.l.b16 %v144
    %v1018 = vunpack.c.h.b16 %v144
    %v1019 = vunpack.c.l.b16 %v145
    %v1020 = vunpack.c.h.b16 %v145
    %v1021 = vunpack.c.l.b16 %v146
    %v1022 = vunpack.c.h.b16 %v146
    %v1023 = vunpack.c.l.b16 %v147
    %v1024 = vunpack.c.h.b16 %v147
    %v1025 = vunpack.c.l.b16 %v148
    %v1026 = vunpack.c.h.b16 %v148
    %v1027 = vunpack.c.l.b16 %v149
    %v1028 = vunpack.c.h.b16 %v149
    %v1029 = vpack.c.b16 %v969, %v965
    %v1030 = vpack.c.b16 %v970, %v966
    %v1031 = vpack.c.b16 %v971, %v967
    %v1032 = vpack.c.b16 %v972, %v968
    %v1033 = vpack.c.b16 %v977, %v973
    %v1034 = vpack.c.b16 %v978, %v974
    %v1035 = vpack.c.b16 %v979, %v975
    %v1036 = vpack.c.b16 %v980, %v976
    %v1037 = vpack.c.b16 %v985, %v981
    %v1038 = vpack.c.b16 %v986, %v982
    %v1039 = vpack.c.b16 %v987, %v983
    %v1040 = vpack.c.b16 %v988, %v984
    %v1041 = vpack.c.b16 %v993, %v989
    %v1042 = vpack.c.b16 %v994, %v990
    %v1043 = vpack.c.b16 %v995, %v991
    %v1044 = vpack.c.b16 %v996, %v992
    %v1045 = vpack.c.b16 %v1001, %v997
    %v1046 = vpack.c.b16 %v1002, %v998
    %v1047 = vpack.c.b16 %v1003, %v999
    %v1048 = vpack.c.b16 %v1004, %v1000
    %v1049 = vpack.c.b16 %v1009, %v1005
    %v1050 = vpack.c.b16 %v1010, %v1006
    %v1051 = vpack.c.b16 %v1011, %v1007
    %v1052 = vpack.c.b16 %v1012, %v1008
    %v1053 = vpack.c.b16 %v1017, %v1013
    %v1054 = vpack.c.b16 %v1018, %v1014
    %v1055 = vpack.c.b16 %v1019, %v1015
    %v1056 = vpack.c.b16 %v1020, %v1016
    %v1057 = vpack.c.b16 %v1025, %v1021
    %v1058 = vpack.c.b16 %v1026, %v1022
    %v1059 = vpack.c.b16 %v1027, %v1023
    %v1060 = vpack.c.b16 %v1028, %v1024
    %1093 = vmatprep.subr.bf16.mxu0 %v1030
    %1094 = vmatpush1.bf16.msra.mxu0 %v1029
    %1095 = vmatprep.subr.bf16.mxu0 %v1034
    %1096 = vmatpush1.bf16.msra.mxu0 %v1033
    %1097 = vmatprep.subr.bf16.mxu0 %v1038
    %1098 = vmatpush1.bf16.msra.mxu0 %v1037
    %1099 = vmatprep.subr.bf16.mxu0 %v1042
    %1100 = vmatpush1.bf16.msra.mxu0 %v1041
    %1101 = vmatprep.subr.bf16.mxu0 %v1046
    %1102 = vmatpush1.bf16.msra.mxu0 %v1045
    %1103 = vmatprep.subr.bf16.mxu0 %v1050
    %1104 = vmatpush1.bf16.msra.mxu0 %v1049
    %1105 = vmatprep.subr.bf16.mxu0 %v1054
    %1106 = vmatpush1.bf16.msra.mxu0 %v1053
    %1107 = vmatprep.subr.bf16.mxu0 %v1058
    %1108 = vmatpush1.bf16.msra.mxu0 %v1057
    %1109 = vmatprep.subr.bf16.mxu0 0
    %1110 = vmatpush1.bf16.msra.mxu0 0
    %1111 = vmatprep.subr.bf16.mxu0 0
    %1112 = vmatpush1.bf16.msra.mxu0 0
    %1113 = vmatprep.subr.bf16.mxu0 0
    %1114 = vmatpush1.bf16.msra.mxu0 0
    %1115 = vmatprep.subr.bf16.mxu0 0
    %1116 = vmatpush1.bf16.msra.mxu0 0
    %1117 = vmatprep.subr.bf16.mxu0 0
    %1118 = vmatpush1.bf16.msra.mxu0 0
    %1119 = vmatprep.subr.bf16.mxu0 0
    %1120 = vmatpush1.bf16.msra.mxu0 0
    %1121 = vmatprep.subr.bf16.mxu0 0
    %1122 = vmatpush1.bf16.msra.mxu0 0
    %1123 = vmatprep.subr.bf16.mxu0 0
    %1124 = vmatpush1.bf16.msra.mxu0 0
    %1125 = vmatprep.mubr.bf16.mxu0 0
    %1126 = vmatmul.mubr.bf16.gmra.mrb[0].mxu0 %v932
    %v1127 = vpop.f32.mrb[0].mxu0
    %v1128 = vadd.f32 0.0, %v1127
    %v1129 = vpop.f32.mrb[0].mxu0
    %v1130 = vadd.f32 0.0, %v1129
    %v1131 = vpop.f32.mrb[0].mxu0
    %v1132 = vpop.f32.mrb[0].mxu0
    %1133 = vdwg.mxu0
    %1134 = vmatprep.subr.bf16.mxu0 %v1032
    %1135 = vmatpush1.bf16.msra.mxu0 %v1031
    %1136 = vmatprep.subr.bf16.mxu0 %v1036
    %1137 = vmatpush1.bf16.msra.mxu0 %v1035
    %1138 = vmatprep.subr.bf16.mxu0 %v1040
    %1139 = vmatpush1.bf16.msra.mxu0 %v1039
    %1140 = vmatprep.subr.bf16.mxu0 %v1044
    %1141 = vmatpush1.bf16.msra.mxu0 %v1043
    %1142 = vmatprep.subr.bf16.mxu0 %v1048
    %1143 = vmatpush1.bf16.msra.mxu0 %v1047
    %1144 = vmatprep.subr.bf16.mxu0 %v1052
    %1145 = vmatpush1.bf16.msra.mxu0 %v1051
    %1146 = vmatprep.subr.bf16.mxu0 %v1056
    %1147 = vmatpush1.bf16.msra.mxu0 %v1055
    %1148 = vmatprep.subr.bf16.mxu0 %v1060
    %1149 = vmatpush1.bf16.msra.mxu0 %v1059
    %1150 = vmatprep.subr.bf16.mxu0 0
    %1151 = vmatpush1.bf16.msra.mxu0 0
    %1152 = vmatprep.subr.bf16.mxu0 0
    %1153 = vmatpush1.bf16.msra.mxu0 0
    %1154 = vmatprep.subr.bf16.mxu0 0
    %1155 = vmatpush1.bf16.msra.mxu0 0
    %1156 = vmatprep.subr.bf16.mxu0 0
    %1157 = vmatpush1.bf16.msra.mxu0 0
    %1158 = vmatprep.subr.bf16.mxu0 0
    %1159 = vmatpush1.bf16.msra.mxu0 0
    %1160 = vmatprep.subr.bf16.mxu0 0
    %1161 = vmatpush1.bf16.msra.mxu0 0
    %1162 = vmatprep.subr.bf16.mxu0 0
    %1163 = vmatpush1.bf16.msra.mxu0 0
    %1164 = vmatprep.subr.bf16.mxu0 0
    %1165 = vmatpush1.bf16.msra.mxu0 0
    %1166 = vmatprep.mubr.bf16.mxu0 0
    %1167 = vmatmul.mubr.bf16.gmra.mrb[0].mxu0 %v932
    %v1168 = vpop.f32.mrb[0].mxu0
    %v1169 = vadd.f32 0.0, %v1168
    %v1170 = vpop.f32.mrb[0].mxu0
    %v1171 = vadd.f32 0.0, %v1170
    %v1172 = vpop.f32.mrb[0].mxu0
    %v1173 = vpop.f32.mrb[0].mxu0
    %1174 = vdwg.mxu0
    %v1175 = vadd.f32 %v656, %v1128
    %v1176 = vadd.f32 %v657, %v1130
    %v1177 = vadd.f32 %v658, %v1169
    %v1178 = vadd.f32 %v659, %v1171
    %v1179 = vxor.u32 %v1175, 2147483648
    %v1180 = vxor.u32 %v1176, 2147483648
    %v1181 = vxor.u32 %v1177, 2147483648
    %v1182 = vmul.f32 %v1179, 1.442695
    %v1183 = vpow.pop %v1182
    %v1184 = vmul.f32 %v1180, 1.442695
    %v1185 = vpow.pop %v1184
    %v1186 = vmul.f32 %v1181, 1.442695
    %v1187 = vpow.pop %v1186
    %v1188 = vadd.f32 %v1183, 1.0
    %v1189 = vadd.f32 %v1185, 1.0
    %v1190 = vadd.f32 %v1187, 1.0
    %v1191 = vrcp.pop %v1188
    %v1192 = vmul.f32 1.0, %v1191
    %v1193 = vrcp.pop %v1189
    %v1194 = vmul.f32 1.0, %v1193
    %v1195 = vrcp.pop %v1190
    %v1196 = vmul.f32 1.0, %v1195
    %v1197 = vtanh.pop %v1178
    %v1198 = vmul.f32 %v1194, 0.0
    %v1199 = vmul.f32 %v1192, %v1197
    %v1200 = vadd.f32 %v1198, %v1199
    %v1201 = vtanh.pop %v1200
    %v1202 = vmul.f32 %v1196, %v1201
    %v1203 = vsel %vm231, %v1200, 0.0
    %v1204 = vsel %vm231, %v1202, 0.0
    %v1205 = vpack.c.bf16 %v1204, %v1204
    %1206 = vmatprep.subr.bf16.mxu0 %v511
    %1207 = vmatpush1.bf16.msra.mxu0 %v510
    %1208 = vmatprep.subr.bf16.mxu0 %v515
    %1209 = vmatpush1.bf16.msra.mxu0 %v514
    %1210 = vmatprep.subr.bf16.mxu0 %v519
    %1211 = vmatpush1.bf16.msra.mxu0 %v518
    %1212 = vmatprep.subr.bf16.mxu0 %v523
    %1213 = vmatpush1.bf16.msra.mxu0 %v522
    %1214 = vmatprep.subr.bf16.mxu0 %v527
    %1215 = vmatpush1.bf16.msra.mxu0 %v526
    %1216 = vmatprep.subr.bf16.mxu0 %v531
    %1217 = vmatpush1.bf16.msra.mxu0 %v530
    %1218 = vmatprep.subr.bf16.mxu0 %v535
    %1219 = vmatpush1.bf16.msra.mxu0 %v534
    %1220 = vmatprep.subr.bf16.mxu0 %v539
    %1221 = vmatpush1.bf16.msra.mxu0 %v538
    %1222 = vmatprep.subr.bf16.mxu0 0
    %1223 = vmatpush1.bf16.msra.mxu0 0
    %1224 = vmatprep.subr.bf16.mxu0 0
    %1225 = vmatpush1.bf16.msra.mxu0 0
    %1226 = vmatprep.subr.bf16.mxu0 0
    %1227 = vmatpush1.bf16.msra.mxu0 0
    %1228 = vmatprep.subr.bf16.mxu0 0
    %1229 = vmatpush1.bf16.msra.mxu0 0
    %1230 = vmatprep.subr.bf16.mxu0 0
    %1231 = vmatpush1.bf16.msra.mxu0 0
    %1232 = vmatprep.subr.bf16.mxu0 0
    %1233 = vmatpush1.bf16.msra.mxu0 0
    %1234 = vmatprep.subr.bf16.mxu0 0
    %1235 = vmatpush1.bf16.msra.mxu0 0
    %1236 = vmatprep.subr.bf16.mxu0 0
    %1237 = vmatpush1.bf16.msra.mxu0 0
    %1238 = vmatprep.mubr.bf16.mxu0 0
    %1239 = vmatmul.mubr.bf16.gmra.mrb[0].mxu0 %v1205
    %v1240 = vpop.f32.mrb[0].mxu0
    %v1241 = vadd.f32 0.0, %v1240
    %v1242 = vpop.f32.mrb[0].mxu0
    %v1243 = vadd.f32 0.0, %v1242
    %v1244 = vpop.f32.mrb[0].mxu0
    %v1245 = vpop.f32.mrb[0].mxu0
    %1246 = vdwg.mxu0
    %1247 = vmatprep.subr.bf16.mxu0 %v513
    %1248 = vmatpush1.bf16.msra.mxu0 %v512
    %1249 = vmatprep.subr.bf16.mxu0 %v517
    %1250 = vmatpush1.bf16.msra.mxu0 %v516
    %1251 = vmatprep.subr.bf16.mxu0 %v521
    %1252 = vmatpush1.bf16.msra.mxu0 %v520
    %1253 = vmatprep.subr.bf16.mxu0 %v525
    %1254 = vmatpush1.bf16.msra.mxu0 %v524
    %1255 = vmatprep.subr.bf16.mxu0 %v529
    %1256 = vmatpush1.bf16.msra.mxu0 %v528
    %1257 = vmatprep.subr.bf16.mxu0 %v533
    %1258 = vmatpush1.bf16.msra.mxu0 %v532
    %1259 = vmatprep.subr.bf16.mxu0 %v537
    %1260 = vmatpush1.bf16.msra.mxu0 %v536
    %1261 = vmatprep.subr.bf16.mxu0 %v541
    %1262 = vmatpush1.bf16.msra.mxu0 %v540
    %1263 = vmatprep.subr.bf16.mxu0 0
    %1264 = vmatpush1.bf16.msra.mxu0 0
    %1265 = vmatprep.subr.bf16.mxu0 0
    %1266 = vmatpush1.bf16.msra.mxu0 0
    %1267 = vmatprep.subr.bf16.mxu0 0
    %1268 = vmatpush1.bf16.msra.mxu0 0
    %1269 = vmatprep.subr.bf16.mxu0 0
    %1270 = vmatpush1.bf16.msra.mxu0 0
    %1271 = vmatprep.subr.bf16.mxu0 0
    %1272 = vmatpush1.bf16.msra.mxu0 0
    %1273 = vmatprep.subr.bf16.mxu0 0
    %1274 = vmatpush1.bf16.msra.mxu0 0
    %1275 = vmatprep.subr.bf16.mxu0 0
    %1276 = vmatpush1.bf16.msra.mxu0 0
    %1277 = vmatprep.subr.bf16.mxu0 0
    %1278 = vmatpush1.bf16.msra.mxu0 0
    %1279 = vmatprep.mubr.bf16.mxu0 0
    %1280 = vmatmul.mubr.bf16.gmra.mrb[0].mxu0 %v1205
    %v1281 = vpop.f32.mrb[0].mxu0
    %v1282 = vadd.f32 0.0, %v1281
    %v1283 = vpop.f32.mrb[0].mxu0
    %v1284 = vadd.f32 0.0, %v1283
    %v1285 = vpop.f32.mrb[0].mxu0
    %v1286 = vpop.f32.mrb[0].mxu0
    %1287 = vdwg.mxu0
    %v1288 = vadd.f32 %v209, %v1241
    %v1289 = vadd.f32 %v213, %v1243
    %v1290 = vadd.f32 %v217, %v1282
    %v1291 = vadd.f32 %v221, %v1284
    %v1292 = vpack.c.bf16 %v931, %v931
    %1293 = vmatprep.subr.bf16.mxu0 %v757
    %1294 = vmatpush1.bf16.msra.mxu0 %v756
    %1295 = vmatprep.subr.bf16.mxu0 %v761
    %1296 = vmatpush1.bf16.msra.mxu0 %v760
    %1297 = vmatprep.subr.bf16.mxu0 %v765
    %1298 = vmatpush1.bf16.msra.mxu0 %v764
    %1299 = vmatprep.subr.bf16.mxu0 %v769
    %1300 = vmatpush1.bf16.msra.mxu0 %v768
    %1301 = vmatprep.subr.bf16.mxu0 %v773
    %1302 = vmatpush1.bf16.msra.mxu0 %v772
    %1303 = vmatprep.subr.bf16.mxu0 %v777
    %1304 = vmatpush1.bf16.msra.mxu0 %v776
    %1305 = vmatprep.subr.bf16.mxu0 %v781
    %1306 = vmatpush1.bf16.msra.mxu0 %v780
    %1307 = vmatprep.subr.bf16.mxu0 %v785
    %1308 = vmatpush1.bf16.msra.mxu0 %v784
    %1309 = vmatprep.subr.bf16.mxu0 0
    %1310 = vmatpush1.bf16.msra.mxu0 0
    %1311 = vmatprep.subr.bf16.mxu0 0
    %1312 = vmatpush1.bf16.msra.mxu0 0
    %1313 = vmatprep.subr.bf16.mxu0 0
    %1314 = vmatpush1.bf16.msra.mxu0 0
    %1315 = vmatprep.subr.bf16.mxu0 0
    %1316 = vmatpush1.bf16.msra.mxu0 0
    %1317 = vmatprep.subr.bf16.mxu0 0
    %1318 = vmatpush1.bf16.msra.mxu0 0
    %1319 = vmatprep.subr.bf16.mxu0 0
    %1320 = vmatpush1.bf16.msra.mxu0 0
    %1321 = vmatprep.subr.bf16.mxu0 0
    %1322 = vmatpush1.bf16.msra.mxu0 0
    %1323 = vmatprep.subr.bf16.mxu0 0
    %1324 = vmatpush1.bf16.msra.mxu0 0
    %1325 = vmatprep.mubr.bf16.mxu0 0
    %1326 = vmatmul.mubr.bf16.gmra.mrb[0].mxu0 %v1292
    %v1327 = vpop.f32.mrb[0].mxu0
    %v1328 = vadd.f32 0.0, %v1327
    %v1329 = vpop.f32.mrb[0].mxu0
    %v1330 = vadd.f32 0.0, %v1329
    %v1331 = vpop.f32.mrb[0].mxu0
    %v1332 = vpop.f32.mrb[0].mxu0
    %1333 = vdwg.mxu0
    %1334 = vmatprep.subr.bf16.mxu0 %v759
    %1335 = vmatpush1.bf16.msra.mxu0 %v758
    %1336 = vmatprep.subr.bf16.mxu0 %v763
    %1337 = vmatpush1.bf16.msra.mxu0 %v762
    %1338 = vmatprep.subr.bf16.mxu0 %v767
    %1339 = vmatpush1.bf16.msra.mxu0 %v766
    %1340 = vmatprep.subr.bf16.mxu0 %v771
    %1341 = vmatpush1.bf16.msra.mxu0 %v770
    %1342 = vmatprep.subr.bf16.mxu0 %v775
    %1343 = vmatpush1.bf16.msra.mxu0 %v774
    %1344 = vmatprep.subr.bf16.mxu0 %v779
    %1345 = vmatpush1.bf16.msra.mxu0 %v778
    %1346 = vmatprep.subr.bf16.mxu0 %v783
    %1347 = vmatpush1.bf16.msra.mxu0 %v782
    %1348 = vmatprep.subr.bf16.mxu0 %v787
    %1349 = vmatpush1.bf16.msra.mxu0 %v786
    %1350 = vmatprep.subr.bf16.mxu0 0
    %1351 = vmatpush1.bf16.msra.mxu0 0
    %1352 = vmatprep.subr.bf16.mxu0 0
    %1353 = vmatpush1.bf16.msra.mxu0 0
    %1354 = vmatprep.subr.bf16.mxu0 0
    %1355 = vmatpush1.bf16.msra.mxu0 0
    %1356 = vmatprep.subr.bf16.mxu0 0
    %1357 = vmatpush1.bf16.msra.mxu0 0
    %1358 = vmatprep.subr.bf16.mxu0 0
    %1359 = vmatpush1.bf16.msra.mxu0 0
    %1360 = vmatprep.subr.bf16.mxu0 0
    %1361 = vmatpush1.bf16.msra.mxu0 0
    %1362 = vmatprep.subr.bf16.mxu0 0
    %1363 = vmatpush1.bf16.msra.mxu0 0
    %1364 = vmatprep.subr.bf16.mxu0 0
    %1365 = vmatpush1.bf16.msra.mxu0 0
    %1366 = vmatprep.mubr.bf16.mxu0 0
    %1367 = vmatmul.mubr.bf16.gmra.mrb[0].mxu0 %v1292
    %v1368 = vpop.f32.mrb[0].mxu0
    %v1369 = vadd.f32 0.0, %v1368
    %v1370 = vpop.f32.mrb[0].mxu0
    %v1371 = vadd.f32 0.0, %v1370
    %v1372 = vpop.f32.mrb[0].mxu0
    %v1373 = vpop.f32.mrb[0].mxu0
    %1374 = vdwg.mxu0
    %v1375 = vadd.f32 %v320, %v1328
    %v1376 = vadd.f32 %v321, %v1330
    %v1377 = vadd.f32 %v322, %v1369
    %v1378 = vadd.f32 %v323, %v1371
    %v1379 = vxor.u32 %v1375, 2147483648
    %v1380 = vxor.u32 %v1376, 2147483648
    %v1381 = vxor.u32 %v1377, 2147483648
    %v1382 = vmul.f32 %v1379, 1.442695
    %v1383 = vpow.pop %v1382
    %v1384 = vmul.f32 %v1380, 1.442695
    %v1385 = vpow.pop %v1384
    %v1386 = vmul.f32 %v1381, 1.442695
    %v1387 = vpow.pop %v1386
    %v1388 = vadd.f32 %v1383, 1.0
    %v1389 = vadd.f32 %v1385, 1.0
    %v1390 = vadd.f32 %v1387, 1.0
    %v1391 = vrcp.pop %v1388
    %v1392 = vmul.f32 1.0, %v1391
    %v1393 = vrcp.pop %v1389
    %v1394 = vmul.f32 1.0, %v1393
    %v1395 = vrcp.pop %v1390
    %v1396 = vmul.f32 1.0, %v1395
    %v1397 = vtanh.pop %v1378
    %v1398 = vmul.f32 %v1394, %v930
    %v1399 = vmul.f32 %v1392, %v1397
    %v1400 = vadd.f32 %v1398, %v1399
    %v1401 = vtanh.pop %v1400
    %v1402 = vmul.f32 %v1396, %v1401
    %v1403 = vsel %vm237, %v1400, %v930
    %v1404 = vsel %vm237, %v1402, %v931
    %v1405 = vpack.c.bf16 %v1402, %v1402
    %1406 = vmatprep.subr.bf16.mxu0 %v1030
    %1407 = vmatpush1.bf16.msra.mxu0 %v1029
    %1408 = vmatprep.subr.bf16.mxu0 %v1034
    %1409 = vmatpush1.bf16.msra.mxu0 %v1033
    %1410 = vmatprep.subr.bf16.mxu0 %v1038
    %1411 = vmatpush1.bf16.msra.mxu0 %v1037
    %1412 = vmatprep.subr.bf16.mxu0 %v1042
    %1413 = vmatpush1.bf16.msra.mxu0 %v1041
    %1414 = vmatprep.subr.bf16.mxu0 %v1046
    %1415 = vmatpush1.bf16.msra.mxu0 %v1045
    %1416 = vmatprep.subr.bf16.mxu0 %v1050
    %1417 = vmatpush1.bf16.msra.mxu0 %v1049
    %1418 = vmatprep.subr.bf16.mxu0 %v1054
    %1419 = vmatpush1.bf16.msra.mxu0 %v1053
    %1420 = vmatprep.subr.bf16.mxu0 %v1058
    %1421 = vmatpush1.bf16.msra.mxu0 %v1057
    %1422 = vmatprep.subr.bf16.mxu0 0
    %1423 = vmatpush1.bf16.msra.mxu0 0
    %1424 = vmatprep.subr.bf16.mxu0 0
    %1425 = vmatpush1.bf16.msra.mxu0 0
    %1426 = vmatprep.subr.bf16.mxu0 0
    %1427 = vmatpush1.bf16.msra.mxu0 0
    %1428 = vmatprep.subr.bf16.mxu0 0
    %1429 = vmatpush1.bf16.msra.mxu0 0
    %1430 = vmatprep.subr.bf16.mxu0 0
    %1431 = vmatpush1.bf16.msra.mxu0 0
    %1432 = vmatprep.subr.bf16.mxu0 0
    %1433 = vmatpush1.bf16.msra.mxu0 0
    %1434 = vmatprep.subr.bf16.mxu0 0
    %1435 = vmatpush1.bf16.msra.mxu0 0
    %1436 = vmatprep.subr.bf16.mxu0 0
    %1437 = vmatpush1.bf16.msra.mxu0 0
    %1438 = vmatprep.mubr.bf16.mxu0 0
    %1439 = vmatmul.mubr.bf16.gmra.mrb[0].mxu0 %v1405
    %v1440 = vpop.f32.mrb[0].mxu0
    %v1441 = vadd.f32 0.0, %v1440
    %v1442 = vpop.f32.mrb[0].mxu0
    %v1443 = vadd.f32 0.0, %v1442
    %v1444 = vpop.f32.mrb[0].mxu0
    %v1445 = vpop.f32.mrb[0].mxu0
    %1446 = vdwg.mxu0
    %1447 = vmatprep.subr.bf16.mxu0 %v1032
    %1448 = vmatpush1.bf16.msra.mxu0 %v1031
    %1449 = vmatprep.subr.bf16.mxu0 %v1036
    %1450 = vmatpush1.bf16.msra.mxu0 %v1035
    %1451 = vmatprep.subr.bf16.mxu0 %v1040
    %1452 = vmatpush1.bf16.msra.mxu0 %v1039
    %1453 = vmatprep.subr.bf16.mxu0 %v1044
    %1454 = vmatpush1.bf16.msra.mxu0 %v1043
    %1455 = vmatprep.subr.bf16.mxu0 %v1048
    %1456 = vmatpush1.bf16.msra.mxu0 %v1047
    %1457 = vmatprep.subr.bf16.mxu0 %v1052
    %1458 = vmatpush1.bf16.msra.mxu0 %v1051
    %1459 = vmatprep.subr.bf16.mxu0 %v1056
    %1460 = vmatpush1.bf16.msra.mxu0 %v1055
    %1461 = vmatprep.subr.bf16.mxu0 %v1060
    %1462 = vmatpush1.bf16.msra.mxu0 %v1059
    %1463 = vmatprep.subr.bf16.mxu0 0
    %1464 = vmatpush1.bf16.msra.mxu0 0
    %1465 = vmatprep.subr.bf16.mxu0 0
    %1466 = vmatpush1.bf16.msra.mxu0 0
    %1467 = vmatprep.subr.bf16.mxu0 0
    %1468 = vmatpush1.bf16.msra.mxu0 0
    %1469 = vmatprep.subr.bf16.mxu0 0
    %1470 = vmatpush1.bf16.msra.mxu0 0
    %1471 = vmatprep.subr.bf16.mxu0 0
    %1472 = vmatpush1.bf16.msra.mxu0 0
    %1473 = vmatprep.subr.bf16.mxu0 0
    %1474 = vmatpush1.bf16.msra.mxu0 0
    %1475 = vmatprep.subr.bf16.mxu0 0
    %1476 = vmatpush1.bf16.msra.mxu0 0
    %1477 = vmatprep.subr.bf16.mxu0 0
    %1478 = vmatpush1.bf16.msra.mxu0 0
    %1479 = vmatprep.mubr.bf16.mxu0 0
    %1480 = vmatmul.mubr.bf16.gmra.mrb[0].mxu0 %v1405
    %v1481 = vpop.f32.mrb[0].mxu0
    %v1482 = vadd.f32 0.0, %v1481
    %v1483 = vpop.f32.mrb[0].mxu0
    %v1484 = vadd.f32 0.0, %v1483
    %v1485 = vpop.f32.mrb[0].mxu0
    %v1486 = vpop.f32.mrb[0].mxu0
    %1487 = vdwg.mxu0
    %v1488 = vadd.f32 %v1288, %v1441
    %v1489 = vadd.f32 %v1289, %v1443
    %v1490 = vadd.f32 %v1290, %v1482
    %v1491 = vadd.f32 %v1291, %v1484
    %v1492 = vxor.u32 %v1488, 2147483648
    %v1493 = vxor.u32 %v1489, 2147483648
    %v1494 = vxor.u32 %v1490, 2147483648
    %v1495 = vmul.f32 %v1492, 1.442695
    %v1496 = vpow.pop %v1495
    %v1497 = vmul.f32 %v1493, 1.442695
    %v1498 = vpow.pop %v1497
    %v1499 = vmul.f32 %v1494, 1.442695
    %v1500 = vpow.pop %v1499
    %v1501 = vadd.f32 %v1496, 1.0
    %v1502 = vadd.f32 %v1498, 1.0
    %v1503 = vadd.f32 %v1500, 1.0
    %v1504 = vrcp.pop %v1501
    %v1505 = vmul.f32 1.0, %v1504
    %v1506 = vrcp.pop %v1502
    %v1507 = vmul.f32 1.0, %v1506
    %v1508 = vrcp.pop %v1503
    %v1509 = vmul.f32 1.0, %v1508
    %v1510 = vtanh.pop %v1491
    %v1511 = vmul.f32 %v1507, %v1203
    %v1512 = vmul.f32 %v1505, %v1510
    %v1513 = vadd.f32 %v1511, %v1512
    %v1514 = vtanh.pop %v1513
    %v1515 = vmul.f32 %v1509, %v1514
    %v1516 = vsel %vm237, %v1513, %v1203
    %v1517 = vsel %vm237, %v1515, %v1204
    %v1518 = vpack.c.bf16 %v1517, %v1517
    %1519 = vmatprep.subr.bf16.mxu0 %v511
    %1520 = vmatpush1.bf16.msra.mxu0 %v510
    %1521 = vmatprep.subr.bf16.mxu0 %v515
    %1522 = vmatpush1.bf16.msra.mxu0 %v514
    %1523 = vmatprep.subr.bf16.mxu0 %v519
    %1524 = vmatpush1.bf16.msra.mxu0 %v518
    %1525 = vmatprep.subr.bf16.mxu0 %v523
    %1526 = vmatpush1.bf16.msra.mxu0 %v522
    %1527 = vmatprep.subr.bf16.mxu0 %v527
    %1528 = vmatpush1.bf16.msra.mxu0 %v526
    %1529 = vmatprep.subr.bf16.mxu0 %v531
    %1530 = vmatpush1.bf16.msra.mxu0 %v530
    %1531 = vmatprep.subr.bf16.mxu0 %v535
    %1532 = vmatpush1.bf16.msra.mxu0 %v534
    %1533 = vmatprep.subr.bf16.mxu0 %v539
    %1534 = vmatpush1.bf16.msra.mxu0 %v538
    %1535 = vmatprep.subr.bf16.mxu0 0
    %1536 = vmatpush1.bf16.msra.mxu0 0
    %1537 = vmatprep.subr.bf16.mxu0 0
    %1538 = vmatpush1.bf16.msra.mxu0 0
    %1539 = vmatprep.subr.bf16.mxu0 0
    %1540 = vmatpush1.bf16.msra.mxu0 0
    %1541 = vmatprep.subr.bf16.mxu0 0
    %1542 = vmatpush1.bf16.msra.mxu0 0
    %1543 = vmatprep.subr.bf16.mxu0 0
    %1544 = vmatpush1.bf16.msra.mxu0 0
    %1545 = vmatprep.subr.bf16.mxu0 0
    %1546 = vmatpush1.bf16.msra.mxu0 0
    %1547 = vmatprep.subr.bf16.mxu0 0
    %1548 = vmatpush1.bf16.msra.mxu0 0
    %1549 = vmatprep.subr.bf16.mxu0 0
    %1550 = vmatpush1.bf16.msra.mxu0 0
    %1551 = vmatprep.mubr.bf16.mxu0 0
    %1552 = vmatmul.mubr.bf16.gmra.mrb[0].mxu0 %v1518
    %v1553 = vpop.f32.mrb[0].mxu0
    %v1554 = vadd.f32 0.0, %v1553
    %v1555 = vpop.f32.mrb[0].mxu0
    %v1556 = vadd.f32 0.0, %v1555
    %v1557 = vpop.f32.mrb[0].mxu0
    %v1558 = vpop.f32.mrb[0].mxu0
    %1559 = vdwg.mxu0
    %1560 = vmatprep.subr.bf16.mxu0 %v513
    %1561 = vmatpush1.bf16.msra.mxu0 %v512
    %1562 = vmatprep.subr.bf16.mxu0 %v517
    %1563 = vmatpush1.bf16.msra.mxu0 %v516
    %1564 = vmatprep.subr.bf16.mxu0 %v521
    %1565 = vmatpush1.bf16.msra.mxu0 %v520
    %1566 = vmatprep.subr.bf16.mxu0 %v525
    %1567 = vmatpush1.bf16.msra.mxu0 %v524
    %1568 = vmatprep.subr.bf16.mxu0 %v529
    %1569 = vmatpush1.bf16.msra.mxu0 %v528
    %1570 = vmatprep.subr.bf16.mxu0 %v533
    %1571 = vmatpush1.bf16.msra.mxu0 %v532
    %1572 = vmatprep.subr.bf16.mxu0 %v537
    %1573 = vmatpush1.bf16.msra.mxu0 %v536
    %1574 = vmatprep.subr.bf16.mxu0 %v541
    %1575 = vmatpush1.bf16.msra.mxu0 %v540
    %1576 = vmatprep.subr.bf16.mxu0 0
    %1577 = vmatpush1.bf16.msra.mxu0 0
    %1578 = vmatprep.subr.bf16.mxu0 0
    %1579 = vmatpush1.bf16.msra.mxu0 0
    %1580 = vmatprep.subr.bf16.mxu0 0
    %1581 = vmatpush1.bf16.msra.mxu0 0
    %1582 = vmatprep.subr.bf16.mxu0 0
    %1583 = vmatpush1.bf16.msra.mxu0 0
    %1584 = vmatprep.subr.bf16.mxu0 0
    %1585 = vmatpush1.bf16.msra.mxu0 0
    %1586 = vmatprep.subr.bf16.mxu0 0
    %1587 = vmatpush1.bf16.msra.mxu0 0
    %1588 = vmatprep.subr.bf16.mxu0 0
    %1589 = vmatpush1.bf16.msra.mxu0 0
    %1590 = vmatprep.subr.bf16.mxu0 0
    %1591 = vmatpush1.bf16.msra.mxu0 0
    %1592 = vmatprep.mubr.bf16.mxu0 0
    %1593 = vmatmul.mubr.bf16.gmra.mrb[0].mxu0 %v1518
    %v1594 = vpop.f32.mrb[0].mxu0
    %v1595 = vadd.f32 0.0, %v1594
    %v1596 = vpop.f32.mrb[0].mxu0
    %v1597 = vadd.f32 0.0, %v1596
    %v1598 = vpop.f32.mrb[0].mxu0
    %v1599 = vpop.f32.mrb[0].mxu0
    %1600 = vdwg.mxu0
    %v1601 = vadd.f32 %v209, %v1554
    %v1602 = vadd.f32 %v213, %v1556
    %v1603 = vadd.f32 %v217, %v1595
    %v1604 = vadd.f32 %v221, %v1597
    %v1605 = vpack.c.bf16 %v1404, %v1404
    %1606 = vmatprep.subr.bf16.mxu0 %v757
    %1607 = vmatpush1.bf16.msra.mxu0 %v756
    %1608 = vmatprep.subr.bf16.mxu0 %v761
    %1609 = vmatpush1.bf16.msra.mxu0 %v760
    %1610 = vmatprep.subr.bf16.mxu0 %v765
    %1611 = vmatpush1.bf16.msra.mxu0 %v764
    %1612 = vmatprep.subr.bf16.mxu0 %v769
    %1613 = vmatpush1.bf16.msra.mxu0 %v768
    %1614 = vmatprep.subr.bf16.mxu0 %v773
    %1615 = vmatpush1.bf16.msra.mxu0 %v772
    %1616 = vmatprep.subr.bf16.mxu0 %v777
    %1617 = vmatpush1.bf16.msra.mxu0 %v776
    %1618 = vmatprep.subr.bf16.mxu0 %v781
    %1619 = vmatpush1.bf16.msra.mxu0 %v780
    %1620 = vmatprep.subr.bf16.mxu0 %v785
    %1621 = vmatpush1.bf16.msra.mxu0 %v784
    %1622 = vmatprep.subr.bf16.mxu0 0
    %1623 = vmatpush1.bf16.msra.mxu0 0
    %1624 = vmatprep.subr.bf16.mxu0 0
    %1625 = vmatpush1.bf16.msra.mxu0 0
    %1626 = vmatprep.subr.bf16.mxu0 0
    %1627 = vmatpush1.bf16.msra.mxu0 0
    %1628 = vmatprep.subr.bf16.mxu0 0
    %1629 = vmatpush1.bf16.msra.mxu0 0
    %1630 = vmatprep.subr.bf16.mxu0 0
    %1631 = vmatpush1.bf16.msra.mxu0 0
    %1632 = vmatprep.subr.bf16.mxu0 0
    %1633 = vmatpush1.bf16.msra.mxu0 0
    %1634 = vmatprep.subr.bf16.mxu0 0
    %1635 = vmatpush1.bf16.msra.mxu0 0
    %1636 = vmatprep.subr.bf16.mxu0 0
    %1637 = vmatpush1.bf16.msra.mxu0 0
    %1638 = vmatprep.mubr.bf16.mxu0 0
    %1639 = vmatmul.mubr.bf16.gmra.mrb[0].mxu0 %v1605
    %v1640 = vpop.f32.mrb[0].mxu0
    %v1641 = vadd.f32 0.0, %v1640
    %v1642 = vpop.f32.mrb[0].mxu0
    %v1643 = vadd.f32 0.0, %v1642
    %v1644 = vpop.f32.mrb[0].mxu0
    %v1645 = vpop.f32.mrb[0].mxu0
    %1646 = vdwg.mxu0
    %1647 = vmatprep.subr.bf16.mxu0 %v759
    %1648 = vmatpush1.bf16.msra.mxu0 %v758
    %1649 = vmatprep.subr.bf16.mxu0 %v763
    %1650 = vmatpush1.bf16.msra.mxu0 %v762
    %1651 = vmatprep.subr.bf16.mxu0 %v767
    %1652 = vmatpush1.bf16.msra.mxu0 %v766
    %1653 = vmatprep.subr.bf16.mxu0 %v771
    %1654 = vmatpush1.bf16.msra.mxu0 %v770
    %1655 = vmatprep.subr.bf16.mxu0 %v775
    %1656 = vmatpush1.bf16.msra.mxu0 %v774
    %1657 = vmatprep.subr.bf16.mxu0 %v779
    %1658 = vmatpush1.bf16.msra.mxu0 %v778
    %1659 = vmatprep.subr.bf16.mxu0 %v783
    %1660 = vmatpush1.bf16.msra.mxu0 %v782
    %1661 = vmatprep.subr.bf16.mxu0 %v787
    %1662 = vmatpush1.bf16.msra.mxu0 %v786
    %1663 = vmatprep.subr.bf16.mxu0 0
    %1664 = vmatpush1.bf16.msra.mxu0 0
    %1665 = vmatprep.subr.bf16.mxu0 0
    %1666 = vmatpush1.bf16.msra.mxu0 0
    %1667 = vmatprep.subr.bf16.mxu0 0
    %1668 = vmatpush1.bf16.msra.mxu0 0
    %1669 = vmatprep.subr.bf16.mxu0 0
    %1670 = vmatpush1.bf16.msra.mxu0 0
    %1671 = vmatprep.subr.bf16.mxu0 0
    %1672 = vmatpush1.bf16.msra.mxu0 0
    %1673 = vmatprep.subr.bf16.mxu0 0
    %1674 = vmatpush1.bf16.msra.mxu0 0
    %1675 = vmatprep.subr.bf16.mxu0 0
    %1676 = vmatpush1.bf16.msra.mxu0 0
    %1677 = vmatprep.subr.bf16.mxu0 0
    %1678 = vmatpush1.bf16.msra.mxu0 0
    %1679 = vmatprep.mubr.bf16.mxu0 0
    %1680 = vmatmul.mubr.bf16.gmra.mrb[0].mxu0 %v1605
    %v1681 = vpop.f32.mrb[0].mxu0
    %v1682 = vadd.f32 0.0, %v1681
    %v1683 = vpop.f32.mrb[0].mxu0
    %v1684 = vadd.f32 0.0, %v1683
    %v1685 = vpop.f32.mrb[0].mxu0
    %v1686 = vpop.f32.mrb[0].mxu0
    %1687 = vdwg.mxu0
    %v1688 = vadd.f32 %v335, %v1641
    %v1689 = vadd.f32 %v336, %v1643
    %v1690 = vadd.f32 %v337, %v1682
    %v1691 = vadd.f32 %v338, %v1684
    %v1692 = vxor.u32 %v1688, 2147483648
    %v1693 = vxor.u32 %v1689, 2147483648
    %v1694 = vxor.u32 %v1690, 2147483648
    %v1695 = vmul.f32 %v1692, 1.442695
    %v1696 = vpow.pop %v1695
    %v1697 = vmul.f32 %v1693, 1.442695
    %v1698 = vpow.pop %v1697
    %v1699 = vmul.f32 %v1694, 1.442695
    %v1700 = vpow.pop %v1699
    %v1701 = vadd.f32 %v1696, 1.0
    %v1702 = vadd.f32 %v1698, 1.0
    %v1703 = vadd.f32 %v1700, 1.0
    %v1704 = vrcp.pop %v1701
    %v1705 = vmul.f32 1.0, %v1704
    %v1706 = vrcp.pop %v1702
    %v1707 = vmul.f32 1.0, %v1706
    %v1708 = vrcp.pop %v1703
    %v1709 = vmul.f32 1.0, %v1708
    %v1710 = vtanh.pop %v1691
    %v1711 = vmul.f32 %v1707, %v1403
    %v1712 = vmul.f32 %v1705, %v1710
    %v1713 = vadd.f32 %v1711, %v1712
    %v1714 = vtanh.pop %v1713
    %v1715 = vmul.f32 %v1709, %v1714
    %v1716 = vsel %vm243, %v1713, %v1403
    %v1717 = vsel %vm243, %v1715, %v1404
    %v1718 = vpack.c.bf16 %v1715, %v1715
    %1719 = vmatprep.subr.bf16.mxu0 %v1030
    %1720 = vmatpush1.bf16.msra.mxu0 %v1029
    %1721 = vmatprep.subr.bf16.mxu0 %v1034
    %1722 = vmatpush1.bf16.msra.mxu0 %v1033
    %1723 = vmatprep.subr.bf16.mxu0 %v1038
    %1724 = vmatpush1.bf16.msra.mxu0 %v1037
    %1725 = vmatprep.subr.bf16.mxu0 %v1042
    %1726 = vmatpush1.bf16.msra.mxu0 %v1041
    %1727 = vmatprep.subr.bf16.mxu0 %v1046
    %1728 = vmatpush1.bf16.msra.mxu0 %v1045
    %1729 = vmatprep.subr.bf16.mxu0 %v1050
    %1730 = vmatpush1.bf16.msra.mxu0 %v1049
    %1731 = vmatprep.subr.bf16.mxu0 %v1054
    %1732 = vmatpush1.bf16.msra.mxu0 %v1053
    %1733 = vmatprep.subr.bf16.mxu0 %v1058
    %1734 = vmatpush1.bf16.msra.mxu0 %v1057
    %1735 = vmatprep.subr.bf16.mxu0 0
    %1736 = vmatpush1.bf16.msra.mxu0 0
    %1737 = vmatprep.subr.bf16.mxu0 0
    %1738 = vmatpush1.bf16.msra.mxu0 0
    %1739 = vmatprep.subr.bf16.mxu0 0
    %1740 = vmatpush1.bf16.msra.mxu0 0
    %1741 = vmatprep.subr.bf16.mxu0 0
    %1742 = vmatpush1.bf16.msra.mxu0 0
    %1743 = vmatprep.subr.bf16.mxu0 0
    %1744 = vmatpush1.bf16.msra.mxu0 0
    %1745 = vmatprep.subr.bf16.mxu0 0
    %1746 = vmatpush1.bf16.msra.mxu0 0
    %1747 = vmatprep.subr.bf16.mxu0 0
    %1748 = vmatpush1.bf16.msra.mxu0 0
    %1749 = vmatprep.subr.bf16.mxu0 0
    %1750 = vmatpush1.bf16.msra.mxu0 0
    %1751 = vmatprep.mubr.bf16.mxu0 0
    %1752 = vmatmul.mubr.bf16.gmra.mrb[0].mxu0 %v1718
    %v1753 = vpop.f32.mrb[0].mxu0
    %v1754 = vadd.f32 0.0, %v1753
    %v1755 = vpop.f32.mrb[0].mxu0
    %v1756 = vadd.f32 0.0, %v1755
    %v1757 = vpop.f32.mrb[0].mxu0
    %v1758 = vpop.f32.mrb[0].mxu0
    %1759 = vdwg.mxu0
    %1760 = vmatprep.subr.bf16.mxu0 %v1032
    %1761 = vmatpush1.bf16.msra.mxu0 %v1031
    %1762 = vmatprep.subr.bf16.mxu0 %v1036
    %1763 = vmatpush1.bf16.msra.mxu0 %v1035
    %1764 = vmatprep.subr.bf16.mxu0 %v1040
    %1765 = vmatpush1.bf16.msra.mxu0 %v1039
    %1766 = vmatprep.subr.bf16.mxu0 %v1044
    %1767 = vmatpush1.bf16.msra.mxu0 %v1043
    %1768 = vmatprep.subr.bf16.mxu0 %v1048
    %1769 = vmatpush1.bf16.msra.mxu0 %v1047
    %1770 = vmatprep.subr.bf16.mxu0 %v1052
    %1771 = vmatpush1.bf16.msra.mxu0 %v1051
    %1772 = vmatprep.subr.bf16.mxu0 %v1056
    %1773 = vmatpush1.bf16.msra.mxu0 %v1055
    %1774 = vmatprep.subr.bf16.mxu0 %v1060
    %1775 = vmatpush1.bf16.msra.mxu0 %v1059
    %1776 = vmatprep.subr.bf16.mxu0 0
    %1777 = vmatpush1.bf16.msra.mxu0 0
    %1778 = vmatprep.subr.bf16.mxu0 0
    %1779 = vmatpush1.bf16.msra.mxu0 0
    %1780 = vmatprep.subr.bf16.mxu0 0
    %1781 = vmatpush1.bf16.msra.mxu0 0
    %1782 = vmatprep.subr.bf16.mxu0 0
    %1783 = vmatpush1.bf16.msra.mxu0 0
    %1784 = vmatprep.subr.bf16.mxu0 0
    %1785 = vmatpush1.bf16.msra.mxu0 0
    %1786 = vmatprep.subr.bf16.mxu0 0
    %1787 = vmatpush1.bf16.msra.mxu0 0
    %1788 = vmatprep.subr.bf16.mxu0 0
    %1789 = vmatpush1.bf16.msra.mxu0 0
    %1790 = vmatprep.subr.bf16.mxu0 0
    %1791 = vmatpush1.bf16.msra.mxu0 0
    %1792 = vmatprep.mubr.bf16.mxu0 0
    %1793 = vmatmul.mubr.bf16.gmra.mrb[0].mxu0 %v1718
    %v1794 = vpop.f32.mrb[0].mxu0
    %v1795 = vadd.f32 0.0, %v1794
    %v1796 = vpop.f32.mrb[0].mxu0
    %v1797 = vadd.f32 0.0, %v1796
    %v1798 = vpop.f32.mrb[0].mxu0
    %v1799 = vpop.f32.mrb[0].mxu0
    %1800 = vdwg.mxu0
    %v1801 = vadd.f32 %v1601, %v1754
    %v1802 = vadd.f32 %v1602, %v1756
    %v1803 = vadd.f32 %v1603, %v1795
    %v1804 = vadd.f32 %v1604, %v1797
    %v1805 = vxor.u32 %v1801, 2147483648
    %v1806 = vxor.u32 %v1802, 2147483648
    %v1807 = vxor.u32 %v1803, 2147483648
    %v1808 = vmul.f32 %v1805, 1.442695
    %v1809 = vpow.pop %v1808
    %v1810 = vmul.f32 %v1806, 1.442695
    %v1811 = vpow.pop %v1810
    %v1812 = vmul.f32 %v1807, 1.442695
    %v1813 = vpow.pop %v1812
    %v1814 = vadd.f32 %v1809, 1.0
    %v1815 = vadd.f32 %v1811, 1.0
    %v1816 = vadd.f32 %v1813, 1.0
    %v1817 = vrcp.pop %v1814
    %v1818 = vmul.f32 1.0, %v1817
    %v1819 = vrcp.pop %v1815
    %v1820 = vmul.f32 1.0, %v1819
    %v1821 = vrcp.pop %v1816
    %v1822 = vmul.f32 1.0, %v1821
    %v1823 = vtanh.pop %v1804
    %v1824 = vmul.f32 %v1820, %v1516
    %v1825 = vmul.f32 %v1818, %v1823
    %v1826 = vadd.f32 %v1824, %v1825
    %v1827 = vtanh.pop %v1826
    %v1828 = vmul.f32 %v1822, %v1827
    %v1829 = vsel %vm243, %v1826, %v1516
    %v1830 = vsel %vm243, %v1828, %v1517
    %v1831 = vpack.c.bf16 %v1830, %v1830
    %1832 = vmatprep.subr.bf16.mxu0 %v511
    %1833 = vmatpush1.bf16.msra.mxu0 %v510
    %1834 = vmatprep.subr.bf16.mxu0 %v515
    %1835 = vmatpush1.bf16.msra.mxu0 %v514
    %1836 = vmatprep.subr.bf16.mxu0 %v519
    %1837 = vmatpush1.bf16.msra.mxu0 %v518
    %1838 = vmatprep.subr.bf16.mxu0 %v523
    %1839 = vmatpush1.bf16.msra.mxu0 %v522
    %1840 = vmatprep.subr.bf16.mxu0 %v527
    %1841 = vmatpush1.bf16.msra.mxu0 %v526
    %1842 = vmatprep.subr.bf16.mxu0 %v531
    %1843 = vmatpush1.bf16.msra.mxu0 %v530
    %1844 = vmatprep.subr.bf16.mxu0 %v535
    %1845 = vmatpush1.bf16.msra.mxu0 %v534
    %1846 = vmatprep.subr.bf16.mxu0 %v539
    %1847 = vmatpush1.bf16.msra.mxu0 %v538
    %1848 = vmatprep.subr.bf16.mxu0 0
    %1849 = vmatpush1.bf16.msra.mxu0 0
    %1850 = vmatprep.subr.bf16.mxu0 0
    %1851 = vmatpush1.bf16.msra.mxu0 0
    %1852 = vmatprep.subr.bf16.mxu0 0
    %1853 = vmatpush1.bf16.msra.mxu0 0
    %1854 = vmatprep.subr.bf16.mxu0 0
    %1855 = vmatpush1.bf16.msra.mxu0 0
    %1856 = vmatprep.subr.bf16.mxu0 0
    %1857 = vmatpush1.bf16.msra.mxu0 0
    %1858 = vmatprep.subr.bf16.mxu0 0
    %1859 = vmatpush1.bf16.msra.mxu0 0
    %1860 = vmatprep.subr.bf16.mxu0 0
    %1861 = vmatpush1.bf16.msra.mxu0 0
    %1862 = vmatprep.subr.bf16.mxu0 0
    %1863 = vmatpush1.bf16.msra.mxu0 0
    %1864 = vmatprep.mubr.bf16.mxu0 0
    %1865 = vmatmul.mubr.bf16.gmra.mrb[0].mxu0 %v1831
    %v1866 = vpop.f32.mrb[0].mxu0
    %v1867 = vadd.f32 0.0, %v1866
    %v1868 = vpop.f32.mrb[0].mxu0
    %v1869 = vadd.f32 0.0, %v1868
    %v1870 = vpop.f32.mrb[0].mxu0
    %v1871 = vpop.f32.mrb[0].mxu0
    %1872 = vdwg.mxu0
    %1873 = vmatprep.subr.bf16.mxu0 %v513
    %1874 = vmatpush1.bf16.msra.mxu0 %v512
    %1875 = vmatprep.subr.bf16.mxu0 %v517
    %1876 = vmatpush1.bf16.msra.mxu0 %v516
    %1877 = vmatprep.subr.bf16.mxu0 %v521
    %1878 = vmatpush1.bf16.msra.mxu0 %v520
    %1879 = vmatprep.subr.bf16.mxu0 %v525
    %1880 = vmatpush1.bf16.msra.mxu0 %v524
    %1881 = vmatprep.subr.bf16.mxu0 %v529
    %1882 = vmatpush1.bf16.msra.mxu0 %v528
    %1883 = vmatprep.subr.bf16.mxu0 %v533
    %1884 = vmatpush1.bf16.msra.mxu0 %v532
    %1885 = vmatprep.subr.bf16.mxu0 %v537
    %1886 = vmatpush1.bf16.msra.mxu0 %v536
    %1887 = vmatprep.subr.bf16.mxu0 %v541
    %1888 = vmatpush1.bf16.msra.mxu0 %v540
    %1889 = vmatprep.subr.bf16.mxu0 0
    %1890 = vmatpush1.bf16.msra.mxu0 0
    %1891 = vmatprep.subr.bf16.mxu0 0
    %1892 = vmatpush1.bf16.msra.mxu0 0
    %1893 = vmatprep.subr.bf16.mxu0 0
    %1894 = vmatpush1.bf16.msra.mxu0 0
    %1895 = vmatprep.subr.bf16.mxu0 0
    %1896 = vmatpush1.bf16.msra.mxu0 0
    %1897 = vmatprep.subr.bf16.mxu0 0
    %1898 = vmatpush1.bf16.msra.mxu0 0
    %1899 = vmatprep.subr.bf16.mxu0 0
    %1900 = vmatpush1.bf16.msra.mxu0 0
    %1901 = vmatprep.subr.bf16.mxu0 0
    %1902 = vmatpush1.bf16.msra.mxu0 0
    %1903 = vmatprep.subr.bf16.mxu0 0
    %1904 = vmatpush1.bf16.msra.mxu0 0
    %1905 = vmatprep.mubr.bf16.mxu0 0
    %1906 = vmatmul.mubr.bf16.gmra.mrb[0].mxu0 %v1831
    %v1907 = vpop.f32.mrb[0].mxu0
    %v1908 = vadd.f32 0.0, %v1907
    %v1909 = vpop.f32.mrb[0].mxu0
    %v1910 = vadd.f32 0.0, %v1909
    %v1911 = vpop.f32.mrb[0].mxu0
    %v1912 = vpop.f32.mrb[0].mxu0
    %1913 = vdwg.mxu0
    %v1914 = vadd.f32 %v209, %v1867
    %v1915 = vadd.f32 %v213, %v1869
    %v1916 = vadd.f32 %v217, %v1908
    %v1917 = vadd.f32 %v221, %v1910
    %v1918 = vpack.c.bf16 %v1717, %v1717
    %1919 = vmatprep.subr.bf16.mxu0 %v757
    %1920 = vmatpush1.bf16.msra.mxu0 %v756
    %1921 = vmatprep.subr.bf16.mxu0 %v761
    %1922 = vmatpush1.bf16.msra.mxu0 %v760
    %1923 = vmatprep.subr.bf16.mxu0 %v765
    %1924 = vmatpush1.bf16.msra.mxu0 %v764
    %1925 = vmatprep.subr.bf16.mxu0 %v769
    %1926 = vmatpush1.bf16.msra.mxu0 %v768
    %1927 = vmatprep.subr.bf16.mxu0 %v773
    %1928 = vmatpush1.bf16.msra.mxu0 %v772
    %1929 = vmatprep.subr.bf16.mxu0 %v777
    %1930 = vmatpush1.bf16.msra.mxu0 %v776
    %1931 = vmatprep.subr.bf16.mxu0 %v781
    %1932 = vmatpush1.bf16.msra.mxu0 %v780
    %1933 = vmatprep.subr.bf16.mxu0 %v785
    %1934 = vmatpush1.bf16.msra.mxu0 %v784
    %1935 = vmatprep.subr.bf16.mxu0 0
    %1936 = vmatpush1.bf16.msra.mxu0 0
    %1937 = vmatprep.subr.bf16.mxu0 0
    %1938 = vmatpush1.bf16.msra.mxu0 0
    %1939 = vmatprep.subr.bf16.mxu0 0
    %1940 = vmatpush1.bf16.msra.mxu0 0
    %1941 = vmatprep.subr.bf16.mxu0 0
    %1942 = vmatpush1.bf16.msra.mxu0 0
    %1943 = vmatprep.subr.bf16.mxu0 0
    %1944 = vmatpush1.bf16.msra.mxu0 0
    %1945 = vmatprep.subr.bf16.mxu0 0
    %1946 = vmatpush1.bf16.msra.mxu0 0
    %1947 = vmatprep.subr.bf16.mxu0 0
    %1948 = vmatpush1.bf16.msra.mxu0 0
    %1949 = vmatprep.subr.bf16.mxu0 0
    %1950 = vmatpush1.bf16.msra.mxu0 0
    %1951 = vmatprep.mubr.bf16.mxu0 0
    %1952 = vmatmul.mubr.bf16.gmra.mrb[0].mxu0 %v1918
    %v1953 = vpop.f32.mrb[0].mxu0
    %v1954 = vadd.f32 0.0, %v1953
    %v1955 = vpop.f32.mrb[0].mxu0
    %v1956 = vadd.f32 0.0, %v1955
    %v1957 = vpop.f32.mrb[0].mxu0
    %v1958 = vpop.f32.mrb[0].mxu0
    %1959 = vdwg.mxu0
    %1960 = vmatprep.subr.bf16.mxu0 %v759
    %1961 = vmatpush1.bf16.msra.mxu0 %v758
    %1962 = vmatprep.subr.bf16.mxu0 %v763
    %1963 = vmatpush1.bf16.msra.mxu0 %v762
    %1964 = vmatprep.subr.bf16.mxu0 %v767
    %1965 = vmatpush1.bf16.msra.mxu0 %v766
    %1966 = vmatprep.subr.bf16.mxu0 %v771
    %1967 = vmatpush1.bf16.msra.mxu0 %v770
    %1968 = vmatprep.subr.bf16.mxu0 %v775
    %1969 = vmatpush1.bf16.msra.mxu0 %v774
    %1970 = vmatprep.subr.bf16.mxu0 %v779
    %1971 = vmatpush1.bf16.msra.mxu0 %v778
    %1972 = vmatprep.subr.bf16.mxu0 %v783
    %1973 = vmatpush1.bf16.msra.mxu0 %v782
    %1974 = vmatprep.subr.bf16.mxu0 %v787
    %1975 = vmatpush1.bf16.msra.mxu0 %v786
    %1976 = vmatprep.subr.bf16.mxu0 0
    %1977 = vmatpush1.bf16.msra.mxu0 0
    %1978 = vmatprep.subr.bf16.mxu0 0
    %1979 = vmatpush1.bf16.msra.mxu0 0
    %1980 = vmatprep.subr.bf16.mxu0 0
    %1981 = vmatpush1.bf16.msra.mxu0 0
    %1982 = vmatprep.subr.bf16.mxu0 0
    %1983 = vmatpush1.bf16.msra.mxu0 0
    %1984 = vmatprep.subr.bf16.mxu0 0
    %1985 = vmatpush1.bf16.msra.mxu0 0
    %1986 = vmatprep.subr.bf16.mxu0 0
    %1987 = vmatpush1.bf16.msra.mxu0 0
    %1988 = vmatprep.subr.bf16.mxu0 0
    %1989 = vmatpush1.bf16.msra.mxu0 0
    %1990 = vmatprep.subr.bf16.mxu0 0
    %1991 = vmatpush1.bf16.msra.mxu0 0
    %1992 = vmatprep.mubr.bf16.mxu0 0
    %1993 = vmatmul.mubr.bf16.gmra.mrb[0].mxu0 %v1918
    %v1994 = vpop.f32.mrb[0].mxu0
    %v1995 = vadd.f32 0.0, %v1994
    %v1996 = vpop.f32.mrb[0].mxu0
    %v1997 = vadd.f32 0.0, %v1996
    %v1998 = vpop.f32.mrb[0].mxu0
    %v1999 = vpop.f32.mrb[0].mxu0
    %2000 = vdwg.mxu0
    %v2001 = vadd.f32 %v350, %v1954
    %v2002 = vadd.f32 %v351, %v1956
    %v2003 = vadd.f32 %v352, %v1995
    %v2004 = vadd.f32 %v353, %v1997
    %v2005 = vxor.u32 %v2001, 2147483648
    %v2006 = vxor.u32 %v2002, 2147483648
    %v2007 = vxor.u32 %v2003, 2147483648
    %v2008 = vmul.f32 %v2005, 1.442695
    %v2009 = vpow.pop %v2008
    %v2010 = vmul.f32 %v2006, 1.442695
    %v2011 = vpow.pop %v2010
    %v2012 = vmul.f32 %v2007, 1.442695
    %v2013 = vpow.pop %v2012
    %v2014 = vadd.f32 %v2009, 1.0
    %v2015 = vadd.f32 %v2011, 1.0
    %v2016 = vadd.f32 %v2013, 1.0
    %v2017 = vrcp.pop %v2014
    %v2018 = vmul.f32 1.0, %v2017
    %v2019 = vrcp.pop %v2015
    %v2020 = vmul.f32 1.0, %v2019
    %v2021 = vrcp.pop %v2016
    %v2022 = vmul.f32 1.0, %v2021
    %v2023 = vtanh.pop %v2004
    %v2024 = vmul.f32 %v2020, %v1716
    %v2025 = vmul.f32 %v2018, %v2023
    %v2026 = vadd.f32 %v2024, %v2025
    %v2027 = vtanh.pop %v2026
    %v2028 = vmul.f32 %v2022, %v2027
    %v2029 = vsel %vm249, %v2026, %v1716
    %v2030 = vsel %vm249, %v2028, %v1717
    %v2031 = vpack.c.bf16 %v2028, %v2028
    %2032 = vmatprep.subr.bf16.mxu0 %v1030
    %2033 = vmatpush1.bf16.msra.mxu0 %v1029
    %2034 = vmatprep.subr.bf16.mxu0 %v1034
    %2035 = vmatpush1.bf16.msra.mxu0 %v1033
    %2036 = vmatprep.subr.bf16.mxu0 %v1038
    %2037 = vmatpush1.bf16.msra.mxu0 %v1037
    %2038 = vmatprep.subr.bf16.mxu0 %v1042
    %2039 = vmatpush1.bf16.msra.mxu0 %v1041
    %2040 = vmatprep.subr.bf16.mxu0 %v1046
    %2041 = vmatpush1.bf16.msra.mxu0 %v1045
    %2042 = vmatprep.subr.bf16.mxu0 %v1050
    %2043 = vmatpush1.bf16.msra.mxu0 %v1049
    %2044 = vmatprep.subr.bf16.mxu0 %v1054
    %2045 = vmatpush1.bf16.msra.mxu0 %v1053
    %2046 = vmatprep.subr.bf16.mxu0 %v1058
    %2047 = vmatpush1.bf16.msra.mxu0 %v1057
    %2048 = vmatprep.subr.bf16.mxu0 0
    %2049 = vmatpush1.bf16.msra.mxu0 0
    %2050 = vmatprep.subr.bf16.mxu0 0
    %2051 = vmatpush1.bf16.msra.mxu0 0
    %2052 = vmatprep.subr.bf16.mxu0 0
    %2053 = vmatpush1.bf16.msra.mxu0 0
    %2054 = vmatprep.subr.bf16.mxu0 0
    %2055 = vmatpush1.bf16.msra.mxu0 0
    %2056 = vmatprep.subr.bf16.mxu0 0
    %2057 = vmatpush1.bf16.msra.mxu0 0
    %2058 = vmatprep.subr.bf16.mxu0 0
    %2059 = vmatpush1.bf16.msra.mxu0 0
    %2060 = vmatprep.subr.bf16.mxu0 0
    %2061 = vmatpush1.bf16.msra.mxu0 0
    %2062 = vmatprep.subr.bf16.mxu0 0
    %2063 = vmatpush1.bf16.msra.mxu0 0
    %2064 = vmatprep.mubr.bf16.mxu0 0
    %2065 = vmatmul.mubr.bf16.gmra.mrb[0].mxu0 %v2031
    %v2066 = vpop.f32.mrb[0].mxu0
    %v2067 = vadd.f32 0.0, %v2066
    %v2068 = vpop.f32.mrb[0].mxu0
    %v2069 = vadd.f32 0.0, %v2068
    %v2070 = vpop.f32.mrb[0].mxu0
    %v2071 = vpop.f32.mrb[0].mxu0
    %2072 = vdwg.mxu0
    %2073 = vmatprep.subr.bf16.mxu0 %v1032
    %2074 = vmatpush1.bf16.msra.mxu0 %v1031
    %2075 = vmatprep.subr.bf16.mxu0 %v1036
    %2076 = vmatpush1.bf16.msra.mxu0 %v1035
    %2077 = vmatprep.subr.bf16.mxu0 %v1040
    %2078 = vmatpush1.bf16.msra.mxu0 %v1039
    %2079 = vmatprep.subr.bf16.mxu0 %v1044
    %2080 = vmatpush1.bf16.msra.mxu0 %v1043
    %2081 = vmatprep.subr.bf16.mxu0 %v1048
    %2082 = vmatpush1.bf16.msra.mxu0 %v1047
    %2083 = vmatprep.subr.bf16.mxu0 %v1052
    %2084 = vmatpush1.bf16.msra.mxu0 %v1051
    %2085 = vmatprep.subr.bf16.mxu0 %v1056
    %2086 = vmatpush1.bf16.msra.mxu0 %v1055
    %2087 = vmatprep.subr.bf16.mxu0 %v1060
    %2088 = vmatpush1.bf16.msra.mxu0 %v1059
    %2089 = vmatprep.subr.bf16.mxu0 0
    %2090 = vmatpush1.bf16.msra.mxu0 0
    %2091 = vmatprep.subr.bf16.mxu0 0
    %2092 = vmatpush1.bf16.msra.mxu0 0
    %2093 = vmatprep.subr.bf16.mxu0 0
    %2094 = vmatpush1.bf16.msra.mxu0 0
    %2095 = vmatprep.subr.bf16.mxu0 0
    %2096 = vmatpush1.bf16.msra.mxu0 0
    %2097 = vmatprep.subr.bf16.mxu0 0
    %2098 = vmatpush1.bf16.msra.mxu0 0
    %2099 = vmatprep.subr.bf16.mxu0 0
    %2100 = vmatpush1.bf16.msra.mxu0 0
    %2101 = vmatprep.subr.bf16.mxu0 0
    %2102 = vmatpush1.bf16.msra.mxu0 0
    %2103 = vmatprep.subr.bf16.mxu0 0
    %2104 = vmatpush1.bf16.msra.mxu0 0
    %2105 = vmatprep.mubr.bf16.mxu0 0
    %2106 = vmatmul.mubr.bf16.gmra.mrb[0].mxu0 %v2031
    %v2107 = vpop.f32.mrb[0].mxu0
    %v2108 = vadd.f32 0.0, %v2107
    %v2109 = vpop.f32.mrb[0].mxu0
    %v2110 = vadd.f32 0.0, %v2109
    %v2111 = vpop.f32.mrb[0].mxu0
    %v2112 = vpop.f32.mrb[0].mxu0
    %2113 = vdwg.mxu0
    %v2114 = vadd.f32 %v1914, %v2067
    %v2115 = vadd.f32 %v1915, %v2069
    %v2116 = vadd.f32 %v1916, %v2108
    %v2117 = vadd.f32 %v1917, %v2110
    %v2118 = vxor.u32 %v2114, 2147483648
    %v2119 = vxor.u32 %v2115, 2147483648
    %v2120 = vxor.u32 %v2116, 2147483648
    %v2121 = vmul.f32 %v2118, 1.442695
    %v2122 = vpow.pop %v2121
    %v2123 = vmul.f32 %v2119, 1.442695
    %v2124 = vpow.pop %v2123
    %v2125 = vmul.f32 %v2120, 1.442695
    %v2126 = vpow.pop %v2125
    %v2127 = vadd.f32 %v2122, 1.0
    %v2128 = vadd.f32 %v2124, 1.0
    %v2129 = vadd.f32 %v2126, 1.0
    %v2130 = vrcp.pop %v2127
    %v2131 = vmul.f32 1.0, %v2130
    %v2132 = vrcp.pop %v2128
    %v2133 = vmul.f32 1.0, %v2132
    %v2134 = vrcp.pop %v2129
    %v2135 = vmul.f32 1.0, %v2134
    %v2136 = vtanh.pop %v2117
    %v2137 = vmul.f32 %v2133, %v1829
    %v2138 = vmul.f32 %v2131, %v2136
    %v2139 = vadd.f32 %v2137, %v2138
    %v2140 = vtanh.pop %v2139
    %v2141 = vmul.f32 %v2135, %v2140
    %v2142 = vsel %vm249, %v2139, %v1829
    %v2143 = vsel %vm249, %v2141, %v1830
    %v2144 = vpack.c.bf16 %v2143, %v2143
    %2145 = vmatprep.subr.bf16.mxu0 %v511
    %2146 = vmatpush1.bf16.msra.mxu0 %v510
    %2147 = vmatprep.subr.bf16.mxu0 %v515
    %2148 = vmatpush1.bf16.msra.mxu0 %v514
    %2149 = vmatprep.subr.bf16.mxu0 %v519
    %2150 = vmatpush1.bf16.msra.mxu0 %v518
    %2151 = vmatprep.subr.bf16.mxu0 %v523
    %2152 = vmatpush1.bf16.msra.mxu0 %v522
    %2153 = vmatprep.subr.bf16.mxu0 %v527
    %2154 = vmatpush1.bf16.msra.mxu0 %v526
    %2155 = vmatprep.subr.bf16.mxu0 %v531
    %2156 = vmatpush1.bf16.msra.mxu0 %v530
    %2157 = vmatprep.subr.bf16.mxu0 %v535
    %2158 = vmatpush1.bf16.msra.mxu0 %v534
    %2159 = vmatprep.subr.bf16.mxu0 %v539
    %2160 = vmatpush1.bf16.msra.mxu0 %v538
    %2161 = vmatprep.subr.bf16.mxu0 0
    %2162 = vmatpush1.bf16.msra.mxu0 0
    %2163 = vmatprep.subr.bf16.mxu0 0
    %2164 = vmatpush1.bf16.msra.mxu0 0
    %2165 = vmatprep.subr.bf16.mxu0 0
    %2166 = vmatpush1.bf16.msra.mxu0 0
    %2167 = vmatprep.subr.bf16.mxu0 0
    %2168 = vmatpush1.bf16.msra.mxu0 0
    %2169 = vmatprep.subr.bf16.mxu0 0
    %2170 = vmatpush1.bf16.msra.mxu0 0
    %2171 = vmatprep.subr.bf16.mxu0 0
    %2172 = vmatpush1.bf16.msra.mxu0 0
    %2173 = vmatprep.subr.bf16.mxu0 0
    %2174 = vmatpush1.bf16.msra.mxu0 0
    %2175 = vmatprep.subr.bf16.mxu0 0
    %2176 = vmatpush1.bf16.msra.mxu0 0
    %2177 = vmatprep.mubr.bf16.mxu0 0
    %2178 = vmatmul.mubr.bf16.gmra.mrb[0].mxu0 %v2144
    %v2179 = vpop.f32.mrb[0].mxu0
    %v2180 = vadd.f32 0.0, %v2179
    %v2181 = vpop.f32.mrb[0].mxu0
    %v2182 = vadd.f32 0.0, %v2181
    %v2183 = vpop.f32.mrb[0].mxu0
    %v2184 = vpop.f32.mrb[0].mxu0
    %2185 = vdwg.mxu0
    %2186 = vmatprep.subr.bf16.mxu0 %v513
    %2187 = vmatpush1.bf16.msra.mxu0 %v512
    %2188 = vmatprep.subr.bf16.mxu0 %v517
    %2189 = vmatpush1.bf16.msra.mxu0 %v516
    %2190 = vmatprep.subr.bf16.mxu0 %v521
    %2191 = vmatpush1.bf16.msra.mxu0 %v520
    %2192 = vmatprep.subr.bf16.mxu0 %v525
    %2193 = vmatpush1.bf16.msra.mxu0 %v524
    %2194 = vmatprep.subr.bf16.mxu0 %v529
    %2195 = vmatpush1.bf16.msra.mxu0 %v528
    %2196 = vmatprep.subr.bf16.mxu0 %v533
    %2197 = vmatpush1.bf16.msra.mxu0 %v532
    %2198 = vmatprep.subr.bf16.mxu0 %v537
    %2199 = vmatpush1.bf16.msra.mxu0 %v536
    %2200 = vmatprep.subr.bf16.mxu0 %v541
    %2201 = vmatpush1.bf16.msra.mxu0 %v540
    %2202 = vmatprep.subr.bf16.mxu0 0
    %2203 = vmatpush1.bf16.msra.mxu0 0
    %2204 = vmatprep.subr.bf16.mxu0 0
    %2205 = vmatpush1.bf16.msra.mxu0 0
    %2206 = vmatprep.subr.bf16.mxu0 0
    %2207 = vmatpush1.bf16.msra.mxu0 0
    %2208 = vmatprep.subr.bf16.mxu0 0
    %2209 = vmatpush1.bf16.msra.mxu0 0
    %2210 = vmatprep.subr.bf16.mxu0 0
    %2211 = vmatpush1.bf16.msra.mxu0 0
    %2212 = vmatprep.subr.bf16.mxu0 0
    %2213 = vmatpush1.bf16.msra.mxu0 0
    %2214 = vmatprep.subr.bf16.mxu0 0
    %2215 = vmatpush1.bf16.msra.mxu0 0
    %2216 = vmatprep.subr.bf16.mxu0 0
    %2217 = vmatpush1.bf16.msra.mxu0 0
    %2218 = vmatprep.mubr.bf16.mxu0 0
    %2219 = vmatmul.mubr.bf16.gmra.mrb[0].mxu0 %v2144
    %v2220 = vpop.f32.mrb[0].mxu0
    %v2221 = vadd.f32 0.0, %v2220
    %v2222 = vpop.f32.mrb[0].mxu0
    %v2223 = vadd.f32 0.0, %v2222
    %v2224 = vpop.f32.mrb[0].mxu0
    %v2225 = vpop.f32.mrb[0].mxu0
    %2226 = vdwg.mxu0
    %v2227 = vadd.f32 %v209, %v2180
    %v2228 = vadd.f32 %v213, %v2182
    %v2229 = vadd.f32 %v217, %v2221
    %v2230 = vadd.f32 %v221, %v2223
    %v2231 = vpack.c.bf16 %v2030, %v2030
    %2232 = vmatprep.subr.bf16.mxu0 %v757
    %2233 = vmatpush1.bf16.msra.mxu0 %v756
    %2234 = vmatprep.subr.bf16.mxu0 %v761
    %2235 = vmatpush1.bf16.msra.mxu0 %v760
    %2236 = vmatprep.subr.bf16.mxu0 %v765
    %2237 = vmatpush1.bf16.msra.mxu0 %v764
    %2238 = vmatprep.subr.bf16.mxu0 %v769
    %2239 = vmatpush1.bf16.msra.mxu0 %v768
    %2240 = vmatprep.subr.bf16.mxu0 %v773
    %2241 = vmatpush1.bf16.msra.mxu0 %v772
    %2242 = vmatprep.subr.bf16.mxu0 %v777
    %2243 = vmatpush1.bf16.msra.mxu0 %v776
    %2244 = vmatprep.subr.bf16.mxu0 %v781
    %2245 = vmatpush1.bf16.msra.mxu0 %v780
    %2246 = vmatprep.subr.bf16.mxu0 %v785
    %2247 = vmatpush1.bf16.msra.mxu0 %v784
    %2248 = vmatprep.subr.bf16.mxu0 0
    %2249 = vmatpush1.bf16.msra.mxu0 0
    %2250 = vmatprep.subr.bf16.mxu0 0
    %2251 = vmatpush1.bf16.msra.mxu0 0
    %2252 = vmatprep.subr.bf16.mxu0 0
    %2253 = vmatpush1.bf16.msra.mxu0 0
    %2254 = vmatprep.subr.bf16.mxu0 0
    %2255 = vmatpush1.bf16.msra.mxu0 0
    %2256 = vmatprep.subr.bf16.mxu0 0
    %2257 = vmatpush1.bf16.msra.mxu0 0
    %2258 = vmatprep.subr.bf16.mxu0 0
    %2259 = vmatpush1.bf16.msra.mxu0 0
    %2260 = vmatprep.subr.bf16.mxu0 0
    %2261 = vmatpush1.bf16.msra.mxu0 0
    %2262 = vmatprep.subr.bf16.mxu0 0
    %2263 = vmatpush1.bf16.msra.mxu0 0
    %2264 = vmatprep.mubr.bf16.mxu0 0
    %2265 = vmatmul.mubr.bf16.gmra.mrb[0].mxu0 %v2231
    %v2266 = vpop.f32.mrb[0].mxu0
    %v2267 = vadd.f32 0.0, %v2266
    %v2268 = vpop.f32.mrb[0].mxu0
    %v2269 = vadd.f32 0.0, %v2268
    %v2270 = vpop.f32.mrb[0].mxu0
    %v2271 = vpop.f32.mrb[0].mxu0
    %2272 = vdwg.mxu0
    %2273 = vmatprep.subr.bf16.mxu0 %v759
    %2274 = vmatpush1.bf16.msra.mxu0 %v758
    %2275 = vmatprep.subr.bf16.mxu0 %v763
    %2276 = vmatpush1.bf16.msra.mxu0 %v762
    %2277 = vmatprep.subr.bf16.mxu0 %v767
    %2278 = vmatpush1.bf16.msra.mxu0 %v766
    %2279 = vmatprep.subr.bf16.mxu0 %v771
    %2280 = vmatpush1.bf16.msra.mxu0 %v770
    %2281 = vmatprep.subr.bf16.mxu0 %v775
    %2282 = vmatpush1.bf16.msra.mxu0 %v774
    %2283 = vmatprep.subr.bf16.mxu0 %v779
    %2284 = vmatpush1.bf16.msra.mxu0 %v778
    %2285 = vmatprep.subr.bf16.mxu0 %v783
    %2286 = vmatpush1.bf16.msra.mxu0 %v782
    %2287 = vmatprep.subr.bf16.mxu0 %v787
    %2288 = vmatpush1.bf16.msra.mxu0 %v786
    %2289 = vmatprep.subr.bf16.mxu0 0
    %2290 = vmatpush1.bf16.msra.mxu0 0
    %2291 = vmatprep.subr.bf16.mxu0 0
    %2292 = vmatpush1.bf16.msra.mxu0 0
    %2293 = vmatprep.subr.bf16.mxu0 0
    %2294 = vmatpush1.bf16.msra.mxu0 0
    %2295 = vmatprep.subr.bf16.mxu0 0
    %2296 = vmatpush1.bf16.msra.mxu0 0
    %2297 = vmatprep.subr.bf16.mxu0 0
    %2298 = vmatpush1.bf16.msra.mxu0 0
    %2299 = vmatprep.subr.bf16.mxu0 0
    %2300 = vmatpush1.bf16.msra.mxu0 0
    %2301 = vmatprep.subr.bf16.mxu0 0
    %2302 = vmatpush1.bf16.msra.mxu0 0
    %2303 = vmatprep.subr.bf16.mxu0 0
    %2304 = vmatpush1.bf16.msra.mxu0 0
    %2305 = vmatprep.mubr.bf16.mxu0 0
    %2306 = vmatmul.mubr.bf16.gmra.mrb[0].mxu0 %v2231
    %v2307 = vpop.f32.mrb[0].mxu0
    %v2308 = vadd.f32 0.0, %v2307
    %v2309 = vpop.f32.mrb[0].mxu0
    %v2310 = vadd.f32 0.0, %v2309
    %v2311 = vpop.f32.mrb[0].mxu0
    %v2312 = vpop.f32.mrb[0].mxu0
    %2313 = vdwg.mxu0
    %v2314 = vadd.f32 %v365, %v2267
    %v2315 = vadd.f32 %v366, %v2269
    %v2316 = vadd.f32 %v367, %v2308
    %v2317 = vadd.f32 %v368, %v2310
    %v2318 = vxor.u32 %v2314, 2147483648
    %v2319 = vxor.u32 %v2315, 2147483648
    %v2320 = vxor.u32 %v2316, 2147483648
    %v2321 = vmul.f32 %v2318, 1.442695
    %v2322 = vpow.pop %v2321
    %v2323 = vmul.f32 %v2319, 1.442695
    %v2324 = vpow.pop %v2323
    %v2325 = vmul.f32 %v2320, 1.442695
    %v2326 = vpow.pop %v2325
    %v2327 = vadd.f32 %v2322, 1.0
    %v2328 = vadd.f32 %v2324, 1.0
    %v2329 = vadd.f32 %v2326, 1.0
    %v2330 = vrcp.pop %v2327
    %v2331 = vmul.f32 1.0, %v2330
    %v2332 = vrcp.pop %v2328
    %v2333 = vmul.f32 1.0, %v2332
    %v2334 = vrcp.pop %v2329
    %v2335 = vmul.f32 1.0, %v2334
    %v2336 = vtanh.pop %v2317
    %v2337 = vmul.f32 %v2333, %v2029
    %v2338 = vmul.f32 %v2331, %v2336
    %v2339 = vadd.f32 %v2337, %v2338
    %v2340 = vtanh.pop %v2339
    %v2341 = vmul.f32 %v2335, %v2340
    %v2342 = vsel %vm255, %v2339, %v2029
    %v2343 = vsel %vm255, %v2341, %v2030
    %v2344 = vpack.c.bf16 %v2341, %v2341
    %2345 = vmatprep.subr.bf16.mxu0 %v1030
    %2346 = vmatpush1.bf16.msra.mxu0 %v1029
    %2347 = vmatprep.subr.bf16.mxu0 %v1034
    %2348 = vmatpush1.bf16.msra.mxu0 %v1033
    %2349 = vmatprep.subr.bf16.mxu0 %v1038
    %2350 = vmatpush1.bf16.msra.mxu0 %v1037
    %2351 = vmatprep.subr.bf16.mxu0 %v1042
    %2352 = vmatpush1.bf16.msra.mxu0 %v1041
    %2353 = vmatprep.subr.bf16.mxu0 %v1046
    %2354 = vmatpush1.bf16.msra.mxu0 %v1045
    %2355 = vmatprep.subr.bf16.mxu0 %v1050
    %2356 = vmatpush1.bf16.msra.mxu0 %v1049
    %2357 = vmatprep.subr.bf16.mxu0 %v1054
    %2358 = vmatpush1.bf16.msra.mxu0 %v1053
    %2359 = vmatprep.subr.bf16.mxu0 %v1058
    %2360 = vmatpush1.bf16.msra.mxu0 %v1057
    %2361 = vmatprep.subr.bf16.mxu0 0
    %2362 = vmatpush1.bf16.msra.mxu0 0
    %2363 = vmatprep.subr.bf16.mxu0 0
    %2364 = vmatpush1.bf16.msra.mxu0 0
    %2365 = vmatprep.subr.bf16.mxu0 0
    %2366 = vmatpush1.bf16.msra.mxu0 0
    %2367 = vmatprep.subr.bf16.mxu0 0
    %2368 = vmatpush1.bf16.msra.mxu0 0
    %2369 = vmatprep.subr.bf16.mxu0 0
    %2370 = vmatpush1.bf16.msra.mxu0 0
    %2371 = vmatprep.subr.bf16.mxu0 0
    %2372 = vmatpush1.bf16.msra.mxu0 0
    %2373 = vmatprep.subr.bf16.mxu0 0
    %2374 = vmatpush1.bf16.msra.mxu0 0
    %2375 = vmatprep.subr.bf16.mxu0 0
    %2376 = vmatpush1.bf16.msra.mxu0 0
    %2377 = vmatprep.mubr.bf16.mxu0 0
    %2378 = vmatmul.mubr.bf16.gmra.mrb[0].mxu0 %v2344
    %v2379 = vpop.f32.mrb[0].mxu0
    %v2380 = vadd.f32 0.0, %v2379
    %v2381 = vpop.f32.mrb[0].mxu0
    %v2382 = vadd.f32 0.0, %v2381
    %v2383 = vpop.f32.mrb[0].mxu0
    %v2384 = vpop.f32.mrb[0].mxu0
    %2385 = vdwg.mxu0
    %2386 = vmatprep.subr.bf16.mxu0 %v1032
    %2387 = vmatpush1.bf16.msra.mxu0 %v1031
    %2388 = vmatprep.subr.bf16.mxu0 %v1036
    %2389 = vmatpush1.bf16.msra.mxu0 %v1035
    %2390 = vmatprep.subr.bf16.mxu0 %v1040
    %2391 = vmatpush1.bf16.msra.mxu0 %v1039
    %2392 = vmatprep.subr.bf16.mxu0 %v1044
    %2393 = vmatpush1.bf16.msra.mxu0 %v1043
    %2394 = vmatprep.subr.bf16.mxu0 %v1048
    %2395 = vmatpush1.bf16.msra.mxu0 %v1047
    %2396 = vmatprep.subr.bf16.mxu0 %v1052
    %2397 = vmatpush1.bf16.msra.mxu0 %v1051
    %2398 = vmatprep.subr.bf16.mxu0 %v1056
    %2399 = vmatpush1.bf16.msra.mxu0 %v1055
    %2400 = vmatprep.subr.bf16.mxu0 %v1060
    %2401 = vmatpush1.bf16.msra.mxu0 %v1059
    %2402 = vmatprep.subr.bf16.mxu0 0
    %2403 = vmatpush1.bf16.msra.mxu0 0
    %2404 = vmatprep.subr.bf16.mxu0 0
    %2405 = vmatpush1.bf16.msra.mxu0 0
    %2406 = vmatprep.subr.bf16.mxu0 0
    %2407 = vmatpush1.bf16.msra.mxu0 0
    %2408 = vmatprep.subr.bf16.mxu0 0
    %2409 = vmatpush1.bf16.msra.mxu0 0
    %2410 = vmatprep.subr.bf16.mxu0 0
    %2411 = vmatpush1.bf16.msra.mxu0 0
    %2412 = vmatprep.subr.bf16.mxu0 0
    %2413 = vmatpush1.bf16.msra.mxu0 0
    %2414 = vmatprep.subr.bf16.mxu0 0
    %2415 = vmatpush1.bf16.msra.mxu0 0
    %2416 = vmatprep.subr.bf16.mxu0 0
    %2417 = vmatpush1.bf16.msra.mxu0 0
    %2418 = vmatprep.mubr.bf16.mxu0 0
    %2419 = vmatmul.mubr.bf16.gmra.mrb[0].mxu0 %v2344
    %v2420 = vpop.f32.mrb[0].mxu0
    %v2421 = vadd.f32 0.0, %v2420
    %v2422 = vpop.f32.mrb[0].mxu0
    %v2423 = vadd.f32 0.0, %v2422
    %v2424 = vpop.f32.mrb[0].mxu0
    %v2425 = vpop.f32.mrb[0].mxu0
    %2426 = vdwg.mxu0
    %v2427 = vadd.f32 %v2227, %v2380
    %v2428 = vadd.f32 %v2228, %v2382
    %v2429 = vadd.f32 %v2229, %v2421
    %v2430 = vadd.f32 %v2230, %v2423
    %v2431 = vxor.u32 %v2427, 2147483648
    %v2432 = vxor.u32 %v2428, 2147483648
    %v2433 = vxor.u32 %v2429, 2147483648
    %v2434 = vmul.f32 %v2431, 1.442695
    %v2435 = vpow.pop %v2434
    %v2436 = vmul.f32 %v2432, 1.442695
    %v2437 = vpow.pop %v2436
    %v2438 = vmul.f32 %v2433, 1.442695
    %v2439 = vpow.pop %v2438
    %v2440 = vadd.f32 %v2435, 1.0
    %v2441 = vadd.f32 %v2437, 1.0
    %v2442 = vadd.f32 %v2439, 1.0
    %v2443 = vrcp.pop %v2440
    %v2444 = vmul.f32 1.0, %v2443
    %v2445 = vrcp.pop %v2441
    %v2446 = vmul.f32 1.0, %v2445
    %v2447 = vrcp.pop %v2442
    %v2448 = vmul.f32 1.0, %v2447
    %v2449 = vtanh.pop %v2430
    %v2450 = vmul.f32 %v2446, %v2142
    %v2451 = vmul.f32 %v2444, %v2449
    %v2452 = vadd.f32 %v2450, %v2451
    %v2453 = vtanh.pop %v2452
    %v2454 = vmul.f32 %v2448, %v2453
    %v2455 = vsel %vm255, %v2452, %v2142
    %v2456 = vsel %vm255, %v2454, %v2143
    %v2457 = vpack.c.bf16 %v2456, %v2456
    %2458 = vmatprep.subr.bf16.mxu0 %v511
    %2459 = vmatpush1.bf16.msra.mxu0 %v510
    %2460 = vmatprep.subr.bf16.mxu0 %v515
    %2461 = vmatpush1.bf16.msra.mxu0 %v514
    %2462 = vmatprep.subr.bf16.mxu0 %v519
    %2463 = vmatpush1.bf16.msra.mxu0 %v518
    %2464 = vmatprep.subr.bf16.mxu0 %v523
    %2465 = vmatpush1.bf16.msra.mxu0 %v522
    %2466 = vmatprep.subr.bf16.mxu0 %v527
    %2467 = vmatpush1.bf16.msra.mxu0 %v526
    %2468 = vmatprep.subr.bf16.mxu0 %v531
    %2469 = vmatpush1.bf16.msra.mxu0 %v530
    %2470 = vmatprep.subr.bf16.mxu0 %v535
    %2471 = vmatpush1.bf16.msra.mxu0 %v534
    %2472 = vmatprep.subr.bf16.mxu0 %v539
    %2473 = vmatpush1.bf16.msra.mxu0 %v538
    %2474 = vmatprep.subr.bf16.mxu0 0
    %2475 = vmatpush1.bf16.msra.mxu0 0
    %2476 = vmatprep.subr.bf16.mxu0 0
    %2477 = vmatpush1.bf16.msra.mxu0 0
    %2478 = vmatprep.subr.bf16.mxu0 0
    %2479 = vmatpush1.bf16.msra.mxu0 0
    %2480 = vmatprep.subr.bf16.mxu0 0
    %2481 = vmatpush1.bf16.msra.mxu0 0
    %2482 = vmatprep.subr.bf16.mxu0 0
    %2483 = vmatpush1.bf16.msra.mxu0 0
    %2484 = vmatprep.subr.bf16.mxu0 0
    %2485 = vmatpush1.bf16.msra.mxu0 0
    %2486 = vmatprep.subr.bf16.mxu0 0
    %2487 = vmatpush1.bf16.msra.mxu0 0
    %2488 = vmatprep.subr.bf16.mxu0 0
    %2489 = vmatpush1.bf16.msra.mxu0 0
    %2490 = vmatprep.mubr.bf16.mxu0 0
    %2491 = vmatmul.mubr.bf16.gmra.mrb[0].mxu0 %v2457
    %v2492 = vpop.f32.mrb[0].mxu0
    %v2493 = vadd.f32 0.0, %v2492
    %v2494 = vpop.f32.mrb[0].mxu0
    %v2495 = vadd.f32 0.0, %v2494
    %v2496 = vpop.f32.mrb[0].mxu0
    %v2497 = vpop.f32.mrb[0].mxu0
    %2498 = vdwg.mxu0
    %2499 = vmatprep.subr.bf16.mxu0 %v513
    %2500 = vmatpush1.bf16.msra.mxu0 %v512
    %2501 = vmatprep.subr.bf16.mxu0 %v517
    %2502 = vmatpush1.bf16.msra.mxu0 %v516
    %2503 = vmatprep.subr.bf16.mxu0 %v521
    %2504 = vmatpush1.bf16.msra.mxu0 %v520
    %2505 = vmatprep.subr.bf16.mxu0 %v525
    %2506 = vmatpush1.bf16.msra.mxu0 %v524
    %2507 = vmatprep.subr.bf16.mxu0 %v529
    %2508 = vmatpush1.bf16.msra.mxu0 %v528
    %2509 = vmatprep.subr.bf16.mxu0 %v533
    %2510 = vmatpush1.bf16.msra.mxu0 %v532
    %2511 = vmatprep.subr.bf16.mxu0 %v537
    %2512 = vmatpush1.bf16.msra.mxu0 %v536
    %2513 = vmatprep.subr.bf16.mxu0 %v541
    %2514 = vmatpush1.bf16.msra.mxu0 %v540
    %2515 = vmatprep.subr.bf16.mxu0 0
    %2516 = vmatpush1.bf16.msra.mxu0 0
    %2517 = vmatprep.subr.bf16.mxu0 0
    %2518 = vmatpush1.bf16.msra.mxu0 0
    %2519 = vmatprep.subr.bf16.mxu0 0
    %2520 = vmatpush1.bf16.msra.mxu0 0
    %2521 = vmatprep.subr.bf16.mxu0 0
    %2522 = vmatpush1.bf16.msra.mxu0 0
    %2523 = vmatprep.subr.bf16.mxu0 0
    %2524 = vmatpush1.bf16.msra.mxu0 0
    %2525 = vmatprep.subr.bf16.mxu0 0
    %2526 = vmatpush1.bf16.msra.mxu0 0
    %2527 = vmatprep.subr.bf16.mxu0 0
    %2528 = vmatpush1.bf16.msra.mxu0 0
    %2529 = vmatprep.subr.bf16.mxu0 0
    %2530 = vmatpush1.bf16.msra.mxu0 0
    %2531 = vmatprep.mubr.bf16.mxu0 0
    %2532 = vmatmul.mubr.bf16.gmra.mrb[0].mxu0 %v2457
    %v2533 = vpop.f32.mrb[0].mxu0
    %v2534 = vadd.f32 0.0, %v2533
    %v2535 = vpop.f32.mrb[0].mxu0
    %v2536 = vadd.f32 0.0, %v2535
    %v2537 = vpop.f32.mrb[0].mxu0
    %v2538 = vpop.f32.mrb[0].mxu0
    %2539 = vdwg.mxu0
    %v2540 = vadd.f32 %v209, %v2493
    %v2541 = vadd.f32 %v213, %v2495
    %v2542 = vadd.f32 %v217, %v2534
    %v2543 = vadd.f32 %v221, %v2536
    %v2544 = vpack.c.bf16 %v2343, %v2343
    %2545 = vmatprep.subr.bf16.mxu0 %v757
    %2546 = vmatpush1.bf16.msra.mxu0 %v756
    %2547 = vmatprep.subr.bf16.mxu0 %v761
    %2548 = vmatpush1.bf16.msra.mxu0 %v760
    %2549 = vmatprep.subr.bf16.mxu0 %v765
    %2550 = vmatpush1.bf16.msra.mxu0 %v764
    %2551 = vmatprep.subr.bf16.mxu0 %v769
    %2552 = vmatpush1.bf16.msra.mxu0 %v768
    %2553 = vmatprep.subr.bf16.mxu0 %v773
    %2554 = vmatpush1.bf16.msra.mxu0 %v772
    %2555 = vmatprep.subr.bf16.mxu0 %v777
    %2556 = vmatpush1.bf16.msra.mxu0 %v776
    %2557 = vmatprep.subr.bf16.mxu0 %v781
    %2558 = vmatpush1.bf16.msra.mxu0 %v780
    %2559 = vmatprep.subr.bf16.mxu0 %v785
    %2560 = vmatpush1.bf16.msra.mxu0 %v784
    %2561 = vmatprep.subr.bf16.mxu0 0
    %2562 = vmatpush1.bf16.msra.mxu0 0
    %2563 = vmatprep.subr.bf16.mxu0 0
    %2564 = vmatpush1.bf16.msra.mxu0 0
    %2565 = vmatprep.subr.bf16.mxu0 0
    %2566 = vmatpush1.bf16.msra.mxu0 0
    %2567 = vmatprep.subr.bf16.mxu0 0
    %2568 = vmatpush1.bf16.msra.mxu0 0
    %2569 = vmatprep.subr.bf16.mxu0 0
    %2570 = vmatpush1.bf16.msra.mxu0 0
    %2571 = vmatprep.subr.bf16.mxu0 0
    %2572 = vmatpush1.bf16.msra.mxu0 0
    %2573 = vmatprep.subr.bf16.mxu0 0
    %2574 = vmatpush1.bf16.msra.mxu0 0
    %2575 = vmatprep.subr.bf16.mxu0 0
    %2576 = vmatpush1.bf16.msra.mxu0 0
    %2577 = vmatprep.mubr.bf16.mxu0 0
    %2578 = vmatmul.mubr.bf16.gmra.mrb[0].mxu0 %v2544
    %v2579 = vpop.f32.mrb[0].mxu0
    %v2580 = vadd.f32 0.0, %v2579
    %v2581 = vpop.f32.mrb[0].mxu0
    %v2582 = vadd.f32 0.0, %v2581
    %v2583 = vpop.f32.mrb[0].mxu0
    %v2584 = vpop.f32.mrb[0].mxu0
    %2585 = vdwg.mxu0
    %2586 = vmatprep.subr.bf16.mxu0 %v759
    %2587 = vmatpush1.bf16.msra.mxu0 %v758
    %2588 = vmatprep.subr.bf16.mxu0 %v763
    %2589 = vmatpush1.bf16.msra.mxu0 %v762
    %2590 = vmatprep.subr.bf16.mxu0 %v767
    %2591 = vmatpush1.bf16.msra.mxu0 %v766
    %2592 = vmatprep.subr.bf16.mxu0 %v771
    %2593 = vmatpush1.bf16.msra.mxu0 %v770
    %2594 = vmatprep.subr.bf16.mxu0 %v775
    %2595 = vmatpush1.bf16.msra.mxu0 %v774
    %2596 = vmatprep.subr.bf16.mxu0 %v779
    %2597 = vmatpush1.bf16.msra.mxu0 %v778
    %2598 = vmatprep.subr.bf16.mxu0 %v783
    %2599 = vmatpush1.bf16.msra.mxu0 %v782
    %2600 = vmatprep.subr.bf16.mxu0 %v787
    %2601 = vmatpush1.bf16.msra.mxu0 %v786
    %2602 = vmatprep.subr.bf16.mxu0 0
    %2603 = vmatpush1.bf16.msra.mxu0 0
    %2604 = vmatprep.subr.bf16.mxu0 0
    %2605 = vmatpush1.bf16.msra.mxu0 0
    %2606 = vmatprep.subr.bf16.mxu0 0
    %2607 = vmatpush1.bf16.msra.mxu0 0
    %2608 = vmatprep.subr.bf16.mxu0 0
    %2609 = vmatpush1.bf16.msra.mxu0 0
    %2610 = vmatprep.subr.bf16.mxu0 0
    %2611 = vmatpush1.bf16.msra.mxu0 0
    %2612 = vmatprep.subr.bf16.mxu0 0
    %2613 = vmatpush1.bf16.msra.mxu0 0
    %2614 = vmatprep.subr.bf16.mxu0 0
    %2615 = vmatpush1.bf16.msra.mxu0 0
    %2616 = vmatprep.subr.bf16.mxu0 0
    %2617 = vmatpush1.bf16.msra.mxu0 0
    %2618 = vmatprep.mubr.bf16.mxu0 0
    %2619 = vmatmul.mubr.bf16.gmra.mrb[0].mxu0 %v2544
    %v2620 = vpop.f32.mrb[0].mxu0
    %v2621 = vadd.f32 0.0, %v2620
    %v2622 = vpop.f32.mrb[0].mxu0
    %v2623 = vadd.f32 0.0, %v2622
    %v2624 = vpop.f32.mrb[0].mxu0
    %v2625 = vpop.f32.mrb[0].mxu0
    %2626 = vdwg.mxu0
    %v2627 = vadd.f32 %v380, %v2580
    %v2628 = vadd.f32 %v381, %v2582
    %v2629 = vadd.f32 %v382, %v2621
    %v2630 = vadd.f32 %v383, %v2623
    %v2631 = vxor.u32 %v2627, 2147483648
    %v2632 = vxor.u32 %v2628, 2147483648
    %v2633 = vxor.u32 %v2629, 2147483648
    %v2634 = vmul.f32 %v2631, 1.442695
    %v2635 = vpow.pop %v2634
    %v2636 = vmul.f32 %v2632, 1.442695
    %v2637 = vpow.pop %v2636
    %v2638 = vmul.f32 %v2633, 1.442695
    %v2639 = vpow.pop %v2638
    %v2640 = vadd.f32 %v2635, 1.0
    %v2641 = vadd.f32 %v2637, 1.0
    %v2642 = vadd.f32 %v2639, 1.0
    %v2643 = vrcp.pop %v2640
    %v2644 = vmul.f32 1.0, %v2643
    %v2645 = vrcp.pop %v2641
    %v2646 = vmul.f32 1.0, %v2645
    %v2647 = vrcp.pop %v2642
    %v2648 = vmul.f32 1.0, %v2647
    %v2649 = vtanh.pop %v2630
    %v2650 = vmul.f32 %v2646, %v2342
    %v2651 = vmul.f32 %v2644, %v2649
    %v2652 = vadd.f32 %v2650, %v2651
    %v2653 = vtanh.pop %v2652
    %v2654 = vmul.f32 %v2648, %v2653
    %v2655 = vsel %vm261, %v2652, %v2342
    %v2656 = vsel %vm261, %v2654, %v2343
    %v2657 = vpack.c.bf16 %v2654, %v2654
    %2658 = vmatprep.subr.bf16.mxu0 %v1030
    %2659 = vmatpush1.bf16.msra.mxu0 %v1029
    %2660 = vmatprep.subr.bf16.mxu0 %v1034
    %2661 = vmatpush1.bf16.msra.mxu0 %v1033
    %2662 = vmatprep.subr.bf16.mxu0 %v1038
    %2663 = vmatpush1.bf16.msra.mxu0 %v1037
    %2664 = vmatprep.subr.bf16.mxu0 %v1042
    %2665 = vmatpush1.bf16.msra.mxu0 %v1041
    %2666 = vmatprep.subr.bf16.mxu0 %v1046
    %2667 = vmatpush1.bf16.msra.mxu0 %v1045
    %2668 = vmatprep.subr.bf16.mxu0 %v1050
    %2669 = vmatpush1.bf16.msra.mxu0 %v1049
    %2670 = vmatprep.subr.bf16.mxu0 %v1054
    %2671 = vmatpush1.bf16.msra.mxu0 %v1053
    %2672 = vmatprep.subr.bf16.mxu0 %v1058
    %2673 = vmatpush1.bf16.msra.mxu0 %v1057
    %2674 = vmatprep.subr.bf16.mxu0 0
    %2675 = vmatpush1.bf16.msra.mxu0 0
    %2676 = vmatprep.subr.bf16.mxu0 0
    %2677 = vmatpush1.bf16.msra.mxu0 0
    %2678 = vmatprep.subr.bf16.mxu0 0
    %2679 = vmatpush1.bf16.msra.mxu0 0
    %2680 = vmatprep.subr.bf16.mxu0 0
    %2681 = vmatpush1.bf16.msra.mxu0 0
    %2682 = vmatprep.subr.bf16.mxu0 0
    %2683 = vmatpush1.bf16.msra.mxu0 0
    %2684 = vmatprep.subr.bf16.mxu0 0
    %2685 = vmatpush1.bf16.msra.mxu0 0
    %2686 = vmatprep.subr.bf16.mxu0 0
    %2687 = vmatpush1.bf16.msra.mxu0 0
    %2688 = vmatprep.subr.bf16.mxu0 0
    %2689 = vmatpush1.bf16.msra.mxu0 0
    %2690 = vmatprep.mubr.bf16.mxu0 0
    %2691 = vmatmul.mubr.bf16.gmra.mrb[0].mxu0 %v2657
    %v2692 = vpop.f32.mrb[0].mxu0
    %v2693 = vadd.f32 0.0, %v2692
    %v2694 = vpop.f32.mrb[0].mxu0
    %v2695 = vadd.f32 0.0, %v2694
    %v2696 = vpop.f32.mrb[0].mxu0
    %v2697 = vpop.f32.mrb[0].mxu0
    %2698 = vdwg.mxu0
    %2699 = vmatprep.subr.bf16.mxu0 %v1032
    %2700 = vmatpush1.bf16.msra.mxu0 %v1031
    %2701 = vmatprep.subr.bf16.mxu0 %v1036
    %2702 = vmatpush1.bf16.msra.mxu0 %v1035
    %2703 = vmatprep.subr.bf16.mxu0 %v1040
    %2704 = vmatpush1.bf16.msra.mxu0 %v1039
    %2705 = vmatprep.subr.bf16.mxu0 %v1044
    %2706 = vmatpush1.bf16.msra.mxu0 %v1043
    %2707 = vmatprep.subr.bf16.mxu0 %v1048
    %2708 = vmatpush1.bf16.msra.mxu0 %v1047
    %2709 = vmatprep.subr.bf16.mxu0 %v1052
    %2710 = vmatpush1.bf16.msra.mxu0 %v1051
    %2711 = vmatprep.subr.bf16.mxu0 %v1056
    %2712 = vmatpush1.bf16.msra.mxu0 %v1055
    %2713 = vmatprep.subr.bf16.mxu0 %v1060
    %2714 = vmatpush1.bf16.msra.mxu0 %v1059
    %2715 = vmatprep.subr.bf16.mxu0 0
    %2716 = vmatpush1.bf16.msra.mxu0 0
    %2717 = vmatprep.subr.bf16.mxu0 0
    %2718 = vmatpush1.bf16.msra.mxu0 0
    %2719 = vmatprep.subr.bf16.mxu0 0
    %2720 = vmatpush1.bf16.msra.mxu0 0
    %2721 = vmatprep.subr.bf16.mxu0 0
    %2722 = vmatpush1.bf16.msra.mxu0 0
    %2723 = vmatprep.subr.bf16.mxu0 0
    %2724 = vmatpush1.bf16.msra.mxu0 0
    %2725 = vmatprep.subr.bf16.mxu0 0
    %2726 = vmatpush1.bf16.msra.mxu0 0
    %2727 = vmatprep.subr.bf16.mxu0 0
    %2728 = vmatpush1.bf16.msra.mxu0 0
    %2729 = vmatprep.subr.bf16.mxu0 0
    %2730 = vmatpush1.bf16.msra.mxu0 0
    %2731 = vmatprep.mubr.bf16.mxu0 0
    %2732 = vmatmul.mubr.bf16.gmra.mrb[0].mxu0 %v2657
    %v2733 = vpop.f32.mrb[0].mxu0
    %v2734 = vadd.f32 0.0, %v2733
    %v2735 = vpop.f32.mrb[0].mxu0
    %v2736 = vadd.f32 0.0, %v2735
    %v2737 = vpop.f32.mrb[0].mxu0
    %v2738 = vpop.f32.mrb[0].mxu0
    %2739 = vdwg.mxu0
    %v2740 = vadd.f32 %v2540, %v2693
    %v2741 = vadd.f32 %v2541, %v2695
    %v2742 = vadd.f32 %v2542, %v2734
    %v2743 = vadd.f32 %v2543, %v2736
    %v2744 = vxor.u32 %v2740, 2147483648
    %v2745 = vxor.u32 %v2741, 2147483648
    %v2746 = vxor.u32 %v2742, 2147483648
    %v2747 = vmul.f32 %v2744, 1.442695
    %v2748 = vpow.pop %v2747
    %v2749 = vmul.f32 %v2745, 1.442695
    %v2750 = vpow.pop %v2749
    %v2751 = vmul.f32 %v2746, 1.442695
    %v2752 = vpow.pop %v2751
    %v2753 = vadd.f32 %v2748, 1.0
    %v2754 = vadd.f32 %v2750, 1.0
    %v2755 = vadd.f32 %v2752, 1.0
    %v2756 = vrcp.pop %v2753
    %v2757 = vmul.f32 1.0, %v2756
    %v2758 = vrcp.pop %v2754
    %v2759 = vmul.f32 1.0, %v2758
    %v2760 = vrcp.pop %v2755
    %v2761 = vmul.f32 1.0, %v2760
    %v2762 = vtanh.pop %v2743
    %v2763 = vmul.f32 %v2759, %v2455
    %v2764 = vmul.f32 %v2757, %v2762
    %v2765 = vadd.f32 %v2763, %v2764
    %v2766 = vtanh.pop %v2765
    %v2767 = vmul.f32 %v2761, %v2766
    %v2768 = vsel %vm261, %v2765, %v2455
    %v2769 = vsel %vm261, %v2767, %v2456
    %v2770 = vpack.c.bf16 %v2769, %v2769
    %2771 = vmatprep.subr.bf16.mxu0 %v511
    %2772 = vmatpush1.bf16.msra.mxu0 %v510
    %2773 = vmatprep.subr.bf16.mxu0 %v515
    %2774 = vmatpush1.bf16.msra.mxu0 %v514
    %2775 = vmatprep.subr.bf16.mxu0 %v519
    %2776 = vmatpush1.bf16.msra.mxu0 %v518
    %2777 = vmatprep.subr.bf16.mxu0 %v523
    %2778 = vmatpush1.bf16.msra.mxu0 %v522
    %2779 = vmatprep.subr.bf16.mxu0 %v527
    %2780 = vmatpush1.bf16.msra.mxu0 %v526
    %2781 = vmatprep.subr.bf16.mxu0 %v531
    %2782 = vmatpush1.bf16.msra.mxu0 %v530
    %2783 = vmatprep.subr.bf16.mxu0 %v535
    %2784 = vmatpush1.bf16.msra.mxu0 %v534
    %2785 = vmatprep.subr.bf16.mxu0 %v539
    %2786 = vmatpush1.bf16.msra.mxu0 %v538
    %2787 = vmatprep.subr.bf16.mxu0 0
    %2788 = vmatpush1.bf16.msra.mxu0 0
    %2789 = vmatprep.subr.bf16.mxu0 0
    %2790 = vmatpush1.bf16.msra.mxu0 0
    %2791 = vmatprep.subr.bf16.mxu0 0
    %2792 = vmatpush1.bf16.msra.mxu0 0
    %2793 = vmatprep.subr.bf16.mxu0 0
    %2794 = vmatpush1.bf16.msra.mxu0 0
    %2795 = vmatprep.subr.bf16.mxu0 0
    %2796 = vmatpush1.bf16.msra.mxu0 0
    %2797 = vmatprep.subr.bf16.mxu0 0
    %2798 = vmatpush1.bf16.msra.mxu0 0
    %2799 = vmatprep.subr.bf16.mxu0 0
    %2800 = vmatpush1.bf16.msra.mxu0 0
    %2801 = vmatprep.subr.bf16.mxu0 0
    %2802 = vmatpush1.bf16.msra.mxu0 0
    %2803 = vmatprep.mubr.bf16.mxu0 0
    %2804 = vmatmul.mubr.bf16.gmra.mrb[0].mxu0 %v2770
    %v2805 = vpop.f32.mrb[0].mxu0
    %v2806 = vadd.f32 0.0, %v2805
    %v2807 = vpop.f32.mrb[0].mxu0
    %v2808 = vadd.f32 0.0, %v2807
    %v2809 = vpop.f32.mrb[0].mxu0
    %v2810 = vpop.f32.mrb[0].mxu0
    %2811 = vdwg.mxu0
    %2812 = vmatprep.subr.bf16.mxu0 %v513
    %2813 = vmatpush1.bf16.msra.mxu0 %v512
    %2814 = vmatprep.subr.bf16.mxu0 %v517
    %2815 = vmatpush1.bf16.msra.mxu0 %v516
    %2816 = vmatprep.subr.bf16.mxu0 %v521
    %2817 = vmatpush1.bf16.msra.mxu0 %v520
    %2818 = vmatprep.subr.bf16.mxu0 %v525
    %2819 = vmatpush1.bf16.msra.mxu0 %v524
    %2820 = vmatprep.subr.bf16.mxu0 %v529
    %2821 = vmatpush1.bf16.msra.mxu0 %v528
    %2822 = vmatprep.subr.bf16.mxu0 %v533
    %2823 = vmatpush1.bf16.msra.mxu0 %v532
    %2824 = vmatprep.subr.bf16.mxu0 %v537
    %2825 = vmatpush1.bf16.msra.mxu0 %v536
    %2826 = vmatprep.subr.bf16.mxu0 %v541
    %2827 = vmatpush1.bf16.msra.mxu0 %v540
    %2828 = vmatprep.subr.bf16.mxu0 0
    %2829 = vmatpush1.bf16.msra.mxu0 0
    %2830 = vmatprep.subr.bf16.mxu0 0
    %2831 = vmatpush1.bf16.msra.mxu0 0
    %2832 = vmatprep.subr.bf16.mxu0 0
    %2833 = vmatpush1.bf16.msra.mxu0 0
    %2834 = vmatprep.subr.bf16.mxu0 0
    %2835 = vmatpush1.bf16.msra.mxu0 0
    %2836 = vmatprep.subr.bf16.mxu0 0
    %2837 = vmatpush1.bf16.msra.mxu0 0
    %2838 = vmatprep.subr.bf16.mxu0 0
    %2839 = vmatpush1.bf16.msra.mxu0 0
    %2840 = vmatprep.subr.bf16.mxu0 0
    %2841 = vmatpush1.bf16.msra.mxu0 0
    %2842 = vmatprep.subr.bf16.mxu0 0
    %2843 = vmatpush1.bf16.msra.mxu0 0
    %2844 = vmatprep.mubr.bf16.mxu0 0
    %2845 = vmatmul.mubr.bf16.gmra.mrb[0].mxu0 %v2770
    %v2846 = vpop.f32.mrb[0].mxu0
    %v2847 = vadd.f32 0.0, %v2846
    %v2848 = vpop.f32.mrb[0].mxu0
    %v2849 = vadd.f32 0.0, %v2848
    %v2850 = vpop.f32.mrb[0].mxu0
    %v2851 = vpop.f32.mrb[0].mxu0
    %2852 = vdwg.mxu0
    %v2853 = vadd.f32 %v209, %v2806
    %v2854 = vadd.f32 %v213, %v2808
    %v2855 = vadd.f32 %v217, %v2847
    %v2856 = vadd.f32 %v221, %v2849
    %v2857 = vpack.c.bf16 %v2656, %v2656
    %2858 = vmatprep.subr.bf16.mxu0 %v757
    %2859 = vmatpush1.bf16.msra.mxu0 %v756
    %2860 = vmatprep.subr.bf16.mxu0 %v761
    %2861 = vmatpush1.bf16.msra.mxu0 %v760
    %2862 = vmatprep.subr.bf16.mxu0 %v765
    %2863 = vmatpush1.bf16.msra.mxu0 %v764
    %2864 = vmatprep.subr.bf16.mxu0 %v769
    %2865 = vmatpush1.bf16.msra.mxu0 %v768
    %2866 = vmatprep.subr.bf16.mxu0 %v773
    %2867 = vmatpush1.bf16.msra.mxu0 %v772
    %2868 = vmatprep.subr.bf16.mxu0 %v777
    %2869 = vmatpush1.bf16.msra.mxu0 %v776
    %2870 = vmatprep.subr.bf16.mxu0 %v781
    %2871 = vmatpush1.bf16.msra.mxu0 %v780
    %2872 = vmatprep.subr.bf16.mxu0 %v785
    %2873 = vmatpush1.bf16.msra.mxu0 %v784
    %2874 = vmatprep.subr.bf16.mxu0 0
    %2875 = vmatpush1.bf16.msra.mxu0 0
    %2876 = vmatprep.subr.bf16.mxu0 0
    %2877 = vmatpush1.bf16.msra.mxu0 0
    %2878 = vmatprep.subr.bf16.mxu0 0
    %2879 = vmatpush1.bf16.msra.mxu0 0
    %2880 = vmatprep.subr.bf16.mxu0 0
    %2881 = vmatpush1.bf16.msra.mxu0 0
    %2882 = vmatprep.subr.bf16.mxu0 0
    %2883 = vmatpush1.bf16.msra.mxu0 0
    %2884 = vmatprep.subr.bf16.mxu0 0
    %2885 = vmatpush1.bf16.msra.mxu0 0
    %2886 = vmatprep.subr.bf16.mxu0 0
    %2887 = vmatpush1.bf16.msra.mxu0 0
    %2888 = vmatprep.subr.bf16.mxu0 0
    %2889 = vmatpush1.bf16.msra.mxu0 0
    %2890 = vmatprep.mubr.bf16.mxu0 0
    %2891 = vmatmul.mubr.bf16.gmra.mrb[0].mxu0 %v2857
    %v2892 = vpop.f32.mrb[0].mxu0
    %v2893 = vadd.f32 0.0, %v2892
    %v2894 = vpop.f32.mrb[0].mxu0
    %v2895 = vadd.f32 0.0, %v2894
    %v2896 = vpop.f32.mrb[0].mxu0
    %v2897 = vpop.f32.mrb[0].mxu0
    %2898 = vdwg.mxu0
    %2899 = vmatprep.subr.bf16.mxu0 %v759
    %2900 = vmatpush1.bf16.msra.mxu0 %v758
    %2901 = vmatprep.subr.bf16.mxu0 %v763
    %2902 = vmatpush1.bf16.msra.mxu0 %v762
    %2903 = vmatprep.subr.bf16.mxu0 %v767
    %2904 = vmatpush1.bf16.msra.mxu0 %v766
    %2905 = vmatprep.subr.bf16.mxu0 %v771
    %2906 = vmatpush1.bf16.msra.mxu0 %v770
    %2907 = vmatprep.subr.bf16.mxu0 %v775
    %2908 = vmatpush1.bf16.msra.mxu0 %v774
    %2909 = vmatprep.subr.bf16.mxu0 %v779
    %2910 = vmatpush1.bf16.msra.mxu0 %v778
    %2911 = vmatprep.subr.bf16.mxu0 %v783
    %2912 = vmatpush1.bf16.msra.mxu0 %v782
    %2913 = vmatprep.subr.bf16.mxu0 %v787
    %2914 = vmatpush1.bf16.msra.mxu0 %v786
    %2915 = vmatprep.subr.bf16.mxu0 0
    %2916 = vmatpush1.bf16.msra.mxu0 0
    %2917 = vmatprep.subr.bf16.mxu0 0
    %2918 = vmatpush1.bf16.msra.mxu0 0
    %2919 = vmatprep.subr.bf16.mxu0 0
    %2920 = vmatpush1.bf16.msra.mxu0 0
    %2921 = vmatprep.subr.bf16.mxu0 0
    %2922 = vmatpush1.bf16.msra.mxu0 0
    %2923 = vmatprep.subr.bf16.mxu0 0
    %2924 = vmatpush1.bf16.msra.mxu0 0
    %2925 = vmatprep.subr.bf16.mxu0 0
    %2926 = vmatpush1.bf16.msra.mxu0 0
    %2927 = vmatprep.subr.bf16.mxu0 0
    %2928 = vmatpush1.bf16.msra.mxu0 0
    %2929 = vmatprep.subr.bf16.mxu0 0
    %2930 = vmatpush1.bf16.msra.mxu0 0
    %2931 = vmatprep.mubr.bf16.mxu0 0
    %2932 = vmatmul.mubr.bf16.gmra.mrb[0].mxu0 %v2857
    %v2933 = vpop.f32.mrb[0].mxu0
    %v2934 = vadd.f32 0.0, %v2933
    %v2935 = vpop.f32.mrb[0].mxu0
    %v2936 = vadd.f32 0.0, %v2935
    %v2937 = vpop.f32.mrb[0].mxu0
    %v2938 = vpop.f32.mrb[0].mxu0
    %2939 = vdwg.mxu0
    %v2940 = vadd.f32 %v395, %v2893
    %v2941 = vadd.f32 %v396, %v2895
    %v2942 = vadd.f32 %v397, %v2934
    %v2943 = vadd.f32 %v398, %v2936
    %v2944 = vxor.u32 %v2940, 2147483648
    %v2945 = vxor.u32 %v2941, 2147483648
    %v2946 = vxor.u32 %v2942, 2147483648
    %v2947 = vmul.f32 %v2944, 1.442695
    %v2948 = vpow.pop %v2947
    %v2949 = vmul.f32 %v2945, 1.442695
    %v2950 = vpow.pop %v2949
    %v2951 = vmul.f32 %v2946, 1.442695
    %v2952 = vpow.pop %v2951
    %v2953 = vadd.f32 %v2948, 1.0
    %v2954 = vadd.f32 %v2950, 1.0
    %v2955 = vadd.f32 %v2952, 1.0
    %v2956 = vrcp.pop %v2953
    %v2957 = vmul.f32 1.0, %v2956
    %v2958 = vrcp.pop %v2954
    %v2959 = vmul.f32 1.0, %v2958
    %v2960 = vrcp.pop %v2955
    %v2961 = vmul.f32 1.0, %v2960
    %v2962 = vtanh.pop %v2943
    %v2963 = vmul.f32 %v2959, %v2655
    %v2964 = vmul.f32 %v2957, %v2962
    %v2965 = vadd.f32 %v2963, %v2964
    %v2966 = vtanh.pop %v2965
    %v2967 = vmul.f32 %v2961, %v2966
    %v2968 = vsel %vm267, %v2965, %v2655
    %v2969 = vsel %vm267, %v2967, %v2656
    %v2970 = vpack.c.bf16 %v2967, %v2967
    %2971 = vmatprep.subr.bf16.mxu0 %v1030
    %2972 = vmatpush1.bf16.msra.mxu0 %v1029
    %2973 = vmatprep.subr.bf16.mxu0 %v1034
    %2974 = vmatpush1.bf16.msra.mxu0 %v1033
    %2975 = vmatprep.subr.bf16.mxu0 %v1038
    %2976 = vmatpush1.bf16.msra.mxu0 %v1037
    %2977 = vmatprep.subr.bf16.mxu0 %v1042
    %2978 = vmatpush1.bf16.msra.mxu0 %v1041
    %2979 = vmatprep.subr.bf16.mxu0 %v1046
    %2980 = vmatpush1.bf16.msra.mxu0 %v1045
    %2981 = vmatprep.subr.bf16.mxu0 %v1050
    %2982 = vmatpush1.bf16.msra.mxu0 %v1049
    %2983 = vmatprep.subr.bf16.mxu0 %v1054
    %2984 = vmatpush1.bf16.msra.mxu0 %v1053
    %2985 = vmatprep.subr.bf16.mxu0 %v1058
    %2986 = vmatpush1.bf16.msra.mxu0 %v1057
    %2987 = vmatprep.subr.bf16.mxu0 0
    %2988 = vmatpush1.bf16.msra.mxu0 0
    %2989 = vmatprep.subr.bf16.mxu0 0
    %2990 = vmatpush1.bf16.msra.mxu0 0
    %2991 = vmatprep.subr.bf16.mxu0 0
    %2992 = vmatpush1.bf16.msra.mxu0 0
    %2993 = vmatprep.subr.bf16.mxu0 0
    %2994 = vmatpush1.bf16.msra.mxu0 0
    %2995 = vmatprep.subr.bf16.mxu0 0
    %2996 = vmatpush1.bf16.msra.mxu0 0
    %2997 = vmatprep.subr.bf16.mxu0 0
    %2998 = vmatpush1.bf16.msra.mxu0 0
    %2999 = vmatprep.subr.bf16.mxu0 0
    %3000 = vmatpush1.bf16.msra.mxu0 0
    %3001 = vmatprep.subr.bf16.mxu0 0
    %3002 = vmatpush1.bf16.msra.mxu0 0
    %3003 = vmatprep.mubr.bf16.mxu0 0
    %3004 = vmatmul.mubr.bf16.gmra.mrb[0].mxu0 %v2970
    %v3005 = vpop.f32.mrb[0].mxu0
    %v3006 = vadd.f32 0.0, %v3005
    %v3007 = vpop.f32.mrb[0].mxu0
    %v3008 = vadd.f32 0.0, %v3007
    %v3009 = vpop.f32.mrb[0].mxu0
    %v3010 = vpop.f32.mrb[0].mxu0
    %3011 = vdwg.mxu0
    %3012 = vmatprep.subr.bf16.mxu0 %v1032
    %3013 = vmatpush1.bf16.msra.mxu0 %v1031
    %3014 = vmatprep.subr.bf16.mxu0 %v1036
    %3015 = vmatpush1.bf16.msra.mxu0 %v1035
    %3016 = vmatprep.subr.bf16.mxu0 %v1040
    %3017 = vmatpush1.bf16.msra.mxu0 %v1039
    %3018 = vmatprep.subr.bf16.mxu0 %v1044
    %3019 = vmatpush1.bf16.msra.mxu0 %v1043
    %3020 = vmatprep.subr.bf16.mxu0 %v1048
    %3021 = vmatpush1.bf16.msra.mxu0 %v1047
    %3022 = vmatprep.subr.bf16.mxu0 %v1052
    %3023 = vmatpush1.bf16.msra.mxu0 %v1051
    %3024 = vmatprep.subr.bf16.mxu0 %v1056
    %3025 = vmatpush1.bf16.msra.mxu0 %v1055
    %3026 = vmatprep.subr.bf16.mxu0 %v1060
    %3027 = vmatpush1.bf16.msra.mxu0 %v1059
    %3028 = vmatprep.subr.bf16.mxu0 0
    %3029 = vmatpush1.bf16.msra.mxu0 0
    %3030 = vmatprep.subr.bf16.mxu0 0
    %3031 = vmatpush1.bf16.msra.mxu0 0
    %3032 = vmatprep.subr.bf16.mxu0 0
    %3033 = vmatpush1.bf16.msra.mxu0 0
    %3034 = vmatprep.subr.bf16.mxu0 0
    %3035 = vmatpush1.bf16.msra.mxu0 0
    %3036 = vmatprep.subr.bf16.mxu0 0
    %3037 = vmatpush1.bf16.msra.mxu0 0
    %3038 = vmatprep.subr.bf16.mxu0 0
    %3039 = vmatpush1.bf16.msra.mxu0 0
    %3040 = vmatprep.subr.bf16.mxu0 0
    %3041 = vmatpush1.bf16.msra.mxu0 0
    %3042 = vmatprep.subr.bf16.mxu0 0
    %3043 = vmatpush1.bf16.msra.mxu0 0
    %3044 = vmatprep.mubr.bf16.mxu0 0
    %3045 = vmatmul.mubr.bf16.gmra.mrb[0].mxu0 %v2970
    %v3046 = vpop.f32.mrb[0].mxu0
    %v3047 = vadd.f32 0.0, %v3046
    %v3048 = vpop.f32.mrb[0].mxu0
    %v3049 = vadd.f32 0.0, %v3048
    %v3050 = vpop.f32.mrb[0].mxu0
    %v3051 = vpop.f32.mrb[0].mxu0
    %3052 = vdwg.mxu0
    %v3053 = vadd.f32 %v2853, %v3006
    %v3054 = vadd.f32 %v2854, %v3008
    %v3055 = vadd.f32 %v2855, %v3047
    %v3056 = vadd.f32 %v2856, %v3049
    %v3057 = vxor.u32 %v3053, 2147483648
    %v3058 = vxor.u32 %v3054, 2147483648
    %v3059 = vxor.u32 %v3055, 2147483648
    %v3060 = vmul.f32 %v3057, 1.442695
    %v3061 = vpow.pop %v3060
    %v3062 = vmul.f32 %v3058, 1.442695
    %v3063 = vpow.pop %v3062
    %v3064 = vmul.f32 %v3059, 1.442695
    %v3065 = vpow.pop %v3064
    %v3066 = vadd.f32 %v3061, 1.0
    %v3067 = vadd.f32 %v3063, 1.0
    %v3068 = vadd.f32 %v3065, 1.0
    %v3069 = vrcp.pop %v3066
    %v3070 = vmul.f32 1.0, %v3069
    %v3071 = vrcp.pop %v3067
    %v3072 = vmul.f32 1.0, %v3071
    %v3073 = vrcp.pop %v3068
    %v3074 = vmul.f32 1.0, %v3073
    %v3075 = vtanh.pop %v3056
    %v3076 = vmul.f32 %v3072, %v2768
    %v3077 = vmul.f32 %v3070, %v3075
    %v3078 = vadd.f32 %v3076, %v3077
    %v3079 = vtanh.pop %v3078
    %v3080 = vmul.f32 %v3074, %v3079
    %v3081 = vsel %vm267, %v3078, %v2768
    %v3082 = vsel %vm267, %v3080, %v2769
    %v3083 = vpack.c.bf16 %v3082, %v3082
    %3084 = vmatprep.subr.bf16.mxu0 %v511
    %3085 = vmatpush1.bf16.msra.mxu0 %v510
    %3086 = vmatprep.subr.bf16.mxu0 %v515
    %3087 = vmatpush1.bf16.msra.mxu0 %v514
    %3088 = vmatprep.subr.bf16.mxu0 %v519
    %3089 = vmatpush1.bf16.msra.mxu0 %v518
    %3090 = vmatprep.subr.bf16.mxu0 %v523
    %3091 = vmatpush1.bf16.msra.mxu0 %v522
    %3092 = vmatprep.subr.bf16.mxu0 %v527
    %3093 = vmatpush1.bf16.msra.mxu0 %v526
    %3094 = vmatprep.subr.bf16.mxu0 %v531
    %3095 = vmatpush1.bf16.msra.mxu0 %v530
    %3096 = vmatprep.subr.bf16.mxu0 %v535
    %3097 = vmatpush1.bf16.msra.mxu0 %v534
    %3098 = vmatprep.subr.bf16.mxu0 %v539
    %3099 = vmatpush1.bf16.msra.mxu0 %v538
    %3100 = vmatprep.subr.bf16.mxu0 0
    %3101 = vmatpush1.bf16.msra.mxu0 0
    %3102 = vmatprep.subr.bf16.mxu0 0
    %3103 = vmatpush1.bf16.msra.mxu0 0
    %3104 = vmatprep.subr.bf16.mxu0 0
    %3105 = vmatpush1.bf16.msra.mxu0 0
    %3106 = vmatprep.subr.bf16.mxu0 0
    %3107 = vmatpush1.bf16.msra.mxu0 0
    %3108 = vmatprep.subr.bf16.mxu0 0
    %3109 = vmatpush1.bf16.msra.mxu0 0
    %3110 = vmatprep.subr.bf16.mxu0 0
    %3111 = vmatpush1.bf16.msra.mxu0 0
    %3112 = vmatprep.subr.bf16.mxu0 0
    %3113 = vmatpush1.bf16.msra.mxu0 0
    %3114 = vmatprep.subr.bf16.mxu0 0
    %3115 = vmatpush1.bf16.msra.mxu0 0
    %3116 = vmatprep.mubr.bf16.mxu0 0
    %3117 = vmatmul.mubr.bf16.gmra.mrb[0].mxu0 %v3083
    %v3118 = vpop.f32.mrb[0].mxu0
    %v3119 = vadd.f32 0.0, %v3118
    %v3120 = vpop.f32.mrb[0].mxu0
    %v3121 = vadd.f32 0.0, %v3120
    %v3122 = vpop.f32.mrb[0].mxu0
    %v3123 = vpop.f32.mrb[0].mxu0
    %3124 = vdwg.mxu0
    %3125 = vmatprep.subr.bf16.mxu0 %v513
    %3126 = vmatpush1.bf16.msra.mxu0 %v512
    %3127 = vmatprep.subr.bf16.mxu0 %v517
    %3128 = vmatpush1.bf16.msra.mxu0 %v516
    %3129 = vmatprep.subr.bf16.mxu0 %v521
    %3130 = vmatpush1.bf16.msra.mxu0 %v520
    %3131 = vmatprep.subr.bf16.mxu0 %v525
    %3132 = vmatpush1.bf16.msra.mxu0 %v524
    %3133 = vmatprep.subr.bf16.mxu0 %v529
    %3134 = vmatpush1.bf16.msra.mxu0 %v528
    %3135 = vmatprep.subr.bf16.mxu0 %v533
    %3136 = vmatpush1.bf16.msra.mxu0 %v532
    %3137 = vmatprep.subr.bf16.mxu0 %v537
    %3138 = vmatpush1.bf16.msra.mxu0 %v536
    %3139 = vmatprep.subr.bf16.mxu0 %v541
    %3140 = vmatpush1.bf16.msra.mxu0 %v540
    %3141 = vmatprep.subr.bf16.mxu0 0
    %3142 = vmatpush1.bf16.msra.mxu0 0
    %3143 = vmatprep.subr.bf16.mxu0 0
    %3144 = vmatpush1.bf16.msra.mxu0 0
    %3145 = vmatprep.subr.bf16.mxu0 0
    %3146 = vmatpush1.bf16.msra.mxu0 0
    %3147 = vmatprep.subr.bf16.mxu0 0
    %3148 = vmatpush1.bf16.msra.mxu0 0
    %3149 = vmatprep.subr.bf16.mxu0 0
    %3150 = vmatpush1.bf16.msra.mxu0 0
    %3151 = vmatprep.subr.bf16.mxu0 0
    %3152 = vmatpush1.bf16.msra.mxu0 0
    %3153 = vmatprep.subr.bf16.mxu0 0
    %3154 = vmatpush1.bf16.msra.mxu0 0
    %3155 = vmatprep.subr.bf16.mxu0 0
    %3156 = vmatpush1.bf16.msra.mxu0 0
    %3157 = vmatprep.mubr.bf16.mxu0 0
    %3158 = vmatmul.mubr.bf16.gmra.mrb[0].mxu0 %v3083
    %v3159 = vpop.f32.mrb[0].mxu0
    %v3160 = vadd.f32 0.0, %v3159
    %v3161 = vpop.f32.mrb[0].mxu0
    %v3162 = vadd.f32 0.0, %v3161
    %v3163 = vpop.f32.mrb[0].mxu0
    %v3164 = vpop.f32.mrb[0].mxu0
    %3165 = vdwg.mxu0
    %v3166 = vadd.f32 %v209, %v3119
    %v3167 = vadd.f32 %v213, %v3121
    %v3168 = vadd.f32 %v217, %v3160
    %v3169 = vadd.f32 %v221, %v3162
    %v3170 = vpack.c.bf16 %v2969, %v2969
    %3171 = vmatprep.subr.bf16.mxu0 %v757
    %3172 = vmatpush1.bf16.msra.mxu0 %v756
    %3173 = vmatprep.subr.bf16.mxu0 %v761
    %3174 = vmatpush1.bf16.msra.mxu0 %v760
    %3175 = vmatprep.subr.bf16.mxu0 %v765
    %3176 = vmatpush1.bf16.msra.mxu0 %v764
    %3177 = vmatprep.subr.bf16.mxu0 %v769
    %3178 = vmatpush1.bf16.msra.mxu0 %v768
    %3179 = vmatprep.subr.bf16.mxu0 %v773
    %3180 = vmatpush1.bf16.msra.mxu0 %v772
    %3181 = vmatprep.subr.bf16.mxu0 %v777
    %3182 = vmatpush1.bf16.msra.mxu0 %v776
    %3183 = vmatprep.subr.bf16.mxu0 %v781
    %3184 = vmatpush1.bf16.msra.mxu0 %v780
    %3185 = vmatprep.subr.bf16.mxu0 %v785
    %3186 = vmatpush1.bf16.msra.mxu0 %v784
    %3187 = vmatprep.subr.bf16.mxu0 0
    %3188 = vmatpush1.bf16.msra.mxu0 0
    %3189 = vmatprep.subr.bf16.mxu0 0
    %3190 = vmatpush1.bf16.msra.mxu0 0
    %3191 = vmatprep.subr.bf16.mxu0 0
    %3192 = vmatpush1.bf16.msra.mxu0 0
    %3193 = vmatprep.subr.bf16.mxu0 0
    %3194 = vmatpush1.bf16.msra.mxu0 0
    %3195 = vmatprep.subr.bf16.mxu0 0
    %3196 = vmatpush1.bf16.msra.mxu0 0
    %3197 = vmatprep.subr.bf16.mxu0 0
    %3198 = vmatpush1.bf16.msra.mxu0 0
    %3199 = vmatprep.subr.bf16.mxu0 0
    %3200 = vmatpush1.bf16.msra.mxu0 0
    %3201 = vmatprep.subr.bf16.mxu0 0
    %3202 = vmatpush1.bf16.msra.mxu0 0
    %3203 = vmatprep.mubr.bf16.mxu0 0
    %3204 = vmatmul.mubr.bf16.gmra.mrb[0].mxu0 %v3170
    %v3205 = vpop.f32.mrb[0].mxu0
    %v3206 = vadd.f32 0.0, %v3205
    %v3207 = vpop.f32.mrb[0].mxu0
    %v3208 = vadd.f32 0.0, %v3207
    %v3209 = vpop.f32.mrb[0].mxu0
    %v3210 = vpop.f32.mrb[0].mxu0
    %3211 = vdwg.mxu0
    %3212 = vmatprep.subr.bf16.mxu0 %v759
    %3213 = vmatpush1.bf16.msra.mxu0 %v758
    %3214 = vmatprep.subr.bf16.mxu0 %v763
    %3215 = vmatpush1.bf16.msra.mxu0 %v762
    %3216 = vmatprep.subr.bf16.mxu0 %v767
    %3217 = vmatpush1.bf16.msra.mxu0 %v766
    %3218 = vmatprep.subr.bf16.mxu0 %v771
    %3219 = vmatpush1.bf16.msra.mxu0 %v770
    %3220 = vmatprep.subr.bf16.mxu0 %v775
    %3221 = vmatpush1.bf16.msra.mxu0 %v774
    %3222 = vmatprep.subr.bf16.mxu0 %v779
    %3223 = vmatpush1.bf16.msra.mxu0 %v778
    %3224 = vmatprep.subr.bf16.mxu0 %v783
    %3225 = vmatpush1.bf16.msra.mxu0 %v782
    %3226 = vmatprep.subr.bf16.mxu0 %v787
    %3227 = vmatpush1.bf16.msra.mxu0 %v786
    %3228 = vmatprep.subr.bf16.mxu0 0
    %3229 = vmatpush1.bf16.msra.mxu0 0
    %3230 = vmatprep.subr.bf16.mxu0 0
    %3231 = vmatpush1.bf16.msra.mxu0 0
    %3232 = vmatprep.subr.bf16.mxu0 0
    %3233 = vmatpush1.bf16.msra.mxu0 0
    %3234 = vmatprep.subr.bf16.mxu0 0
    %3235 = vmatpush1.bf16.msra.mxu0 0
    %3236 = vmatprep.subr.bf16.mxu0 0
    %3237 = vmatpush1.bf16.msra.mxu0 0
    %3238 = vmatprep.subr.bf16.mxu0 0
    %3239 = vmatpush1.bf16.msra.mxu0 0
    %3240 = vmatprep.subr.bf16.mxu0 0
    %3241 = vmatpush1.bf16.msra.mxu0 0
    %3242 = vmatprep.subr.bf16.mxu0 0
    %3243 = vmatpush1.bf16.msra.mxu0 0
    %3244 = vmatprep.mubr.bf16.mxu0 0
    %3245 = vmatmul.mubr.bf16.gmra.mrb[0].mxu0 %v3170
    %v3246 = vpop.f32.mrb[0].mxu0
    %v3247 = vadd.f32 0.0, %v3246
    %v3248 = vpop.f32.mrb[0].mxu0
    %v3249 = vadd.f32 0.0, %v3248
    %v3250 = vpop.f32.mrb[0].mxu0
    %v3251 = vpop.f32.mrb[0].mxu0
    %3252 = vdwg.mxu0
    %v3253 = vadd.f32 %v410, %v3206
    %v3254 = vadd.f32 %v411, %v3208
    %v3255 = vadd.f32 %v412, %v3247
    %v3256 = vadd.f32 %v413, %v3249
    %v3257 = vxor.u32 %v3253, 2147483648
    %v3258 = vxor.u32 %v3254, 2147483648
    %v3259 = vxor.u32 %v3255, 2147483648
    %v3260 = vmul.f32 %v3257, 1.442695
    %v3261 = vpow.pop %v3260
    %v3262 = vmul.f32 %v3258, 1.442695
    %v3263 = vpow.pop %v3262
    %v3264 = vmul.f32 %v3259, 1.442695
    %v3265 = vpow.pop %v3264
    %v3266 = vadd.f32 %v3261, 1.0
    %v3267 = vadd.f32 %v3263, 1.0
    %v3268 = vadd.f32 %v3265, 1.0
    %v3269 = vrcp.pop %v3266
    %v3270 = vmul.f32 1.0, %v3269
    %v3271 = vrcp.pop %v3267
    %v3272 = vmul.f32 1.0, %v3271
    %v3273 = vrcp.pop %v3268
    %v3274 = vmul.f32 1.0, %v3273
    %v3275 = vtanh.pop %v3256
    %v3276 = vmul.f32 %v3272, %v2968
    %v3277 = vmul.f32 %v3270, %v3275
    %v3278 = vadd.f32 %v3276, %v3277
    %v3279 = vtanh.pop %v3278
    %v3280 = vmul.f32 %v3274, %v3279
    %v3281 = vpack.c.bf16 %v3280, %v3280
    %3282 = vmatprep.subr.bf16.mxu0 %v1030
    %3283 = vmatpush1.bf16.msra.mxu0 %v1029
    %3284 = vmatprep.subr.bf16.mxu0 %v1034
    %3285 = vmatpush1.bf16.msra.mxu0 %v1033
    %3286 = vmatprep.subr.bf16.mxu0 %v1038
    %3287 = vmatpush1.bf16.msra.mxu0 %v1037
    %3288 = vmatprep.subr.bf16.mxu0 %v1042
    %3289 = vmatpush1.bf16.msra.mxu0 %v1041
    %3290 = vmatprep.subr.bf16.mxu0 %v1046
    %3291 = vmatpush1.bf16.msra.mxu0 %v1045
    %3292 = vmatprep.subr.bf16.mxu0 %v1050
    %3293 = vmatpush1.bf16.msra.mxu0 %v1049
    %3294 = vmatprep.subr.bf16.mxu0 %v1054
    %3295 = vmatpush1.bf16.msra.mxu0 %v1053
    %3296 = vmatprep.subr.bf16.mxu0 %v1058
    %3297 = vmatpush1.bf16.msra.mxu0 %v1057
    %3298 = vmatprep.subr.bf16.mxu0 0
    %3299 = vmatpush1.bf16.msra.mxu0 0
    %3300 = vmatprep.subr.bf16.mxu0 0
    %3301 = vmatpush1.bf16.msra.mxu0 0
    %3302 = vmatprep.subr.bf16.mxu0 0
    %3303 = vmatpush1.bf16.msra.mxu0 0
    %3304 = vmatprep.subr.bf16.mxu0 0
    %3305 = vmatpush1.bf16.msra.mxu0 0
    %3306 = vmatprep.subr.bf16.mxu0 0
    %3307 = vmatpush1.bf16.msra.mxu0 0
    %3308 = vmatprep.subr.bf16.mxu0 0
    %3309 = vmatpush1.bf16.msra.mxu0 0
    %3310 = vmatprep.subr.bf16.mxu0 0
    %3311 = vmatpush1.bf16.msra.mxu0 0
    %3312 = vmatprep.subr.bf16.mxu0 0
    %3313 = vmatpush1.bf16.msra.mxu0 0
    %3314 = vmatprep.mubr.bf16.mxu0 0
    %3315 = vmatmul.mubr.bf16.gmra.mrb[0].mxu0 %v3281
    %v3316 = vpop.f32.mrb[0].mxu0
    %v3317 = vadd.f32 0.0, %v3316
    %v3318 = vpop.f32.mrb[0].mxu0
    %v3319 = vadd.f32 0.0, %v3318
    %v3320 = vpop.f32.mrb[0].mxu0
    %v3321 = vpop.f32.mrb[0].mxu0
    %3322 = vdwg.mxu0
    %3323 = vmatprep.subr.bf16.mxu0 %v1032
    %3324 = vmatpush1.bf16.msra.mxu0 %v1031
    %3325 = vmatprep.subr.bf16.mxu0 %v1036
    %3326 = vmatpush1.bf16.msra.mxu0 %v1035
    %3327 = vmatprep.subr.bf16.mxu0 %v1040
    %3328 = vmatpush1.bf16.msra.mxu0 %v1039
    %3329 = vmatprep.subr.bf16.mxu0 %v1044
    %3330 = vmatpush1.bf16.msra.mxu0 %v1043
    %3331 = vmatprep.subr.bf16.mxu0 %v1048
    %3332 = vmatpush1.bf16.msra.mxu0 %v1047
    %3333 = vmatprep.subr.bf16.mxu0 %v1052
    %3334 = vmatpush1.bf16.msra.mxu0 %v1051
    %3335 = vmatprep.subr.bf16.mxu0 %v1056
    %3336 = vmatpush1.bf16.msra.mxu0 %v1055
    %3337 = vmatprep.subr.bf16.mxu0 %v1060
    %3338 = vmatpush1.bf16.msra.mxu0 %v1059
    %3339 = vmatprep.subr.bf16.mxu0 0
    %3340 = vmatpush1.bf16.msra.mxu0 0
    %3341 = vmatprep.subr.bf16.mxu0 0
    %3342 = vmatpush1.bf16.msra.mxu0 0
    %3343 = vmatprep.subr.bf16.mxu0 0
    %3344 = vmatpush1.bf16.msra.mxu0 0
    %3345 = vmatprep.subr.bf16.mxu0 0
    %3346 = vmatpush1.bf16.msra.mxu0 0
    %3347 = vmatprep.subr.bf16.mxu0 0
    %3348 = vmatpush1.bf16.msra.mxu0 0
    %3349 = vmatprep.subr.bf16.mxu0 0
    %3350 = vmatpush1.bf16.msra.mxu0 0
    %3351 = vmatprep.subr.bf16.mxu0 0
    %3352 = vmatpush1.bf16.msra.mxu0 0
    %3353 = vmatprep.subr.bf16.mxu0 0
    %3354 = vmatpush1.bf16.msra.mxu0 0
    %3355 = vmatprep.mubr.bf16.mxu0 0
    %3356 = vmatmul.mubr.bf16.gmra.mrb[0].mxu0 %v3281
    %v3357 = vpop.f32.mrb[0].mxu0
    %v3358 = vadd.f32 0.0, %v3357
    %v3359 = vpop.f32.mrb[0].mxu0
    %v3360 = vadd.f32 0.0, %v3359
    %v3361 = vpop.f32.mrb[0].mxu0
    %v3362 = vpop.f32.mrb[0].mxu0
    %3363 = vdwg.mxu0
    %v3364 = vadd.f32 %v3166, %v3317
    %v3365 = vadd.f32 %v3167, %v3319
    %v3366 = vadd.f32 %v3168, %v3358
    %v3367 = vadd.f32 %v3169, %v3360
    %v3368 = vxor.u32 %v3364, 2147483648
    %v3369 = vxor.u32 %v3365, 2147483648
    %v3370 = vxor.u32 %v3366, 2147483648
    %v3371 = vmul.f32 %v3368, 1.442695
    %v3372 = vpow.pop %v3371
    %v3373 = vmul.f32 %v3369, 1.442695
    %v3374 = vpow.pop %v3373
    %v3375 = vmul.f32 %v3370, 1.442695
    %v3376 = vpow.pop %v3375
    %v3377 = vadd.f32 %v3372, 1.0
    %v3378 = vadd.f32 %v3374, 1.0
    %v3379 = vadd.f32 %v3376, 1.0
    %v3380 = vrcp.pop %v3377
    %v3381 = vmul.f32 1.0, %v3380
    %v3382 = vrcp.pop %v3378
    %v3383 = vmul.f32 1.0, %v3382
    %v3384 = vrcp.pop %v3379
    %v3385 = vmul.f32 1.0, %v3384
    %v3386 = vtanh.pop %v3367
    %v3387 = vmul.f32 %v3383, %v3081
    %v3388 = vmul.f32 %v3381, %v3386
    %v3389 = vadd.f32 %v3387, %v3388
    %v3390 = vtanh.pop %v3389
    %v3391 = vmul.f32 %v3385, %v3390
    %v3392 = vsel %vm273, %v3391, %v3082
    %v3393 = vpack.c.bf16 %v3392, %v3392
    %v3394 = vld [vmem:[%s8] sm:$0xf]
    %v3395 = vld [vmem:[%s8 + $0x4] sm:$0xf]
    %v3396 = vld [vmem:[%s8 + $0x8] sm:$0xf]
    %v3397 = vld [vmem:[%s8 + $0xc] sm:$0xf]
    %v3398 = vld [vmem:[%s8 + $0x10] sm:$0xf]
    %v3399 = vld [vmem:[%s8 + $0x14] sm:$0xf]
    %v3400 = vld [vmem:[%s8 + $0x18] sm:$0xf]
    %v3401 = vld [vmem:[%s8 + $0x1c] sm:$0xf]
    %v3402 = vld [vmem:[%s8 + $0x20] sm:$0xf]
    %v3403 = vld [vmem:[%s8 + $0x24] sm:$0xf]
    %v3404 = vld [vmem:[%s8 + $0x28] sm:$0xf]
    %v3405 = vld [vmem:[%s8 + $0x2c] sm:$0xf]
    %v3406 = vld [vmem:[%s8 + $0x30] sm:$0xf]
    %v3407 = vld [vmem:[%s8 + $0x34] sm:$0xf]
    %v3408 = vld [vmem:[%s8 + $0x38] sm:$0xf]
    %v3409 = vld [vmem:[%s8 + $0x3c] sm:$0xf]
    %v3410 = vld [vmem:[%s9] sm:$0x1]
    %v3412 = vlaneseq
    %v3413 = vshrl.u32 %v3412, 7
    %v3414 = vsub.s32 0, %v3413
    %v3415 = vrot.slane %v3410, %v3414
    %v3433 = vunpack.c.l.b16 %v3394
    %v3434 = vunpack.c.l.b16 %v3395
    %v3435 = vunpack.c.l.b16 %v3396
    %v3436 = vunpack.c.l.b16 %v3397
    %v3437 = vunpack.c.l.b16 %v3398
    %v3438 = vunpack.c.l.b16 %v3399
    %v3439 = vunpack.c.l.b16 %v3400
    %v3440 = vunpack.c.l.b16 %v3401
    %v3441 = vunpack.c.l.b16 %v3402
    %v3442 = vunpack.c.l.b16 %v3403
    %v3443 = vunpack.c.l.b16 %v3404
    %v3444 = vunpack.c.l.b16 %v3405
    %v3445 = vunpack.c.l.b16 %v3406
    %v3446 = vunpack.c.l.b16 %v3407
    %v3447 = vunpack.c.l.b16 %v3408
    %v3448 = vunpack.c.l.b16 %v3409
    %v3449 = vpack.c.b16 %v3434, %v3433
    %v3450 = vpack.c.b16 %v3436, %v3435
    %v3451 = vpack.c.b16 %v3438, %v3437
    %v3452 = vpack.c.b16 %v3440, %v3439
    %v3453 = vpack.c.b16 %v3442, %v3441
    %v3454 = vpack.c.b16 %v3444, %v3443
    %v3455 = vpack.c.b16 %v3446, %v3445
    %v3456 = vpack.c.b16 %v3448, %v3447
    %3465 = vmatprep.subr.bf16.mxu0 0
    %3466 = vmatpush1.bf16.msra.mxu0 %v3449
    %3467 = vmatprep.subr.bf16.mxu0 0
    %3468 = vmatpush1.bf16.msra.mxu0 %v3450
    %3469 = vmatprep.subr.bf16.mxu0 0
    %3470 = vmatpush1.bf16.msra.mxu0 %v3451
    %3471 = vmatprep.subr.bf16.mxu0 0
    %3472 = vmatpush1.bf16.msra.mxu0 %v3452
    %3473 = vmatprep.subr.bf16.mxu0 0
    %3474 = vmatpush1.bf16.msra.mxu0 %v3453
    %3475 = vmatprep.subr.bf16.mxu0 0
    %3476 = vmatpush1.bf16.msra.mxu0 %v3454
    %3477 = vmatprep.subr.bf16.mxu0 0
    %3478 = vmatpush1.bf16.msra.mxu0 %v3455
    %3479 = vmatprep.subr.bf16.mxu0 0
    %3480 = vmatpush1.bf16.msra.mxu0 %v3456
    %3481 = vmatprep.subr.bf16.mxu0 0
    %3482 = vmatpush1.bf16.msra.mxu0 0
    %3483 = vmatprep.subr.bf16.mxu0 0
    %3484 = vmatpush1.bf16.msra.mxu0 0
    %3485 = vmatprep.subr.bf16.mxu0 0
    %3486 = vmatpush1.bf16.msra.mxu0 0
    %3487 = vmatprep.subr.bf16.mxu0 0
    %3488 = vmatpush1.bf16.msra.mxu0 0
    %3489 = vmatprep.subr.bf16.mxu0 0
    %3490 = vmatpush1.bf16.msra.mxu0 0
    %3491 = vmatprep.subr.bf16.mxu0 0
    %3492 = vmatpush1.bf16.msra.mxu0 0
    %3493 = vmatprep.subr.bf16.mxu0 0
    %3494 = vmatpush1.bf16.msra.mxu0 0
    %3495 = vmatprep.subr.bf16.mxu0 0
    %3496 = vmatpush1.bf16.msra.mxu0 0
    %3497 = vmatprep.mubr.bf16.mxu0 0
    %3498 = vmatmul.mubr.bf16.gmra.mrb[0].mxu0 %v3393
    %v3499 = vpop.f32.mrb[0].mxu0
    %v3500 = vadd.f32 %v3415, %v3499
    %v3501 = vpop.f32.mrb[0].mxu0
    %v3502 = vpop.f32.mrb[0].mxu0
    %v3503 = vpop.f32.mrb[0].mxu0
    %3504 = vdwg.mxu0
    %v3505 = vmax.f32 %v3500, 0.0
    %v3506 = vld [vmem:[%s10] sm:$0xff]
    %v3507 = vld [vmem:[%s10 + $0x8] sm:$0xff]
    %v3508 = vld [vmem:[%s10 + $0x10] sm:$0xff]
    %v3509 = vld [vmem:[%s10 + $0x18] sm:$0xff]
    %v3510 = vld [vmem:[%s10 + $0x20] sm:$0xff]
    %v3511 = vld [vmem:[%s10 + $0x28] sm:$0xff]
    %v3512 = vld [vmem:[%s10 + $0x30] sm:$0xff]
    %v3513 = vld [vmem:[%s10 + $0x38] sm:$0xff]
    %v3514 = vld [vmem:[%s11] sm:$0xff]
    %v3515 = vld [vmem:[%s11 + $0x8] sm:$0xff]
    %v3516 = vld [vmem:[%s11 + $0x10] sm:$0xff]
    %v3517 = vld [vmem:[%s11 + $0x18] sm:$0xff]
    %v3518 = vld [vmem:[%s11 + $0x20] sm:$0xff]
    %v3519 = vld [vmem:[%s11 + $0x28] sm:$0xff]
    %v3520 = vld [vmem:[%s11 + $0x30] sm:$0xff]
    %v3521 = vld [vmem:[%s11 + $0x38] sm:$0xff]
    %v3523 = vrot.slane %v3505, 4
    %vm3524 = vcmask 523264
    %v3525 = vsel %vm3524, %v3523, 0
    %3527 = vmatprep.subr.mxu0 0.0
    %3528 = vmatpush1.msra.mxu0 %v3514
    %3529 = vmatprep.subr.mxu0 0.0
    %3530 = vmatpush1.msra.mxu0 %v3515
    %3531 = vmatprep.subr.mxu0 0.0
    %3532 = vmatpush1.msra.mxu0 %v3516
    %3533 = vmatprep.subr.mxu0 0.0
    %3534 = vmatpush1.msra.mxu0 %v3517
    %3535 = vmatprep.subr.mxu0 0.0
    %3536 = vmatpush1.msra.mxu0 %v3518
    %3537 = vmatprep.subr.mxu0 0.0
    %3538 = vmatpush1.msra.mxu0 %v3519
    %3539 = vmatprep.subr.mxu0 0.0
    %3540 = vmatpush1.msra.mxu0 %v3520
    %3541 = vmatprep.subr.mxu0 0.0
    %3542 = vmatpush1.msra.mxu0 %v3521
    %3543 = vmatprep.subr.mxu0 0.0
    %3544 = vmatpush1.msra.mxu0 0.0
    %3545 = vmatprep.subr.mxu0 0.0
    %3546 = vmatpush1.msra.mxu0 0.0
    %3547 = vmatprep.subr.mxu0 0.0
    %3548 = vmatpush1.msra.mxu0 0.0
    %3549 = vmatprep.subr.mxu0 0.0
    %3550 = vmatpush1.msra.mxu0 0.0
    %3551 = vmatprep.subr.mxu0 0.0
    %3552 = vmatpush1.msra.mxu0 0.0
    %3553 = vmatprep.subr.mxu0 0.0
    %3554 = vmatpush1.msra.mxu0 0.0
    %3555 = vmatprep.subr.mxu0 0.0
    %3556 = vmatpush1.msra.mxu0 0.0
    %3557 = vmatprep.subr.mxu0 0.0
    %3558 = vmatpush1.msra.mxu0 0.0
    %3559 = vmatprep.subr.mxu0 0.0
    %3560 = vmatpush1.msra.mxu0 0.0
    %3561 = vmatprep.subr.mxu0 0.0
    %3562 = vmatpush1.msra.mxu0 0.0
    %3563 = vmatprep.subr.mxu0 0.0
    %3564 = vmatpush1.msra.mxu0 0.0
    %3565 = vmatprep.subr.mxu0 0.0
    %3566 = vmatpush1.msra.mxu0 0.0
    %3567 = vmatprep.subr.mxu0 0.0
    %3568 = vmatpush1.msra.mxu0 0.0
    %3569 = vmatprep.subr.mxu0 0.0
    %3570 = vmatpush1.msra.mxu0 0.0
    %3571 = vmatprep.subr.mxu0 0.0
    %3572 = vmatpush1.msra.mxu0 0.0
    %3573 = vmatprep.subr.mxu0 0.0
    %3574 = vmatpush1.msra.mxu0 0.0
    %3575 = vmatprep.subr.mxu0 0.0
    %3576 = vmatpush1.msra.mxu0 0.0
    %3577 = vmatprep.subr.mxu0 0.0
    %3578 = vmatpush1.msra.mxu0 0.0
    %3579 = vmatprep.subr.mxu0 0.0
    %3580 = vmatpush1.msra.mxu0 0.0
    %3581 = vmatprep.subr.mxu0 0.0
    %3582 = vmatpush1.msra.mxu0 0.0
    %3583 = vmatprep.subr.mxu0 0.0
    %3584 = vmatpush1.msra.mxu0 0.0
    %3585 = vmatprep.subr.mxu0 0.0
    %3586 = vmatpush1.msra.mxu0 0.0
    %3587 = vmatprep.subr.mxu0 0.0
    %3588 = vmatpush1.msra.mxu0 0.0
    %3589 = vmatprep.subr.mxu0 0.0
    %3590 = vmatpush1.msra.mxu0 0.0
    %3591 = vmatprep.mubr.f32.mxu0 0.0
    %3592 = vmatmul.mubr.f32.gmra.mrb[0].mxu0 %v3525
    %v3593 = vpop.f32.mrb[0].mxu0
    %v3594 = vadd.f32 0.0, %v3593
    %v3595 = vpop.f32.mrb[0].mxu0
    %3596 = vdwg.mxu0
    %v3597 = vsel %vm3524, %v3505, 0
    %3599 = vmatprep.subr.mxu0 0.0
    %3600 = vmatpush1.msra.mxu0 %v3506
    %3601 = vmatprep.subr.mxu0 0.0
    %3602 = vmatpush1.msra.mxu0 %v3507
    %3603 = vmatprep.subr.mxu0 0.0
    %3604 = vmatpush1.msra.mxu0 %v3508
    %3605 = vmatprep.subr.mxu0 0.0
    %3606 = vmatpush1.msra.mxu0 %v3509
    %3607 = vmatprep.subr.mxu0 0.0
    %3608 = vmatpush1.msra.mxu0 %v3510
    %3609 = vmatprep.subr.mxu0 0.0
    %3610 = vmatpush1.msra.mxu0 %v3511
    %3611 = vmatprep.subr.mxu0 0.0
    %3612 = vmatpush1.msra.mxu0 %v3512
    %3613 = vmatprep.subr.mxu0 0.0
    %3614 = vmatpush1.msra.mxu0 %v3513
    %3615 = vmatprep.subr.mxu0 0.0
    %3616 = vmatpush1.msra.mxu0 0.0
    %3617 = vmatprep.subr.mxu0 0.0
    %3618 = vmatpush1.msra.mxu0 0.0
    %3619 = vmatprep.subr.mxu0 0.0
    %3620 = vmatpush1.msra.mxu0 0.0
    %3621 = vmatprep.subr.mxu0 0.0
    %3622 = vmatpush1.msra.mxu0 0.0
    %3623 = vmatprep.subr.mxu0 0.0
    %3624 = vmatpush1.msra.mxu0 0.0
    %3625 = vmatprep.subr.mxu0 0.0
    %3626 = vmatpush1.msra.mxu0 0.0
    %3627 = vmatprep.subr.mxu0 0.0
    %3628 = vmatpush1.msra.mxu0 0.0
    %3629 = vmatprep.subr.mxu0 0.0
    %3630 = vmatpush1.msra.mxu0 0.0
    %3631 = vmatprep.subr.mxu0 0.0
    %3632 = vmatpush1.msra.mxu0 0.0
    %3633 = vmatprep.subr.mxu0 0.0
    %3634 = vmatpush1.msra.mxu0 0.0
    %3635 = vmatprep.subr.mxu0 0.0
    %3636 = vmatpush1.msra.mxu0 0.0
    %3637 = vmatprep.subr.mxu0 0.0
    %3638 = vmatpush1.msra.mxu0 0.0
    %3639 = vmatprep.subr.mxu0 0.0
    %3640 = vmatpush1.msra.mxu0 0.0
    %3641 = vmatprep.subr.mxu0 0.0
    %3642 = vmatpush1.msra.mxu0 0.0
    %3643 = vmatprep.subr.mxu0 0.0
    %3644 = vmatpush1.msra.mxu0 0.0
    %3645 = vmatprep.subr.mxu0 0.0
    %3646 = vmatpush1.msra.mxu0 0.0
    %3647 = vmatprep.subr.mxu0 0.0
    %3648 = vmatpush1.msra.mxu0 0.0
    %3649 = vmatprep.subr.mxu0 0.0
    %3650 = vmatpush1.msra.mxu0 0.0
    %3651 = vmatprep.subr.mxu0 0.0
    %3652 = vmatpush1.msra.mxu0 0.0
    %3653 = vmatprep.subr.mxu0 0.0
    %3654 = vmatpush1.msra.mxu0 0.0
    %3655 = vmatprep.subr.mxu0 0.0
    %3656 = vmatpush1.msra.mxu0 0.0
    %3657 = vmatprep.subr.mxu0 0.0
    %3658 = vmatpush1.msra.mxu0 0.0
    %3659 = vmatprep.subr.mxu0 0.0
    %3660 = vmatpush1.msra.mxu0 0.0
    %3661 = vmatprep.subr.mxu0 0.0
    %3662 = vmatpush1.msra.mxu0 0.0
    %3663 = vmatprep.mubr.f32.mxu0 0.0
    %3664 = vmatmul.mubr.f32.gmra.mrb[0].mxu0 %v3597
    %v3665 = vpop.f32.mrb[0].mxu0
    %v3666 = vadd.f32 %v3594, %v3665
    %v3667 = vpop.f32.mrb[0].mxu0
    %3668 = vdwg.mxu0
    %v3669 = vld [vmem:[%s12] sm:$0x1]
    %v3671 = vlaneseq
    %v3672 = vshrl.u32 %v3671, 7
    %v3673 = vsub.s32 0, %v3672
    %v3674 = vrot.slane %v3669, %v3673
    %v3676 = vadd.f32 %v3666, %v3674
    %v3677 = vmax.f32 %v3676, 0.0
    %v3678 = vld [vmem:[%s13] sm:$0xff]
    %v3679 = vld [vmem:[%s13 + $0x8] sm:$0xff]
    %v3680 = vld [vmem:[#allocation2] sm:$0x1]
    %v3682 = vlaneseq
    %v3683 = vshrl.u32 %v3682, 7
    %v3684 = vsub.s32 0, %v3683
    %v3685 = vrot.slane %v3680, %v3684
    %vm3687 = vcmask 130048
    %v3689 = vsel %vm3687, %v3677, 0
    %3691 = vmatprep.subr.mxu0 0.0
    %3692 = vmatpush1.msra.mxu0 %v3678
    %3693 = vmatprep.subr.mxu0 0.0
    %3694 = vmatpush1.msra.mxu0 %v3679
    %3695 = vmatprep.subr.mxu0 0.0
    %3696 = vmatpush1.msra.mxu0 0.0
    %3697 = vmatprep.subr.mxu0 0.0
    %3698 = vmatpush1.msra.mxu0 0.0
    %3699 = vmatprep.subr.mxu0 0.0
    %3700 = vmatpush1.msra.mxu0 0.0
    %3701 = vmatprep.subr.mxu0 0.0
    %3702 = vmatpush1.msra.mxu0 0.0
    %3703 = vmatprep.subr.mxu0 0.0
    %3704 = vmatpush1.msra.mxu0 0.0
    %3705 = vmatprep.subr.mxu0 0.0
    %3706 = vmatpush1.msra.mxu0 0.0
    %3707 = vmatprep.subr.mxu0 0.0
    %3708 = vmatpush1.msra.mxu0 0.0
    %3709 = vmatprep.subr.mxu0 0.0
    %3710 = vmatpush1.msra.mxu0 0.0
    %3711 = vmatprep.subr.mxu0 0.0
    %3712 = vmatpush1.msra.mxu0 0.0
    %3713 = vmatprep.subr.mxu0 0.0
    %3714 = vmatpush1.msra.mxu0 0.0
    %3715 = vmatprep.subr.mxu0 0.0
    %3716 = vmatpush1.msra.mxu0 0.0
    %3717 = vmatprep.subr.mxu0 0.0
    %3718 = vmatpush1.msra.mxu0 0.0
    %3719 = vmatprep.subr.mxu0 0.0
    %3720 = vmatpush1.msra.mxu0 0.0
    %3721 = vmatprep.subr.mxu0 0.0
    %3722 = vmatpush1.msra.mxu0 0.0
    %3723 = vmatprep.subr.mxu0 0.0
    %3724 = vmatpush1.msra.mxu0 0.0
    %3725 = vmatprep.subr.mxu0 0.0
    %3726 = vmatpush1.msra.mxu0 0.0
    %3727 = vmatprep.subr.mxu0 0.0
    %3728 = vmatpush1.msra.mxu0 0.0
    %3729 = vmatprep.subr.mxu0 0.0
    %3730 = vmatpush1.msra.mxu0 0.0
    %3731 = vmatprep.subr.mxu0 0.0
    %3732 = vmatpush1.msra.mxu0 0.0
    %3733 = vmatprep.subr.mxu0 0.0
    %3734 = vmatpush1.msra.mxu0 0.0
    %3735 = vmatprep.subr.mxu0 0.0
    %3736 = vmatpush1.msra.mxu0 0.0
    %3737 = vmatprep.subr.mxu0 0.0
    %3738 = vmatpush1.msra.mxu0 0.0
    %3739 = vmatprep.subr.mxu0 0.0
    %3740 = vmatpush1.msra.mxu0 0.0
    %3741 = vmatprep.subr.mxu0 0.0
    %3742 = vmatpush1.msra.mxu0 0.0
    %3743 = vmatprep.subr.mxu0 0.0
    %3744 = vmatpush1.msra.mxu0 0.0
    %3745 = vmatprep.subr.mxu0 0.0
    %3746 = vmatpush1.msra.mxu0 0.0
    %3747 = vmatprep.subr.mxu0 0.0
    %3748 = vmatpush1.msra.mxu0 0.0
    %3749 = vmatprep.subr.mxu0 0.0
    %3750 = vmatpush1.msra.mxu0 0.0
    %3751 = vmatprep.subr.mxu0 0.0
    %3752 = vmatpush1.msra.mxu0 0.0
    %3753 = vmatprep.subr.mxu0 0.0
    %3754 = vmatpush1.msra.mxu0 0.0
    %3755 = vmatprep.mubr.f32.mxu0 0.0
    %3756 = vmatmul.mubr.f32.gmra.mrb[0].mxu0 %v3689
    %v3757 = vpop.f32.mrb[0].mxu0
    %v3758 = vadd.f32 %v3685, %v3757
    %v3759 = vpop.f32.mrb[0].mxu0
    %3760 = vdwg.mxu0
    %v3761 = vld [vmem:[%s15] sm:$0x1]
    %v3763 = vlaneseq
    %v3764 = vshrl.u32 %v3763, 7
    %v3765 = vsub.s32 0, %v3764
    %v3766 = vrot.slane %v3761, %v3765
    %v3768 = vmul.f32 %v3766, %v3758
    %3769 = vrot.lane.b32.xlu0 %v3766, 127
    %v3770 = vpop.permute.xlu0 %3769
    %v3772 = vadd.f32 %v3768, %v3770
    %v3773 = vsub.f32 0.0, %v3772
    %v3774 = vxor.u32 %v3773, 2147483648
    %v3775 = vmul.f32 %v3774, 1.442695
    %v3776 = vpow.pop %v3775
    %v3777 = vadd.f32 %v3776, 1.0
    %v3778 = vrcp.pop %v3777
    %v3779 = vmul.f32 1.0, %v3778
    %vm3780 = vcmask 3072
    %3781 = vst.msk [vmem:[%s16] sm:$0xf] %vm3780, %v3779
    // Predicated region
    $region74: #{tpu_custom_call.1} parent=1 // pred_check
      _
    $region75: #{tpu_custom_call.1} parent=1 // pred_check_branch
      %3783 = sbr.rel (0) target = $region77
    $region76: #{tpu_custom_call.1} parent=1 // pred_region
      _
    $region77: #{tpu_custom_call.1} parent=1 // pred_fallthru
      _
    // Predicated region
    $region78: #{tpu_custom_call.1} parent=1 // pred_check
      _
    $region79: #{tpu_custom_call.1} parent=1 // pred_check_branch
      %3785 = sbr.rel (0) target = $region81
    $region80: #{tpu_custom_call.1} parent=1 // pred_region
      _
    $region81: #{tpu_custom_call.1} parent=1 // pred_fallthru
      _
    %3786 = vsyncpa [#allocation4], 1
    %3787 = vsyncpa [#allocation6], 1

</llo_original>
